<compile_context>
chip_gen: v6e
topology: v6e:2x2x1
jax: 0.10.0
libtpu: 0.0.40
codegen_flags: <defaults>
</compile_context>

<pallas_src>
import math

import jax
import jax.numpy as jnp
from jax import lax
from jax.experimental import pallas as pl
from jax.experimental.pallas import tpu as pltpu


# --------------------------------------------------------------------------------
# Fused whole-model kernel (all layers + head in one pallas_call)
# --------------------------------------------------------------------------------
def _make_fused_kernel(*, T, BP, B_real, H, num_layers):
    """Kernel processing the whole model.

    Ref layout (all f32, N = T*BP):
      inputs : x (N, D0), mask (N, 1),
               per layer: w_in (D, 8H), b_in (1, 8H), whh (2H, 8H block-diag),
                          gamma (1, 2H), beta (1, 2H),
               fc_w (2H, 1), fc_b (1, 1)
      outputs: head (BP, 1)
      scratch: act_scr VMEM (N, 2H)   -- inter-layer activation, never leaves VMEM
               z_scr   VMEM (N, 8H)   -- hoisted projection for the current layer
    """
    H2, H3, H4, H8 = 2 * H, 3 * H, 4 * H, 8 * H
    count = float(T * B_real)          # elements per channel in the BN statistics
    neg_slope = 0.01
    eps = 1e-5

    def kernel(*refs):
        x_ref, mask_ref = refs[0], refs[1]
        idx = 2
        layer_refs = []
        for _ in range(num_layers):
            layer_refs.append(refs[idx:idx + 5])
            idx += 5
        fc_w_ref, fc_b_ref = refs[idx], refs[idx + 1]
        head_ref = refs[idx + 2]
        act_scr, z_scr = refs[idx + 3], refs[idx + 4]

        m = mask_ref[...]                                  # (N, 1) real-row mask

        def half_step(z, c):
            # gate column order per direction: [i, f, o, g]
            s = jax.nn.sigmoid(z[:, 0:H3])                 # i, f, o in one EUP call
            g = jnp.tanh(z[:, H3:H4])
            c_new = s[:, H:H2] * c + s[:, 0:H] * g
            h_new = s[:, H2:H3] * jnp.tanh(c_new)
            return h_new, c_new

        y = None
        for li, (w_in_ref, b_in_ref, whh_ref, gamma_ref, beta_ref) in enumerate(layer_refs):
            # ---- hoisted input projection: one MXU matmul for all T steps and both
            #      directions, bias folded in.  Layer 0 reads the kernel input; later
            #      layers read the VMEM-resident activation of the previous layer. ----
            src = x_ref[...] if li == 0 else act_scr[...]
            z_scr[...] = (jnp.dot(src, w_in_ref[...],
                                  preferred_element_type=jnp.float32)
                          + b_in_ref[...])

            h_f = jnp.zeros((BP, H), jnp.float32)
            c_f = jnp.zeros((BP, H), jnp.float32)
            h_r = jnp.zeros((BP, H), jnp.float32)
            c_r = jnp.zeros((BP, H), jnp.float32)
            hf_steps = [None] * T
            hr_steps = [None] * T

            # ---- forward and reverse recurrences interleaved.  T is a small
            #      compile-time constant -> fully unrolled, static tile-aligned
            #      slices.  (TODO(synk): fori_loop for production T.) ----
            for t in range(T):
                rt = T - 1 - t
                zh = jnp.dot(jnp.concatenate([h_f, h_r], axis=1), whh_ref[...],
                             preferred_element_type=jnp.float32)        # (BP, 8H)
                zf = z_scr[t * BP:(t + 1) * BP, 0:H4] + zh[:, 0:H4]
                zr = z_scr[rt * BP:(rt + 1) * BP, H4:H8] + zh[:, H4:H8]
                h_f, c_f = half_step(zf, c_f)
                h_r, c_r = half_step(zr, c_r)
                hf_steps[t] = h_f
                hr_steps[rt] = h_r

            # Assemble the layer output as full-width rows (kept in vregs; no
            # per-step half-lane stores).
            y = jnp.concatenate(
                [jnp.concatenate([hf_steps[t], hr_steps[t]], axis=1)
                 for t in range(T)], axis=0)                             # (N, 2H)

            # ---- fused LeakyReLU(0.01) + BatchNorm1d, one-pass statistics over the
            #      real batch rows (padded rows masked out). ----
            y = jnp.where(y > 0, y, neg_slope * y)
            ym = y * m
            s1 = jnp.sum(ym, axis=0, keepdims=True)
            s2 = jnp.sum(y * ym, axis=0, keepdims=True)
            mean = s1 / count
            var = s2 / count - mean * mean                               # biased var
            y = (y - mean) * lax.rsqrt(var + eps) * gamma_ref[...] + beta_ref[...]

            if li + 1 < num_layers:
                act_scr[...] = y                 # stays in VMEM for the next layer

        # ---- final Linear(2H, 1) + sigmoid on the last timestep (rows already
        #      live as a value; padded rows are sliced away by the wrapper). ----
        y_last = y[(T - 1) * BP:T * BP, :]                               # (BP, 2H)
        logit = (jnp.dot(y_last, fc_w_ref[...],
                         preferred_element_type=jnp.float32) + fc_b_ref[...])
        head_ref[...] = jax.nn.sigmoid(logit)

    return kernel


_VMEM = pl.BlockSpec(memory_space=pltpu.MemorySpace.VMEM)


def _round_up(n, m):
    return ((n + m - 1) // m) * m


def _nbytes(a):
    return int(a.size) * a.dtype.itemsize


def lstm_model_forward(x, packed):
    """x: (B, T, input_size) batch-first, like the PyTorch module. Returns (B, 1)."""
    B, T, D0 = x.shape
    H = packed["hidden_size"]
    BP = _round_up(max(B, 1), 8)                 # pad batch to a full sublane tile
    N = T * BP
    num_layers = len(packed["layers"])

    x_tb = jnp.transpose(x, (1, 0, 2))           # -> time-major (T, B, D)
    if BP != B:
        x_tb = jnp.pad(x_tb, ((0, 0), (0, BP - B), (0, 0)))
    x_flat = x_tb.reshape(N, D0)                 # row = t*BP + b

    # rows with (row % BP) < B are real; the rest are padding excluded from BN stats
    mask = (jnp.arange(N) % BP < B).astype(jnp.float32).reshape(N, 1)

    args = [x_flat, mask]
    for lp in packed["layers"]:
        args += [lp["w_in"], lp["b_in"], lp["whh"], lp["gamma"], lp["beta"]]
    args += [packed["fc_w_t"], packed["fc_b"]]

    kernel = _make_fused_kernel(T=T, BP=BP, B_real=B, H=H, num_layers=num_layers)

    # ---- VMEM budget derived from the actual footprint (inputs + output + scratch,
    #      x2 headroom), clamped to v7x's 64 MiB per-core ceiling. ----
    scratch_bytes = (N * 2 * H + N * 8 * H) * 4
    arg_bytes = sum(_nbytes(a) for a in args) + BP * 4
    vmem_limit = int(min(max(2 * (arg_bytes + scratch_bytes) + (2 << 20), 4 << 20),
                         64 << 20))

    # ---- advisory cost estimate so XLA schedules around the custom call ----
    flops = 0
    transcend = 0
    for li in range(num_layers):
        D = D0 if li == 0 else 2 * H
        flops += 2 * N * D * 8 * H               # hoisted projection
        flops += 2 * T * BP * 2 * H * 8 * H      # recurrent matmuls
        flops += 16 * N * 2 * H                  # gates + LeakyReLU + BN elementwise
        transcend += T * BP * 10 * H + 2 * H     # sigmoid/tanh per step + rsqrt
    flops += 2 * BP * 2 * H                      # head matmul
    transcend += BP                              # head sigmoid
    cost = pl.CostEstimate(flops=int(flops), transcendentals=int(transcend),
                           bytes_accessed=int(arg_bytes + BP * 4))

    head_padded = pl.pallas_call(
        kernel,
        out_shape=jax.ShapeDtypeStruct((BP, 1), jnp.float32),
        in_specs=[_VMEM] * len(args),
        out_specs=_VMEM,
        scratch_shapes=[pltpu.VMEM((N, 2 * H), jnp.float32),
                        pltpu.VMEM((N, 8 * H), jnp.float32)],
        compiler_params=pltpu.CompilerParams(vmem_limit_bytes=vmem_limit),
        cost_estimate=cost,
    )(*args)
    return head_padded[:B]


# --------------------------------------------------------------------------------
# Parameters: PyTorch-layout raw weights + repacking into the kernel layout
# --------------------------------------------------------------------------------
def init_raw_params(key, input_size, hidden_size, num_layers):
    """Raw PyTorch-layout weights (weight_ih: (4H, D) rows [i|f|g|o], etc.)."""
    H = hidden_size
    k = 1.0 / math.sqrt(H)

    def u(kk, shape, bound):
        return jax.random.uniform(kk, shape, jnp.float32, -bound, bound)

    layers = []
    for i in range(num_layers):
        D = input_size if i == 0 else 2 * H
        key, *s = jax.random.split(key, 9)
        layers.append(dict(
            wih_f=u(s[0], (4 * H, D), k), whh_f=u(s[1], (4 * H, H), k),
            bih_f=u(s[2], (4 * H,), k), bhh_f=u(s[3], (4 * H,), k),
            wih_r=u(s[4], (4 * H, D), k), whh_r=u(s[5], (4 * H, H), k),
            bih_r=u(s[6], (4 * H,), k), bhh_r=u(s[7], (4 * H,), k),
            gamma=jnp.ones((2 * H,), jnp.float32),   # BatchNorm1d default init
            beta=jnp.zeros((2 * H,), jnp.float32),
        ))
    kf = 1.0 / math.sqrt(2 * H)
    key, kw, kb = jax.random.split(key, 3)
    return dict(layers=layers, fc_w=u(kw, (1, 2 * H), kf), fc_b=u(kb, (1,), kf))


def pack_params(raw, hidden_size):
    """Repack raw PyTorch-layout weights into the fused-kernel layout."""
    H = hidden_size

    def reorder(w):  # gate blocks [i,f,g,o] -> [i,f,o,g] along axis 0
        return jnp.concatenate([w[0:H], w[H:2 * H], w[3 * H:4 * H], w[2 * H:3 * H]],
                               axis=0)

    layers = []
    for lp in raw["layers"]:
        wih_f, wih_r = reorder(lp["wih_f"]), reorder(lp["wih_r"])
        whh_f, whh_r = reorder(lp["whh_f"]), reorder(lp["whh_r"])
        b_f = reorder(lp["bih_f"] + lp["bhh_f"])
        b_r = reorder(lp["bih_r"] + lp["bhh_r"])

        w_in = jnp.concatenate([wih_f.T, wih_r.T], axis=1)            # (D, 8H)
        b_in = jnp.concatenate([b_f, b_r]).reshape(1, 8 * H)
        zblk = jnp.zeros((H, 4 * H), jnp.float32)
        whh = jnp.concatenate([                                       # (2H, 8H) blkdiag
            jnp.concatenate([whh_f.T, zblk], axis=1),
            jnp.concatenate([zblk, whh_r.T], axis=1)], axis=0)

        layers.append(dict(
            w_in=w_in, b_in=b_in, whh=whh,
            gamma=lp["gamma"].reshape(1, 2 * H),
            beta=lp["beta"].reshape(1, 2 * H)))

    return dict(layers=layers, fc_w_t=raw["fc_w"].T, fc_b=raw["fc_b"].reshape(1, 1),
                hidden_size=H)


# --------------------------------------------------------------------------------
# Pure-JAX reference (PyTorch semantics) for a correctness check
# --------------------------------------------------------------------------------
def reference_forward(x, raw, hidden_size):
    H = hidden_size
    B = x.shape[0]
    hp = lax.Precision.HIGHEST
    y = x
    for lp in raw["layers"]:
        xs = jnp.transpose(y, (1, 0, 2))                              # (T, B, D)

        def run(seq, wih, whh, b):
            def step(carry, x_t):
                h, c = carry
                z = (jnp.dot(x_t, wih.T, precision=hp)
                     + jnp.dot(h, whh.T, precision=hp) + b)
                i = jax.nn.sigmoid(z[:, 0:H]); f = jax.nn.sigmoid(z[:, H:2 * H])
                g = jnp.tanh(z[:, 2 * H:3 * H]); o = jax.nn.sigmoid(z[:, 3 * H:4 * H])
                c = f * c + i * g
                h = o * jnp.tanh(c)
                return (h, c), h
            init = (jnp.zeros((B, H), jnp.float32), jnp.zeros((B, H), jnp.float32))
            _, hs = lax.scan(step, init, seq)
            return hs                                                 # (T, B, H)

        hf = run(xs, lp["wih_f"], lp["whh_f"], lp["bih_f"] + lp["bhh_f"])
        hr = run(xs[::-1], lp["wih_r"], lp["whh_r"], lp["bih_r"] + lp["bhh_r"])[::-1]
        y = jnp.transpose(jnp.concatenate([hf, hr], axis=-1), (1, 0, 2))
        y = jnp.where(y > 0, y, 0.01 * y)
        mean = jnp.mean(y, axis=(0, 1), keepdims=True)
        var = jnp.mean((y - mean) ** 2, axis=(0, 1), keepdims=True)
        y = (y - mean) * lax.rsqrt(var + 1e-5) * lp["gamma"] + lp["beta"]
    last = y[:, -1, :]
    return jax.nn.sigmoid(jnp.dot(last, raw["fc_w"].T, precision=hp) + raw["fc_b"])


# TODO(synk): the PyTorch module appends detached activations to a host-side Python
# list for debugging; that side effect has no Pallas equivalent and is omitted.

if __name__ == "__main__":
    B, T, INPUT, HIDDEN, NUM_LAYERS = 2, 8, 4, 32, 2
    key = jax.random.PRNGKey(0)
    pkey, xkey = jax.random.split(key)

    raw = init_raw_params(pkey, INPUT, HIDDEN, NUM_LAYERS)
    packed = pack_params(raw, HIDDEN)
    x = jax.random.normal(xkey, (B, T, INPUT), jnp.float32)

    out = jax.jit(lambda xx: lstm_model_forward(xx, packed))(x)
    out = jax.block_until_ready(out)
    assert out.shape == (B, 1) and out.dtype == jnp.float32
    assert bool(jnp.all(jnp.isfinite(out)))

    ref = reference_forward(x, raw, HIDDEN)
    assert bool(jnp.allclose(out, ref, atol=2e-3, rtol=2e-3)), (out, ref)
    print("KERNEL_OK")
</pallas_src>

<mosaic_0001>
module attributes {stable_mosaic.version = 11 : i64} {
  func.func @kernel(%arg0: memref<64x4xf32, #tpu.memory_space<vmem>>, %arg1: memref<64x1xf32, #tpu.memory_space<vmem>>, %arg2: memref<4x256xf32, #tpu.memory_space<vmem>>, %arg3: memref<1x256xf32, #tpu.memory_space<vmem>>, %arg4: memref<64x256xf32, #tpu.memory_space<vmem>>, %arg5: memref<1x64xf32, #tpu.memory_space<vmem>>, %arg6: memref<1x64xf32, #tpu.memory_space<vmem>>, %arg7: memref<64x256xf32, #tpu.memory_space<vmem>>, %arg8: memref<1x256xf32, #tpu.memory_space<vmem>>, %arg9: memref<64x256xf32, #tpu.memory_space<vmem>>, %arg10: memref<1x64xf32, #tpu.memory_space<vmem>>, %arg11: memref<1x64xf32, #tpu.memory_space<vmem>>, %arg12: memref<64x1xf32, #tpu.memory_space<vmem>>, %arg13: memref<1x1xf32, #tpu.memory_space<vmem>>, %arg14: memref<8x1xf32, #tpu.memory_space<vmem>>, %arg15: memref<64x64xf32, #tpu.memory_space<vmem>>, %arg16: memref<64x256xf32, #tpu.memory_space<vmem>>) attributes {dimension_semantics = [], scalar_prefetch = 0 : i64, scratch_operands = 2 : i64, tpu.core_type = #tpu.core_type<tc>} {
    %c0 = arith.constant 0 : index
    %c0_0 = arith.constant 0 : index
    %0 = vector.load %arg1[%c0, %c0_0] : memref<64x1xf32, #tpu.memory_space<vmem>>, vector<64x1xf32>
    %c0_1 = arith.constant 0 : index
    %c0_2 = arith.constant 0 : index
    %1 = vector.load %arg0[%c0_1, %c0_2] : memref<64x4xf32, #tpu.memory_space<vmem>>, vector<64x4xf32>
    %c0_3 = arith.constant 0 : index
    %c0_4 = arith.constant 0 : index
    %2 = vector.load %arg2[%c0_3, %c0_4] : memref<4x256xf32, #tpu.memory_space<vmem>>, vector<4x256xf32>
    %cst = arith.constant dense<0.000000e+00> : vector<64x256xf32>
    %3 = tpu.matmul %1, %2, %cst {dimension_numbers = #tpu.dot_dimension_numbers<[1], [0], [0], [1], [0, 0, 1, 1], [], []>} : vector<64x4xf32>, vector<4x256xf32>, vector<64x256xf32> -> vector<64x256xf32>
    %c0_5 = arith.constant 0 : index
    %c0_6 = arith.constant 0 : index
    %4 = vector.load %arg3[%c0_5, %c0_6] : memref<1x256xf32, #tpu.memory_space<vmem>>, vector<1x256xf32>
    %5 = vector.broadcast %4 : vector<1x256xf32> to vector<64x256xf32>
    %6 = arith.addf %3, %5 : vector<64x256xf32>
    %c0_7 = arith.constant 0 : index
    %c0_8 = arith.constant 0 : index
    %7 = vector.load %arg16[%c0_7, %c0_8] : memref<64x256xf32, #tpu.memory_space<vmem>>, vector<64x256xf32>
    tpu.vector_store %arg16[%c0_7, %c0_8], %6 {strides = array<i32>} : memref<64x256xf32, #tpu.memory_space<vmem>>, vector<64x256xf32>,
    %cst_9 = arith.constant 0.000000e+00 : f32
    %8 = vector.broadcast %cst_9 : f32 to vector<8x32xf32>
    %cst_10 = arith.constant 0.000000e+00 : f32
    %9 = vector.broadcast %cst_10 : f32 to vector<8x32xf32>
    %cst_11 = arith.constant 0.000000e+00 : f32
    %10 = vector.broadcast %cst_11 : f32 to vector<8x32xf32>
    %cst_12 = arith.constant 0.000000e+00 : f32
    %11 = vector.broadcast %cst_12 : f32 to vector<8x32xf32>
    %12 = tpu.concatenate %8, %10 in 1 : vector<8x32xf32>, vector<8x32xf32> -> vector<8x64xf32>
    %c0_13 = arith.constant 0 : index
    %c0_14 = arith.constant 0 : index
    %13 = vector.load %arg4[%c0_13, %c0_14] : memref<64x256xf32, #tpu.memory_space<vmem>>, vector<64x256xf32>
    %cst_15 = arith.constant dense<0.000000e+00> : vector<8x256xf32>
    %14 = tpu.matmul %12, %13, %cst_15 {dimension_numbers = #tpu.dot_dimension_numbers<[1], [0], [0], [1], [0, 0, 1, 1], [], []>} : vector<8x64xf32>, vector<64x256xf32>, vector<8x256xf32> -> vector<8x256xf32>
    %c0_16 = arith.constant 0 : index
    %c0_17 = arith.constant 0 : index
    %15 = vector.load %arg16[%c0_16, %c0_17] : memref<64x256xf32, #tpu.memory_space<vmem>>, vector<8x128xf32>
    %16 = vector.extract_strided_slice %14 {offsets = [0, 0], sizes = [8, 128], strides = [1, 1]} : vector<8x256xf32> to vector<8x128xf32>
    %17 = arith.addf %15, %16 : vector<8x128xf32>
    %c56 = arith.constant 56 : index
    %c128 = arith.constant 128 : index
    %18 = vector.load %arg16[%c56, %c128] : memref<64x256xf32, #tpu.memory_space<vmem>>, vector<8x128xf32>
    %19 = vector.extract_strided_slice %14 {offsets = [0, 128], sizes = [8, 128], strides = [1, 1]} : vector<8x256xf32> to vector<8x128xf32>
    %20 = arith.addf %18, %19 : vector<8x128xf32>
    %21 = vector.extract_strided_slice %17 {offsets = [0, 0], sizes = [8, 96], strides = [1, 1]} : vector<8x128xf32> to vector<8x96xf32>
    %22 = arith.negf %21 : vector<8x96xf32>
    %23 = math.exp %22 : vector<8x96xf32>
    %cst_18 = arith.constant 1.000000e+00 : f32
    %24 = vector.broadcast %cst_18 : f32 to vector<8x96xf32>
    %25 = arith.addf %24, %23 : vector<8x96xf32>
    %26 = arith.divf %24, %25 : vector<8x96xf32>
    %27 = vector.extract_strided_slice %17 {offsets = [0, 96], sizes = [8, 32], strides = [1, 1]} : vector<8x128xf32> to vector<8x32xf32>
    %28 = math.tanh %27 : vector<8x32xf32>
    %29 = vector.extract_strided_slice %26 {offsets = [0, 32], sizes = [8, 32], strides = [1, 1]} : vector<8x96xf32> to vector<8x32xf32>
    %30 = arith.mulf %29, %9 : vector<8x32xf32>
    %31 = vector.extract_strided_slice %26 {offsets = [0, 0], sizes = [8, 32], strides = [1, 1]} : vector<8x96xf32> to vector<8x32xf32>
    %32 = arith.mulf %31, %28 : vector<8x32xf32>
    %33 = arith.addf %30, %32 : vector<8x32xf32>
    %34 = vector.extract_strided_slice %26 {offsets = [0, 64], sizes = [8, 32], strides = [1, 1]} : vector<8x96xf32> to vector<8x32xf32>
    %35 = math.tanh %33 : vector<8x32xf32>
    %36 = arith.mulf %34, %35 : vector<8x32xf32>
    %37 = vector.extract_strided_slice %20 {offsets = [0, 0], sizes = [8, 96], strides = [1, 1]} : vector<8x128xf32> to vector<8x96xf32>
    %38 = arith.negf %37 : vector<8x96xf32>
    %39 = math.exp %38 : vector<8x96xf32>
    %cst_19 = arith.constant 1.000000e+00 : f32
    %40 = vector.broadcast %cst_19 : f32 to vector<8x96xf32>
    %41 = arith.addf %40, %39 : vector<8x96xf32>
    %42 = arith.divf %40, %41 : vector<8x96xf32>
    %43 = vector.extract_strided_slice %20 {offsets = [0, 96], sizes = [8, 32], strides = [1, 1]} : vector<8x128xf32> to vector<8x32xf32>
    %44 = math.tanh %43 : vector<8x32xf32>
    %45 = vector.extract_strided_slice %42 {offsets = [0, 32], sizes = [8, 32], strides = [1, 1]} : vector<8x96xf32> to vector<8x32xf32>
    %46 = arith.mulf %45, %11 : vector<8x32xf32>
    %47 = vector.extract_strided_slice %42 {offsets = [0, 0], sizes = [8, 32], strides = [1, 1]} : vector<8x96xf32> to vector<8x32xf32>
    %48 = arith.mulf %47, %44 : vector<8x32xf32>
    %49 = arith.addf %46, %48 : vector<8x32xf32>
    %50 = vector.extract_strided_slice %42 {offsets = [0, 64], sizes = [8, 32], strides = [1, 1]} : vector<8x96xf32> to vector<8x32xf32>
    %51 = math.tanh %49 : vector<8x32xf32>
    %52 = arith.mulf %50, %51 : vector<8x32xf32>
    %53 = tpu.concatenate %36, %52 in 1 : vector<8x32xf32>, vector<8x32xf32> -> vector<8x64xf32>
    %c0_20 = arith.constant 0 : index
    %c0_21 = arith.constant 0 : index
    %54 = vector.load %arg4[%c0_20, %c0_21] : memref<64x256xf32, #tpu.memory_space<vmem>>, vector<64x256xf32>
    %cst_22 = arith.constant dense<0.000000e+00> : vector<8x256xf32>
    %55 = tpu.matmul %53, %54, %cst_22 {dimension_numbers = #tpu.dot_dimension_numbers<[1], [0], [0], [1], [0, 0, 1, 1], [], []>} : vector<8x64xf32>, vector<64x256xf32>, vector<8x256xf32> -> vector<8x256xf32>
    %c8 = arith.constant 8 : index
    %c0_23 = arith.constant 0 : index
    %56 = vector.load %arg16[%c8, %c0_23] : memref<64x256xf32, #tpu.memory_space<vmem>>, vector<8x128xf32>
    %57 = vector.extract_strided_slice %55 {offsets = [0, 0], sizes = [8, 128], strides = [1, 1]} : vector<8x256xf32> to vector<8x128xf32>
    %58 = arith.addf %56, %57 : vector<8x128xf32>
    %c48 = arith.constant 48 : index
    %c128_24 = arith.constant 128 : index
    %59 = vector.load %arg16[%c48, %c128_24] : memref<64x256xf32, #tpu.memory_space<vmem>>, vector<8x128xf32>
    %60 = vector.extract_strided_slice %55 {offsets = [0, 128], sizes = [8, 128], strides = [1, 1]} : vector<8x256xf32> to vector<8x128xf32>
    %61 = arith.addf %59, %60 : vector<8x128xf32>
    %62 = vector.extract_strided_slice %58 {offsets = [0, 0], sizes = [8, 96], strides = [1, 1]} : vector<8x128xf32> to vector<8x96xf32>
    %63 = arith.negf %62 : vector<8x96xf32>
    %64 = math.exp %63 : vector<8x96xf32>
    %cst_25 = arith.constant 1.000000e+00 : f32
    %65 = vector.broadcast %cst_25 : f32 to vector<8x96xf32>
    %66 = arith.addf %65, %64 : vector<8x96xf32>
    %67 = arith.divf %65, %66 : vector<8x96xf32>
    %68 = vector.extract_strided_slice %58 {offsets = [0, 96], sizes = [8, 32], strides = [1, 1]} : vector<8x128xf32> to vector<8x32xf32>
    %69 = math.tanh %68 : vector<8x32xf32>
    %70 = vector.extract_strided_slice %67 {offsets = [0, 32], sizes = [8, 32], strides = [1, 1]} : vector<8x96xf32> to vector<8x32xf32>
    %71 = arith.mulf %70, %33 : vector<8x32xf32>
    %72 = vector.extract_strided_slice %67 {offsets = [0, 0], sizes = [8, 32], strides = [1, 1]} : vector<8x96xf32> to vector<8x32xf32>
    %73 = arith.mulf %72, %69 : vector<8x32xf32>
    %74 = arith.addf %71, %73 : vector<8x32xf32>
    %75 = vector.extract_strided_slice %67 {offsets = [0, 64], sizes = [8, 32], strides = [1, 1]} : vector<8x96xf32> to vector<8x32xf32>
    %76 = math.tanh %74 : vector<8x32xf32>
    %77 = arith.mulf %75, %76 : vector<8x32xf32>
    %78 = vector.extract_strided_slice %61 {offsets = [0, 0], sizes = [8, 96], strides = [1, 1]} : vector<8x128xf32> to vector<8x96xf32>
    %79 = arith.negf %78 : vector<8x96xf32>
    %80 = math.exp %79 : vector<8x96xf32>
    %cst_26 = arith.constant 1.000000e+00 : f32
    %81 = vector.broadcast %cst_26 : f32 to vector<8x96xf32>
    %82 = arith.addf %81, %80 : vector<8x96xf32>
    %83 = arith.divf %81, %82 : vector<8x96xf32>
    %84 = vector.extract_strided_slice %61 {offsets = [0, 96], sizes = [8, 32], strides = [1, 1]} : vector<8x128xf32> to vector<8x32xf32>
    %85 = math.tanh %84 : vector<8x32xf32>
    %86 = vector.extract_strided_slice %83 {offsets = [0, 32], sizes = [8, 32], strides = [1, 1]} : vector<8x96xf32> to vector<8x32xf32>
    %87 = arith.mulf %86, %49 : vector<8x32xf32>
    %88 = vector.extract_strided_slice %83 {offsets = [0, 0], sizes = [8, 32], strides = [1, 1]} : vector<8x96xf32> to vector<8x32xf32>
    %89 = arith.mulf %88, %85 : vector<8x32xf32>
    %90 = arith.addf %87, %89 : vector<8x32xf32>
    %91 = vector.extract_strided_slice %83 {offsets = [0, 64], sizes = [8, 32], strides = [1, 1]} : vector<8x96xf32> to vector<8x32xf32>
    %92 = math.tanh %90 : vector<8x32xf32>
    %93 = arith.mulf %91, %92 : vector<8x32xf32>
    %94 = tpu.concatenate %77, %93 in 1 : vector<8x32xf32>, vector<8x32xf32> -> vector<8x64xf32>
    %c0_27 = arith.constant 0 : index
    %c0_28 = arith.constant 0 : index
    %95 = vector.load %arg4[%c0_27, %c0_28] : memref<64x256xf32, #tpu.memory_space<vmem>>, vector<64x256xf32>
    %cst_29 = arith.constant dense<0.000000e+00> : vector<8x256xf32>
    %96 = tpu.matmul %94, %95, %cst_29 {dimension_numbers = #tpu.dot_dimension_numbers<[1], [0], [0], [1], [0, 0, 1, 1], [], []>} : vector<8x64xf32>, vector<64x256xf32>, vector<8x256xf32> -> vector<8x256xf32>
    %c16 = arith.constant 16 : index
    %c0_30 = arith.constant 0 : index
    %97 = vector.load %arg16[%c16, %c0_30] : memref<64x256xf32, #tpu.memory_space<vmem>>, vector<8x128xf32>
    %98 = vector.extract_strided_slice %96 {offsets = [0, 0], sizes = [8, 128], strides = [1, 1]} : vector<8x256xf32> to vector<8x128xf32>
    %99 = arith.addf %97, %98 : vector<8x128xf32>
    %c40 = arith.constant 40 : index
    %c128_31 = arith.constant 128 : index
    %100 = vector.load %arg16[%c40, %c128_31] : memref<64x256xf32, #tpu.memory_space<vmem>>, vector<8x128xf32>
    %101 = vector.extract_strided_slice %96 {offsets = [0, 128], sizes = [8, 128], strides = [1, 1]} : vector<8x256xf32> to vector<8x128xf32>
    %102 = arith.addf %100, %101 : vector<8x128xf32>
    %103 = vector.extract_strided_slice %99 {offsets = [0, 0], sizes = [8, 96], strides = [1, 1]} : vector<8x128xf32> to vector<8x96xf32>
    %104 = arith.negf %103 : vector<8x96xf32>
    %105 = math.exp %104 : vector<8x96xf32>
    %cst_32 = arith.constant 1.000000e+00 : f32
    %106 = vector.broadcast %cst_32 : f32 to vector<8x96xf32>
    %107 = arith.addf %106, %105 : vector<8x96xf32>
    %108 = arith.divf %106, %107 : vector<8x96xf32>
    %109 = vector.extract_strided_slice %99 {offsets = [0, 96], sizes = [8, 32], strides = [1, 1]} : vector<8x128xf32> to vector<8x32xf32>
    %110 = math.tanh %109 : vector<8x32xf32>
    %111 = vector.extract_strided_slice %108 {offsets = [0, 32], sizes = [8, 32], strides = [1, 1]} : vector<8x96xf32> to vector<8x32xf32>
    %112 = arith.mulf %111, %74 : vector<8x32xf32>
    %113 = vector.extract_strided_slice %108 {offsets = [0, 0], sizes = [8, 32], strides = [1, 1]} : vector<8x96xf32> to vector<8x32xf32>
    %114 = arith.mulf %113, %110 : vector<8x32xf32>
    %115 = arith.addf %112, %114 : vector<8x32xf32>
    %116 = vector.extract_strided_slice %108 {offsets = [0, 64], sizes = [8, 32], strides = [1, 1]} : vector<8x96xf32> to vector<8x32xf32>
    %117 = math.tanh %115 : vector<8x32xf32>
    %118 = arith.mulf %116, %117 : vector<8x32xf32>
    %119 = vector.extract_strided_slice %102 {offsets = [0, 0], sizes = [8, 96], strides = [1, 1]} : vector<8x128xf32> to vector<8x96xf32>
    %120 = arith.negf %119 : vector<8x96xf32>
    %121 = math.exp %120 : vector<8x96xf32>
    %cst_33 = arith.constant 1.000000e+00 : f32
    %122 = vector.broadcast %cst_33 : f32 to vector<8x96xf32>
    %123 = arith.addf %122, %121 : vector<8x96xf32>
    %124 = arith.divf %122, %123 : vector<8x96xf32>
    %125 = vector.extract_strided_slice %102 {offsets = [0, 96], sizes = [8, 32], strides = [1, 1]} : vector<8x128xf32> to vector<8x32xf32>
    %126 = math.tanh %125 : vector<8x32xf32>
    %127 = vector.extract_strided_slice %124 {offsets = [0, 32], sizes = [8, 32], strides = [1, 1]} : vector<8x96xf32> to vector<8x32xf32>
    %128 = arith.mulf %127, %90 : vector<8x32xf32>
    %129 = vector.extract_strided_slice %124 {offsets = [0, 0], sizes = [8, 32], strides = [1, 1]} : vector<8x96xf32> to vector<8x32xf32>
    %130 = arith.mulf %129, %126 : vector<8x32xf32>
    %131 = arith.addf %128, %130 : vector<8x32xf32>
    %132 = vector.extract_strided_slice %124 {offsets = [0, 64], sizes = [8, 32], strides = [1, 1]} : vector<8x96xf32> to vector<8x32xf32>
    %133 = math.tanh %131 : vector<8x32xf32>
    %134 = arith.mulf %132, %133 : vector<8x32xf32>
    %135 = tpu.concatenate %118, %134 in 1 : vector<8x32xf32>, vector<8x32xf32> -> vector<8x64xf32>
    %c0_34 = arith.constant 0 : index
    %c0_35 = arith.constant 0 : index
    %136 = vector.load %arg4[%c0_34, %c0_35] : memref<64x256xf32, #tpu.memory_space<vmem>>, vector<64x256xf32>
    %cst_36 = arith.constant dense<0.000000e+00> : vector<8x256xf32>
    %137 = tpu.matmul %135, %136, %cst_36 {dimension_numbers = #tpu.dot_dimension_numbers<[1], [0], [0], [1], [0, 0, 1, 1], [], []>} : vector<8x64xf32>, vector<64x256xf32>, vector<8x256xf32> -> vector<8x256xf32>
    %c24 = arith.constant 24 : index
    %c0_37 = arith.constant 0 : index
    %138 = vector.load %arg16[%c24, %c0_37] : memref<64x256xf32, #tpu.memory_space<vmem>>, vector<8x128xf32>
    %139 = vector.extract_strided_slice %137 {offsets = [0, 0], sizes = [8, 128], strides = [1, 1]} : vector<8x256xf32> to vector<8x128xf32>
    %140 = arith.addf %138, %139 : vector<8x128xf32>
    %c32 = arith.constant 32 : index
    %c128_38 = arith.constant 128 : index
    %141 = vector.load %arg16[%c32, %c128_38] : memref<64x256xf32, #tpu.memory_space<vmem>>, vector<8x128xf32>
    %142 = vector.extract_strided_slice %137 {offsets = [0, 128], sizes = [8, 128], strides = [1, 1]} : vector<8x256xf32> to vector<8x128xf32>
    %143 = arith.addf %141, %142 : vector<8x128xf32>
    %144 = vector.extract_strided_slice %140 {offsets = [0, 0], sizes = [8, 96], strides = [1, 1]} : vector<8x128xf32> to vector<8x96xf32>
    %145 = arith.negf %144 : vector<8x96xf32>
    %146 = math.exp %145 : vector<8x96xf32>
    %cst_39 = arith.constant 1.000000e+00 : f32
    %147 = vector.broadcast %cst_39 : f32 to vector<8x96xf32>
    %148 = arith.addf %147, %146 : vector<8x96xf32>
    %149 = arith.divf %147, %148 : vector<8x96xf32>
    %150 = vector.extract_strided_slice %140 {offsets = [0, 96], sizes = [8, 32], strides = [1, 1]} : vector<8x128xf32> to vector<8x32xf32>
    %151 = math.tanh %150 : vector<8x32xf32>
    %152 = vector.extract_strided_slice %149 {offsets = [0, 32], sizes = [8, 32], strides = [1, 1]} : vector<8x96xf32> to vector<8x32xf32>
    %153 = arith.mulf %152, %115 : vector<8x32xf32>
    %154 = vector.extract_strided_slice %149 {offsets = [0, 0], sizes = [8, 32], strides = [1, 1]} : vector<8x96xf32> to vector<8x32xf32>
    %155 = arith.mulf %154, %151 : vector<8x32xf32>
    %156 = arith.addf %153, %155 : vector<8x32xf32>
    %157 = vector.extract_strided_slice %149 {offsets = [0, 64], sizes = [8, 32], strides = [1, 1]} : vector<8x96xf32> to vector<8x32xf32>
    %158 = math.tanh %156 : vector<8x32xf32>
    %159 = arith.mulf %157, %158 : vector<8x32xf32>
    %160 = vector.extract_strided_slice %143 {offsets = [0, 0], sizes = [8, 96], strides = [1, 1]} : vector<8x128xf32> to vector<8x96xf32>
    %161 = arith.negf %160 : vector<8x96xf32>
    %162 = math.exp %161 : vector<8x96xf32>
    %cst_40 = arith.constant 1.000000e+00 : f32
    %163 = vector.broadcast %cst_40 : f32 to vector<8x96xf32>
    %164 = arith.addf %163, %162 : vector<8x96xf32>
    %165 = arith.divf %163, %164 : vector<8x96xf32>
    %166 = vector.extract_strided_slice %143 {offsets = [0, 96], sizes = [8, 32], strides = [1, 1]} : vector<8x128xf32> to vector<8x32xf32>
    %167 = math.tanh %166 : vector<8x32xf32>
    %168 = vector.extract_strided_slice %165 {offsets = [0, 32], sizes = [8, 32], strides = [1, 1]} : vector<8x96xf32> to vector<8x32xf32>
    %169 = arith.mulf %168, %131 : vector<8x32xf32>
    %170 = vector.extract_strided_slice %165 {offsets = [0, 0], sizes = [8, 32], strides = [1, 1]} : vector<8x96xf32> to vector<8x32xf32>
    %171 = arith.mulf %170, %167 : vector<8x32xf32>
    %172 = arith.addf %169, %171 : vector<8x32xf32>
    %173 = vector.extract_strided_slice %165 {offsets = [0, 64], sizes = [8, 32], strides = [1, 1]} : vector<8x96xf32> to vector<8x32xf32>
    %174 = math.tanh %172 : vector<8x32xf32>
    %175 = arith.mulf %173, %174 : vector<8x32xf32>
    %176 = tpu.concatenate %159, %175 in 1 : vector<8x32xf32>, vector<8x32xf32> -> vector<8x64xf32>
    %c0_41 = arith.constant 0 : index
    %c0_42 = arith.constant 0 : index
    %177 = vector.load %arg4[%c0_41, %c0_42] : memref<64x256xf32, #tpu.memory_space<vmem>>, vector<64x256xf32>
    %cst_43 = arith.constant dense<0.000000e+00> : vector<8x256xf32>
    %178 = tpu.matmul %176, %177, %cst_43 {dimension_numbers = #tpu.dot_dimension_numbers<[1], [0], [0], [1], [0, 0, 1, 1], [], []>} : vector<8x64xf32>, vector<64x256xf32>, vector<8x256xf32> -> vector<8x256xf32>
    %c32_44 = arith.constant 32 : index
    %c0_45 = arith.constant 0 : index
    %179 = vector.load %arg16[%c32_44, %c0_45] : memref<64x256xf32, #tpu.memory_space<vmem>>, vector<8x128xf32>
    %180 = vector.extract_strided_slice %178 {offsets = [0, 0], sizes = [8, 128], strides = [1, 1]} : vector<8x256xf32> to vector<8x128xf32>
    %181 = arith.addf %179, %180 : vector<8x128xf32>
    %c24_46 = arith.constant 24 : index
    %c128_47 = arith.constant 128 : index
    %182 = vector.load %arg16[%c24_46, %c128_47] : memref<64x256xf32, #tpu.memory_space<vmem>>, vector<8x128xf32>
    %183 = vector.extract_strided_slice %178 {offsets = [0, 128], sizes = [8, 128], strides = [1, 1]} : vector<8x256xf32> to vector<8x128xf32>
    %184 = arith.addf %182, %183 : vector<8x128xf32>
    %185 = vector.extract_strided_slice %181 {offsets = [0, 0], sizes = [8, 96], strides = [1, 1]} : vector<8x128xf32> to vector<8x96xf32>
    %186 = arith.negf %185 : vector<8x96xf32>
    %187 = math.exp %186 : vector<8x96xf32>
    %cst_48 = arith.constant 1.000000e+00 : f32
    %188 = vector.broadcast %cst_48 : f32 to vector<8x96xf32>
    %189 = arith.addf %188, %187 : vector<8x96xf32>
    %190 = arith.divf %188, %189 : vector<8x96xf32>
    %191 = vector.extract_strided_slice %181 {offsets = [0, 96], sizes = [8, 32], strides = [1, 1]} : vector<8x128xf32> to vector<8x32xf32>
    %192 = math.tanh %191 : vector<8x32xf32>
    %193 = vector.extract_strided_slice %190 {offsets = [0, 32], sizes = [8, 32], strides = [1, 1]} : vector<8x96xf32> to vector<8x32xf32>
    %194 = arith.mulf %193, %156 : vector<8x32xf32>
    %195 = vector.extract_strided_slice %190 {offsets = [0, 0], sizes = [8, 32], strides = [1, 1]} : vector<8x96xf32> to vector<8x32xf32>
    %196 = arith.mulf %195, %192 : vector<8x32xf32>
    %197 = arith.addf %194, %196 : vector<8x32xf32>
    %198 = vector.extract_strided_slice %190 {offsets = [0, 64], sizes = [8, 32], strides = [1, 1]} : vector<8x96xf32> to vector<8x32xf32>
    %199 = math.tanh %197 : vector<8x32xf32>
    %200 = arith.mulf %198, %199 : vector<8x32xf32>
    %201 = vector.extract_strided_slice %184 {offsets = [0, 0], sizes = [8, 96], strides = [1, 1]} : vector<8x128xf32> to vector<8x96xf32>
    %202 = arith.negf %201 : vector<8x96xf32>
    %203 = math.exp %202 : vector<8x96xf32>
    %cst_49 = arith.constant 1.000000e+00 : f32
    %204 = vector.broadcast %cst_49 : f32 to vector<8x96xf32>
    %205 = arith.addf %204, %203 : vector<8x96xf32>
    %206 = arith.divf %204, %205 : vector<8x96xf32>
    %207 = vector.extract_strided_slice %184 {offsets = [0, 96], sizes = [8, 32], strides = [1, 1]} : vector<8x128xf32> to vector<8x32xf32>
    %208 = math.tanh %207 : vector<8x32xf32>
    %209 = vector.extract_strided_slice %206 {offsets = [0, 32], sizes = [8, 32], strides = [1, 1]} : vector<8x96xf32> to vector<8x32xf32>
    %210 = arith.mulf %209, %172 : vector<8x32xf32>
    %211 = vector.extract_strided_slice %206 {offsets = [0, 0], sizes = [8, 32], strides = [1, 1]} : vector<8x96xf32> to vector<8x32xf32>
    %212 = arith.mulf %211, %208 : vector<8x32xf32>
    %213 = arith.addf %210, %212 : vector<8x32xf32>
    %214 = vector.extract_strided_slice %206 {offsets = [0, 64], sizes = [8, 32], strides = [1, 1]} : vector<8x96xf32> to vector<8x32xf32>
    %215 = math.tanh %213 : vector<8x32xf32>
    %216 = arith.mulf %214, %215 : vector<8x32xf32>
    %217 = tpu.concatenate %200, %216 in 1 : vector<8x32xf32>, vector<8x32xf32> -> vector<8x64xf32>
    %c0_50 = arith.constant 0 : index
    %c0_51 = arith.constant 0 : index
    %218 = vector.load %arg4[%c0_50, %c0_51] : memref<64x256xf32, #tpu.memory_space<vmem>>, vector<64x256xf32>
    %cst_52 = arith.constant dense<0.000000e+00> : vector<8x256xf32>
    %219 = tpu.matmul %217, %218, %cst_52 {dimension_numbers = #tpu.dot_dimension_numbers<[1], [0], [0], [1], [0, 0, 1, 1], [], []>} : vector<8x64xf32>, vector<64x256xf32>, vector<8x256xf32> -> vector<8x256xf32>
    %c40_53 = arith.constant 40 : index
    %c0_54 = arith.constant 0 : index
    %220 = vector.load %arg16[%c40_53, %c0_54] : memref<64x256xf32, #tpu.memory_space<vmem>>, vector<8x128xf32>
    %221 = vector.extract_strided_slice %219 {offsets = [0, 0], sizes = [8, 128], strides = [1, 1]} : vector<8x256xf32> to vector<8x128xf32>
    %222 = arith.addf %220, %221 : vector<8x128xf32>
    %c16_55 = arith.constant 16 : index
    %c128_56 = arith.constant 128 : index
    %223 = vector.load %arg16[%c16_55, %c128_56] : memref<64x256xf32, #tpu.memory_space<vmem>>, vector<8x128xf32>
    %224 = vector.extract_strided_slice %219 {offsets = [0, 128], sizes = [8, 128], strides = [1, 1]} : vector<8x256xf32> to vector<8x128xf32>
    %225 = arith.addf %223, %224 : vector<8x128xf32>
    %226 = vector.extract_strided_slice %222 {offsets = [0, 0], sizes = [8, 96], strides = [1, 1]} : vector<8x128xf32> to vector<8x96xf32>
    %227 = arith.negf %226 : vector<8x96xf32>
    %228 = math.exp %227 : vector<8x96xf32>
    %cst_57 = arith.constant 1.000000e+00 : f32
    %229 = vector.broadcast %cst_57 : f32 to vector<8x96xf32>
    %230 = arith.addf %229, %228 : vector<8x96xf32>
    %231 = arith.divf %229, %230 : vector<8x96xf32>
    %232 = vector.extract_strided_slice %222 {offsets = [0, 96], sizes = [8, 32], strides = [1, 1]} : vector<8x128xf32> to vector<8x32xf32>
    %233 = math.tanh %232 : vector<8x32xf32>
    %234 = vector.extract_strided_slice %231 {offsets = [0, 32], sizes = [8, 32], strides = [1, 1]} : vector<8x96xf32> to vector<8x32xf32>
    %235 = arith.mulf %234, %197 : vector<8x32xf32>
    %236 = vector.extract_strided_slice %231 {offsets = [0, 0], sizes = [8, 32], strides = [1, 1]} : vector<8x96xf32> to vector<8x32xf32>
    %237 = arith.mulf %236, %233 : vector<8x32xf32>
    %238 = arith.addf %235, %237 : vector<8x32xf32>
    %239 = vector.extract_strided_slice %231 {offsets = [0, 64], sizes = [8, 32], strides = [1, 1]} : vector<8x96xf32> to vector<8x32xf32>
    %240 = math.tanh %238 : vector<8x32xf32>
    %241 = arith.mulf %239, %240 : vector<8x32xf32>
    %242 = vector.extract_strided_slice %225 {offsets = [0, 0], sizes = [8, 96], strides = [1, 1]} : vector<8x128xf32> to vector<8x96xf32>
    %243 = arith.negf %242 : vector<8x96xf32>
    %244 = math.exp %243 : vector<8x96xf32>
    %cst_58 = arith.constant 1.000000e+00 : f32
    %245 = vector.broadcast %cst_58 : f32 to vector<8x96xf32>
    %246 = arith.addf %245, %244 : vector<8x96xf32>
    %247 = arith.divf %245, %246 : vector<8x96xf32>
    %248 = vector.extract_strided_slice %225 {offsets = [0, 96], sizes = [8, 32], strides = [1, 1]} : vector<8x128xf32> to vector<8x32xf32>
    %249 = math.tanh %248 : vector<8x32xf32>
    %250 = vector.extract_strided_slice %247 {offsets = [0, 32], sizes = [8, 32], strides = [1, 1]} : vector<8x96xf32> to vector<8x32xf32>
    %251 = arith.mulf %250, %213 : vector<8x32xf32>
    %252 = vector.extract_strided_slice %247 {offsets = [0, 0], sizes = [8, 32], strides = [1, 1]} : vector<8x96xf32> to vector<8x32xf32>
    %253 = arith.mulf %252, %249 : vector<8x32xf32>
    %254 = arith.addf %251, %253 : vector<8x32xf32>
    %255 = vector.extract_strided_slice %247 {offsets = [0, 64], sizes = [8, 32], strides = [1, 1]} : vector<8x96xf32> to vector<8x32xf32>
    %256 = math.tanh %254 : vector<8x32xf32>
    %257 = arith.mulf %255, %256 : vector<8x32xf32>
    %258 = tpu.concatenate %241, %257 in 1 : vector<8x32xf32>, vector<8x32xf32> -> vector<8x64xf32>
    %c0_59 = arith.constant 0 : index
    %c0_60 = arith.constant 0 : index
    %259 = vector.load %arg4[%c0_59, %c0_60] : memref<64x256xf32, #tpu.memory_space<vmem>>, vector<64x256xf32>
    %cst_61 = arith.constant dense<0.000000e+00> : vector<8x256xf32>
    %260 = tpu.matmul %258, %259, %cst_61 {dimension_numbers = #tpu.dot_dimension_numbers<[1], [0], [0], [1], [0, 0, 1, 1], [], []>} : vector<8x64xf32>, vector<64x256xf32>, vector<8x256xf32> -> vector<8x256xf32>
    %c48_62 = arith.constant 48 : index
    %c0_63 = arith.constant 0 : index
    %261 = vector.load %arg16[%c48_62, %c0_63] : memref<64x256xf32, #tpu.memory_space<vmem>>, vector<8x128xf32>
    %262 = vector.extract_strided_slice %260 {offsets = [0, 0], sizes = [8, 128], strides = [1, 1]} : vector<8x256xf32> to vector<8x128xf32>
    %263 = arith.addf %261, %262 : vector<8x128xf32>
    %c8_64 = arith.constant 8 : index
    %c128_65 = arith.constant 128 : index
    %264 = vector.load %arg16[%c8_64, %c128_65] : memref<64x256xf32, #tpu.memory_space<vmem>>, vector<8x128xf32>
    %265 = vector.extract_strided_slice %260 {offsets = [0, 128], sizes = [8, 128], strides = [1, 1]} : vector<8x256xf32> to vector<8x128xf32>
    %266 = arith.addf %264, %265 : vector<8x128xf32>
    %267 = vector.extract_strided_slice %263 {offsets = [0, 0], sizes = [8, 96], strides = [1, 1]} : vector<8x128xf32> to vector<8x96xf32>
    %268 = arith.negf %267 : vector<8x96xf32>
    %269 = math.exp %268 : vector<8x96xf32>
    %cst_66 = arith.constant 1.000000e+00 : f32
    %270 = vector.broadcast %cst_66 : f32 to vector<8x96xf32>
    %271 = arith.addf %270, %269 : vector<8x96xf32>
    %272 = arith.divf %270, %271 : vector<8x96xf32>
    %273 = vector.extract_strided_slice %263 {offsets = [0, 96], sizes = [8, 32], strides = [1, 1]} : vector<8x128xf32> to vector<8x32xf32>
    %274 = math.tanh %273 : vector<8x32xf32>
    %275 = vector.extract_strided_slice %272 {offsets = [0, 32], sizes = [8, 32], strides = [1, 1]} : vector<8x96xf32> to vector<8x32xf32>
    %276 = arith.mulf %275, %238 : vector<8x32xf32>
    %277 = vector.extract_strided_slice %272 {offsets = [0, 0], sizes = [8, 32], strides = [1, 1]} : vector<8x96xf32> to vector<8x32xf32>
    %278 = arith.mulf %277, %274 : vector<8x32xf32>
    %279 = arith.addf %276, %278 : vector<8x32xf32>
    %280 = vector.extract_strided_slice %272 {offsets = [0, 64], sizes = [8, 32], strides = [1, 1]} : vector<8x96xf32> to vector<8x32xf32>
    %281 = math.tanh %279 : vector<8x32xf32>
    %282 = arith.mulf %280, %281 : vector<8x32xf32>
    %283 = vector.extract_strided_slice %266 {offsets = [0, 0], sizes = [8, 96], strides = [1, 1]} : vector<8x128xf32> to vector<8x96xf32>
    %284 = arith.negf %283 : vector<8x96xf32>
    %285 = math.exp %284 : vector<8x96xf32>
    %cst_67 = arith.constant 1.000000e+00 : f32
    %286 = vector.broadcast %cst_67 : f32 to vector<8x96xf32>
    %287 = arith.addf %286, %285 : vector<8x96xf32>
    %288 = arith.divf %286, %287 : vector<8x96xf32>
    %289 = vector.extract_strided_slice %266 {offsets = [0, 96], sizes = [8, 32], strides = [1, 1]} : vector<8x128xf32> to vector<8x32xf32>
    %290 = math.tanh %289 : vector<8x32xf32>
    %291 = vector.extract_strided_slice %288 {offsets = [0, 32], sizes = [8, 32], strides = [1, 1]} : vector<8x96xf32> to vector<8x32xf32>
    %292 = arith.mulf %291, %254 : vector<8x32xf32>
    %293 = vector.extract_strided_slice %288 {offsets = [0, 0], sizes = [8, 32], strides = [1, 1]} : vector<8x96xf32> to vector<8x32xf32>
    %294 = arith.mulf %293, %290 : vector<8x32xf32>
    %295 = arith.addf %292, %294 : vector<8x32xf32>
    %296 = vector.extract_strided_slice %288 {offsets = [0, 64], sizes = [8, 32], strides = [1, 1]} : vector<8x96xf32> to vector<8x32xf32>
    %297 = math.tanh %295 : vector<8x32xf32>
    %298 = arith.mulf %296, %297 : vector<8x32xf32>
    %299 = tpu.concatenate %282, %298 in 1 : vector<8x32xf32>, vector<8x32xf32> -> vector<8x64xf32>
    %c0_68 = arith.constant 0 : index
    %c0_69 = arith.constant 0 : index
    %300 = vector.load %arg4[%c0_68, %c0_69] : memref<64x256xf32, #tpu.memory_space<vmem>>, vector<64x256xf32>
    %cst_70 = arith.constant dense<0.000000e+00> : vector<8x256xf32>
    %301 = tpu.matmul %299, %300, %cst_70 {dimension_numbers = #tpu.dot_dimension_numbers<[1], [0], [0], [1], [0, 0, 1, 1], [], []>} : vector<8x64xf32>, vector<64x256xf32>, vector<8x256xf32> -> vector<8x256xf32>
    %c56_71 = arith.constant 56 : index
    %c0_72 = arith.constant 0 : index
    %302 = vector.load %arg16[%c56_71, %c0_72] : memref<64x256xf32, #tpu.memory_space<vmem>>, vector<8x128xf32>
    %303 = vector.extract_strided_slice %301 {offsets = [0, 0], sizes = [8, 128], strides = [1, 1]} : vector<8x256xf32> to vector<8x128xf32>
    %304 = arith.addf %302, %303 : vector<8x128xf32>
    %c0_73 = arith.constant 0 : index
    %c128_74 = arith.constant 128 : index
    %305 = vector.load %arg16[%c0_73, %c128_74] : memref<64x256xf32, #tpu.memory_space<vmem>>, vector<8x128xf32>
    %306 = vector.extract_strided_slice %301 {offsets = [0, 128], sizes = [8, 128], strides = [1, 1]} : vector<8x256xf32> to vector<8x128xf32>
    %307 = arith.addf %305, %306 : vector<8x128xf32>
    %308 = vector.extract_strided_slice %304 {offsets = [0, 0], sizes = [8, 96], strides = [1, 1]} : vector<8x128xf32> to vector<8x96xf32>
    %309 = arith.negf %308 : vector<8x96xf32>
    %310 = math.exp %309 : vector<8x96xf32>
    %cst_75 = arith.constant 1.000000e+00 : f32
    %311 = vector.broadcast %cst_75 : f32 to vector<8x96xf32>
    %312 = arith.addf %311, %310 : vector<8x96xf32>
    %313 = arith.divf %311, %312 : vector<8x96xf32>
    %314 = vector.extract_strided_slice %304 {offsets = [0, 96], sizes = [8, 32], strides = [1, 1]} : vector<8x128xf32> to vector<8x32xf32>
    %315 = math.tanh %314 : vector<8x32xf32>
    %316 = vector.extract_strided_slice %313 {offsets = [0, 32], sizes = [8, 32], strides = [1, 1]} : vector<8x96xf32> to vector<8x32xf32>
    %317 = arith.mulf %316, %279 : vector<8x32xf32>
    %318 = vector.extract_strided_slice %313 {offsets = [0, 0], sizes = [8, 32], strides = [1, 1]} : vector<8x96xf32> to vector<8x32xf32>
    %319 = arith.mulf %318, %315 : vector<8x32xf32>
    %320 = arith.addf %317, %319 : vector<8x32xf32>
    %321 = vector.extract_strided_slice %313 {offsets = [0, 64], sizes = [8, 32], strides = [1, 1]} : vector<8x96xf32> to vector<8x32xf32>
    %322 = math.tanh %320 : vector<8x32xf32>
    %323 = arith.mulf %321, %322 : vector<8x32xf32>
    %324 = vector.extract_strided_slice %307 {offsets = [0, 0], sizes = [8, 96], strides = [1, 1]} : vector<8x128xf32> to vector<8x96xf32>
    %325 = arith.negf %324 : vector<8x96xf32>
    %326 = math.exp %325 : vector<8x96xf32>
    %cst_76 = arith.constant 1.000000e+00 : f32
    %327 = vector.broadcast %cst_76 : f32 to vector<8x96xf32>
    %328 = arith.addf %327, %326 : vector<8x96xf32>
    %329 = arith.divf %327, %328 : vector<8x96xf32>
    %330 = vector.extract_strided_slice %307 {offsets = [0, 96], sizes = [8, 32], strides = [1, 1]} : vector<8x128xf32> to vector<8x32xf32>
    %331 = math.tanh %330 : vector<8x32xf32>
    %332 = vector.extract_strided_slice %329 {offsets = [0, 32], sizes = [8, 32], strides = [1, 1]} : vector<8x96xf32> to vector<8x32xf32>
    %333 = arith.mulf %332, %295 : vector<8x32xf32>
    %334 = vector.extract_strided_slice %329 {offsets = [0, 0], sizes = [8, 32], strides = [1, 1]} : vector<8x96xf32> to vector<8x32xf32>
    %335 = arith.mulf %334, %331 : vector<8x32xf32>
    %336 = arith.addf %333, %335 : vector<8x32xf32>
    %337 = vector.extract_strided_slice %329 {offsets = [0, 64], sizes = [8, 32], strides = [1, 1]} : vector<8x96xf32> to vector<8x32xf32>
    %338 = math.tanh %336 : vector<8x32xf32>
    %339 = arith.mulf %337, %338 : vector<8x32xf32>
    %340 = tpu.concatenate %36, %339 in 1 : vector<8x32xf32>, vector<8x32xf32> -> vector<8x64xf32>
    %341 = tpu.concatenate %77, %298 in 1 : vector<8x32xf32>, vector<8x32xf32> -> vector<8x64xf32>
    %342 = tpu.concatenate %118, %257 in 1 : vector<8x32xf32>, vector<8x32xf32> -> vector<8x64xf32>
    %343 = tpu.concatenate %159, %216 in 1 : vector<8x32xf32>, vector<8x32xf32> -> vector<8x64xf32>
    %344 = tpu.concatenate %200, %175 in 1 : vector<8x32xf32>, vector<8x32xf32> -> vector<8x64xf32>
    %345 = tpu.concatenate %241, %134 in 1 : vector<8x32xf32>, vector<8x32xf32> -> vector<8x64xf32>
    %346 = tpu.concatenate %282, %93 in 1 : vector<8x32xf32>, vector<8x32xf32> -> vector<8x64xf32>
    %347 = tpu.concatenate %323, %52 in 1 : vector<8x32xf32>, vector<8x32xf32> -> vector<8x64xf32>
    %348 = tpu.concatenate %340, %341, %342, %343, %344, %345, %346, %347 in 0 : vector<8x64xf32>, vector<8x64xf32>, vector<8x64xf32>, vector<8x64xf32>, vector<8x64xf32>, vector<8x64xf32>, vector<8x64xf32>, vector<8x64xf32> -> vector<64x64xf32>
    %cst_77 = arith.constant 0.000000e+00 : f32
    %349 = vector.broadcast %cst_77 : f32 to vector<64x64xf32>
    %350 = arith.cmpf ogt, %348, %349 : vector<64x64xf32>
    %cst_78 = arith.constant 0.00999999977 : f32
    %351 = vector.broadcast %cst_78 : f32 to vector<64x64xf32>
    %352 = arith.mulf %351, %348 : vector<64x64xf32>
    %353 = arith.select %350, %348, %352 : vector<64x64xi1>, vector<64x64xf32>
    %354 = vector.broadcast %0 : vector<64x1xf32> to vector<64x64xf32>
    %355 = arith.mulf %353, %354 : vector<64x64xf32>
    %cst_79 = arith.constant dense<0.000000e+00> : vector<64xf32>
    %356 = vector.multi_reduction <add>, %355, %cst_79 [0] : vector<64x64xf32> to vector<64xf32>
    %357 = vector.shape_cast %356 : vector<64xf32> to vector<1x64xf32>
    %358 = arith.mulf %353, %355 : vector<64x64xf32>
    %cst_80 = arith.constant dense<0.000000e+00> : vector<64xf32>
    %359 = vector.multi_reduction <add>, %358, %cst_80 [0] : vector<64x64xf32> to vector<64xf32>
    %360 = vector.shape_cast %359 : vector<64xf32> to vector<1x64xf32>
    %cst_81 = arith.constant 1.600000e+01 : f32
    %361 = vector.broadcast %cst_81 : f32 to vector<1x64xf32>
    %362 = arith.divf %357, %361 : vector<1x64xf32>
    %cst_82 = arith.constant 1.600000e+01 : f32
    %363 = vector.broadcast %cst_82 : f32 to vector<1x64xf32>
    %364 = arith.divf %360, %363 : vector<1x64xf32>
    %365 = arith.mulf %362, %362 : vector<1x64xf32>
    %366 = arith.subf %364, %365 : vector<1x64xf32>
    %367 = vector.broadcast %362 : vector<1x64xf32> to vector<64x64xf32>
    %368 = arith.subf %353, %367 : vector<64x64xf32>
    %cst_83 = arith.constant 9.99999974E-6 : f32
    %369 = vector.broadcast %cst_83 : f32 to vector<1x64xf32>
    %370 = arith.addf %366, %369 : vector<1x64xf32>
    %371 = math.rsqrt %370 : vector<1x64xf32>
    %372 = vector.broadcast %371 : vector<1x64xf32> to vector<64x64xf32>
    %373 = arith.mulf %368, %372 : vector<64x64xf32>
    %c0_84 = arith.constant 0 : index
    %c0_85 = arith.constant 0 : index
    %374 = vector.load %arg5[%c0_84, %c0_85] : memref<1x64xf32, #tpu.memory_space<vmem>>, vector<1x64xf32>
    %375 = vector.broadcast %374 : vector<1x64xf32> to vector<64x64xf32>
    %376 = arith.mulf %373, %375 : vector<64x64xf32>
    %c0_86 = arith.constant 0 : index
    %c0_87 = arith.constant 0 : index
    %377 = vector.load %arg6[%c0_86, %c0_87] : memref<1x64xf32, #tpu.memory_space<vmem>>, vector<1x64xf32>
    %378 = vector.broadcast %377 : vector<1x64xf32> to vector<64x64xf32>
    %379 = arith.addf %376, %378 : vector<64x64xf32>
    %c0_88 = arith.constant 0 : index
    %c0_89 = arith.constant 0 : index
    %380 = vector.load %arg15[%c0_88, %c0_89] : memref<64x64xf32, #tpu.memory_space<vmem>>, vector<64x64xf32>
    tpu.vector_store %arg15[%c0_88, %c0_89], %379 {strides = array<i32>} : memref<64x64xf32, #tpu.memory_space<vmem>>, vector<64x64xf32>,
    %c0_90 = arith.constant 0 : index
    %c0_91 = arith.constant 0 : index
    %381 = vector.load %arg15[%c0_90, %c0_91] : memref<64x64xf32, #tpu.memory_space<vmem>>, vector<64x64xf32>
    %c0_92 = arith.constant 0 : index
    %c0_93 = arith.constant 0 : index
    %382 = vector.load %arg7[%c0_92, %c0_93] : memref<64x256xf32, #tpu.memory_space<vmem>>, vector<64x256xf32>
    %cst_94 = arith.constant dense<0.000000e+00> : vector<64x256xf32>
    %383 = tpu.matmul %381, %382, %cst_94 {dimension_numbers = #tpu.dot_dimension_numbers<[1], [0], [0], [1], [0, 0, 1, 1], [], []>} : vector<64x64xf32>, vector<64x256xf32>, vector<64x256xf32> -> vector<64x256xf32>
    %c0_95 = arith.constant 0 : index
    %c0_96 = arith.constant 0 : index
    %384 = vector.load %arg8[%c0_95, %c0_96] : memref<1x256xf32, #tpu.memory_space<vmem>>, vector<1x256xf32>
    %385 = vector.broadcast %384 : vector<1x256xf32> to vector<64x256xf32>
    %386 = arith.addf %383, %385 : vector<64x256xf32>
    %c0_97 = arith.constant 0 : index
    %c0_98 = arith.constant 0 : index
    %387 = vector.load %arg16[%c0_97, %c0_98] : memref<64x256xf32, #tpu.memory_space<vmem>>, vector<64x256xf32>
    tpu.vector_store %arg16[%c0_97, %c0_98], %386 {strides = array<i32>} : memref<64x256xf32, #tpu.memory_space<vmem>>, vector<64x256xf32>,
    %cst_99 = arith.constant 0.000000e+00 : f32
    %388 = vector.broadcast %cst_99 : f32 to vector<8x32xf32>
    %cst_100 = arith.constant 0.000000e+00 : f32
    %389 = vector.broadcast %cst_100 : f32 to vector<8x32xf32>
    %cst_101 = arith.constant 0.000000e+00 : f32
    %390 = vector.broadcast %cst_101 : f32 to vector<8x32xf32>
    %cst_102 = arith.constant 0.000000e+00 : f32
    %391 = vector.broadcast %cst_102 : f32 to vector<8x32xf32>
    %392 = tpu.concatenate %388, %390 in 1 : vector<8x32xf32>, vector<8x32xf32> -> vector<8x64xf32>
    %c0_103 = arith.constant 0 : index
    %c0_104 = arith.constant 0 : index
    %393 = vector.load %arg9[%c0_103, %c0_104] : memref<64x256xf32, #tpu.memory_space<vmem>>, vector<64x256xf32>
    %cst_105 = arith.constant dense<0.000000e+00> : vector<8x256xf32>
    %394 = tpu.matmul %392, %393, %cst_105 {dimension_numbers = #tpu.dot_dimension_numbers<[1], [0], [0], [1], [0, 0, 1, 1], [], []>} : vector<8x64xf32>, vector<64x256xf32>, vector<8x256xf32> -> vector<8x256xf32>
    %c0_106 = arith.constant 0 : index
    %c0_107 = arith.constant 0 : index
    %395 = vector.load %arg16[%c0_106, %c0_107] : memref<64x256xf32, #tpu.memory_space<vmem>>, vector<8x128xf32>
    %396 = vector.extract_strided_slice %394 {offsets = [0, 0], sizes = [8, 128], strides = [1, 1]} : vector<8x256xf32> to vector<8x128xf32>
    %397 = arith.addf %395, %396 : vector<8x128xf32>
    %c56_108 = arith.constant 56 : index
    %c128_109 = arith.constant 128 : index
    %398 = vector.load %arg16[%c56_108, %c128_109] : memref<64x256xf32, #tpu.memory_space<vmem>>, vector<8x128xf32>
    %399 = vector.extract_strided_slice %394 {offsets = [0, 128], sizes = [8, 128], strides = [1, 1]} : vector<8x256xf32> to vector<8x128xf32>
    %400 = arith.addf %398, %399 : vector<8x128xf32>
    %401 = vector.extract_strided_slice %397 {offsets = [0, 0], sizes = [8, 96], strides = [1, 1]} : vector<8x128xf32> to vector<8x96xf32>
    %402 = arith.negf %401 : vector<8x96xf32>
    %403 = math.exp %402 : vector<8x96xf32>
    %cst_110 = arith.constant 1.000000e+00 : f32
    %404 = vector.broadcast %cst_110 : f32 to vector<8x96xf32>
    %405 = arith.addf %404, %403 : vector<8x96xf32>
    %406 = arith.divf %404, %405 : vector<8x96xf32>
    %407 = vector.extract_strided_slice %397 {offsets = [0, 96], sizes = [8, 32], strides = [1, 1]} : vector<8x128xf32> to vector<8x32xf32>
    %408 = math.tanh %407 : vector<8x32xf32>
    %409 = vector.extract_strided_slice %406 {offsets = [0, 32], sizes = [8, 32], strides = [1, 1]} : vector<8x96xf32> to vector<8x32xf32>
    %410 = arith.mulf %409, %389 : vector<8x32xf32>
    %411 = vector.extract_strided_slice %406 {offsets = [0, 0], sizes = [8, 32], strides = [1, 1]} : vector<8x96xf32> to vector<8x32xf32>
    %412 = arith.mulf %411, %408 : vector<8x32xf32>
    %413 = arith.addf %410, %412 : vector<8x32xf32>
    %414 = vector.extract_strided_slice %406 {offsets = [0, 64], sizes = [8, 32], strides = [1, 1]} : vector<8x96xf32> to vector<8x32xf32>
    %415 = math.tanh %413 : vector<8x32xf32>
    %416 = arith.mulf %414, %415 : vector<8x32xf32>
    %417 = vector.extract_strided_slice %400 {offsets = [0, 0], sizes = [8, 96], strides = [1, 1]} : vector<8x128xf32> to vector<8x96xf32>
    %418 = arith.negf %417 : vector<8x96xf32>
    %419 = math.exp %418 : vector<8x96xf32>
    %cst_111 = arith.constant 1.000000e+00 : f32
    %420 = vector.broadcast %cst_111 : f32 to vector<8x96xf32>
    %421 = arith.addf %420, %419 : vector<8x96xf32>
    %422 = arith.divf %420, %421 : vector<8x96xf32>
    %423 = vector.extract_strided_slice %400 {offsets = [0, 96], sizes = [8, 32], strides = [1, 1]} : vector<8x128xf32> to vector<8x32xf32>
    %424 = math.tanh %423 : vector<8x32xf32>
    %425 = vector.extract_strided_slice %422 {offsets = [0, 32], sizes = [8, 32], strides = [1, 1]} : vector<8x96xf32> to vector<8x32xf32>
    %426 = arith.mulf %425, %391 : vector<8x32xf32>
    %427 = vector.extract_strided_slice %422 {offsets = [0, 0], sizes = [8, 32], strides = [1, 1]} : vector<8x96xf32> to vector<8x32xf32>
    %428 = arith.mulf %427, %424 : vector<8x32xf32>
    %429 = arith.addf %426, %428 : vector<8x32xf32>
    %430 = vector.extract_strided_slice %422 {offsets = [0, 64], sizes = [8, 32], strides = [1, 1]} : vector<8x96xf32> to vector<8x32xf32>
    %431 = math.tanh %429 : vector<8x32xf32>
    %432 = arith.mulf %430, %431 : vector<8x32xf32>
    %433 = tpu.concatenate %416, %432 in 1 : vector<8x32xf32>, vector<8x32xf32> -> vector<8x64xf32>
    %c0_112 = arith.constant 0 : index
    %c0_113 = arith.constant 0 : index
    %434 = vector.load %arg9[%c0_112, %c0_113] : memref<64x256xf32, #tpu.memory_space<vmem>>, vector<64x256xf32>
    %cst_114 = arith.constant dense<0.000000e+00> : vector<8x256xf32>
    %435 = tpu.matmul %433, %434, %cst_114 {dimension_numbers = #tpu.dot_dimension_numbers<[1], [0], [0], [1], [0, 0, 1, 1], [], []>} : vector<8x64xf32>, vector<64x256xf32>, vector<8x256xf32> -> vector<8x256xf32>
    %c8_115 = arith.constant 8 : index
    %c0_116 = arith.constant 0 : index
    %436 = vector.load %arg16[%c8_115, %c0_116] : memref<64x256xf32, #tpu.memory_space<vmem>>, vector<8x128xf32>
    %437 = vector.extract_strided_slice %435 {offsets = [0, 0], sizes = [8, 128], strides = [1, 1]} : vector<8x256xf32> to vector<8x128xf32>
    %438 = arith.addf %436, %437 : vector<8x128xf32>
    %c48_117 = arith.constant 48 : index
    %c128_118 = arith.constant 128 : index
    %439 = vector.load %arg16[%c48_117, %c128_118] : memref<64x256xf32, #tpu.memory_space<vmem>>, vector<8x128xf32>
    %440 = vector.extract_strided_slice %435 {offsets = [0, 128], sizes = [8, 128], strides = [1, 1]} : vector<8x256xf32> to vector<8x128xf32>
    %441 = arith.addf %439, %440 : vector<8x128xf32>
    %442 = vector.extract_strided_slice %438 {offsets = [0, 0], sizes = [8, 96], strides = [1, 1]} : vector<8x128xf32> to vector<8x96xf32>
    %443 = arith.negf %442 : vector<8x96xf32>
    %444 = math.exp %443 : vector<8x96xf32>
    %cst_119 = arith.constant 1.000000e+00 : f32
    %445 = vector.broadcast %cst_119 : f32 to vector<8x96xf32>
    %446 = arith.addf %445, %444 : vector<8x96xf32>
    %447 = arith.divf %445, %446 : vector<8x96xf32>
    %448 = vector.extract_strided_slice %438 {offsets = [0, 96], sizes = [8, 32], strides = [1, 1]} : vector<8x128xf32> to vector<8x32xf32>
    %449 = math.tanh %448 : vector<8x32xf32>
    %450 = vector.extract_strided_slice %447 {offsets = [0, 32], sizes = [8, 32], strides = [1, 1]} : vector<8x96xf32> to vector<8x32xf32>
    %451 = arith.mulf %450, %413 : vector<8x32xf32>
    %452 = vector.extract_strided_slice %447 {offsets = [0, 0], sizes = [8, 32], strides = [1, 1]} : vector<8x96xf32> to vector<8x32xf32>
    %453 = arith.mulf %452, %449 : vector<8x32xf32>
    %454 = arith.addf %451, %453 : vector<8x32xf32>
    %455 = vector.extract_strided_slice %447 {offsets = [0, 64], sizes = [8, 32], strides = [1, 1]} : vector<8x96xf32> to vector<8x32xf32>
    %456 = math.tanh %454 : vector<8x32xf32>
    %457 = arith.mulf %455, %456 : vector<8x32xf32>
    %458 = vector.extract_strided_slice %441 {offsets = [0, 0], sizes = [8, 96], strides = [1, 1]} : vector<8x128xf32> to vector<8x96xf32>
    %459 = arith.negf %458 : vector<8x96xf32>
    %460 = math.exp %459 : vector<8x96xf32>
    %cst_120 = arith.constant 1.000000e+00 : f32
    %461 = vector.broadcast %cst_120 : f32 to vector<8x96xf32>
    %462 = arith.addf %461, %460 : vector<8x96xf32>
    %463 = arith.divf %461, %462 : vector<8x96xf32>
    %464 = vector.extract_strided_slice %441 {offsets = [0, 96], sizes = [8, 32], strides = [1, 1]} : vector<8x128xf32> to vector<8x32xf32>
    %465 = math.tanh %464 : vector<8x32xf32>
    %466 = vector.extract_strided_slice %463 {offsets = [0, 32], sizes = [8, 32], strides = [1, 1]} : vector<8x96xf32> to vector<8x32xf32>
    %467 = arith.mulf %466, %429 : vector<8x32xf32>
    %468 = vector.extract_strided_slice %463 {offsets = [0, 0], sizes = [8, 32], strides = [1, 1]} : vector<8x96xf32> to vector<8x32xf32>
    %469 = arith.mulf %468, %465 : vector<8x32xf32>
    %470 = arith.addf %467, %469 : vector<8x32xf32>
    %471 = vector.extract_strided_slice %463 {offsets = [0, 64], sizes = [8, 32], strides = [1, 1]} : vector<8x96xf32> to vector<8x32xf32>
    %472 = math.tanh %470 : vector<8x32xf32>
    %473 = arith.mulf %471, %472 : vector<8x32xf32>
    %474 = tpu.concatenate %457, %473 in 1 : vector<8x32xf32>, vector<8x32xf32> -> vector<8x64xf32>
    %c0_121 = arith.constant 0 : index
    %c0_122 = arith.constant 0 : index
    %475 = vector.load %arg9[%c0_121, %c0_122] : memref<64x256xf32, #tpu.memory_space<vmem>>, vector<64x256xf32>
    %cst_123 = arith.constant dense<0.000000e+00> : vector<8x256xf32>
    %476 = tpu.matmul %474, %475, %cst_123 {dimension_numbers = #tpu.dot_dimension_numbers<[1], [0], [0], [1], [0, 0, 1, 1], [], []>} : vector<8x64xf32>, vector<64x256xf32>, vector<8x256xf32> -> vector<8x256xf32>
    %c16_124 = arith.constant 16 : index
    %c0_125 = arith.constant 0 : index
    %477 = vector.load %arg16[%c16_124, %c0_125] : memref<64x256xf32, #tpu.memory_space<vmem>>, vector<8x128xf32>
    %478 = vector.extract_strided_slice %476 {offsets = [0, 0], sizes = [8, 128], strides = [1, 1]} : vector<8x256xf32> to vector<8x128xf32>
    %479 = arith.addf %477, %478 : vector<8x128xf32>
    %c40_126 = arith.constant 40 : index
    %c128_127 = arith.constant 128 : index
    %480 = vector.load %arg16[%c40_126, %c128_127] : memref<64x256xf32, #tpu.memory_space<vmem>>, vector<8x128xf32>
    %481 = vector.extract_strided_slice %476 {offsets = [0, 128], sizes = [8, 128], strides = [1, 1]} : vector<8x256xf32> to vector<8x128xf32>
    %482 = arith.addf %480, %481 : vector<8x128xf32>
    %483 = vector.extract_strided_slice %479 {offsets = [0, 0], sizes = [8, 96], strides = [1, 1]} : vector<8x128xf32> to vector<8x96xf32>
    %484 = arith.negf %483 : vector<8x96xf32>
    %485 = math.exp %484 : vector<8x96xf32>
    %cst_128 = arith.constant 1.000000e+00 : f32
    %486 = vector.broadcast %cst_128 : f32 to vector<8x96xf32>
    %487 = arith.addf %486, %485 : vector<8x96xf32>
    %488 = arith.divf %486, %487 : vector<8x96xf32>
    %489 = vector.extract_strided_slice %479 {offsets = [0, 96], sizes = [8, 32], strides = [1, 1]} : vector<8x128xf32> to vector<8x32xf32>
    %490 = math.tanh %489 : vector<8x32xf32>
    %491 = vector.extract_strided_slice %488 {offsets = [0, 32], sizes = [8, 32], strides = [1, 1]} : vector<8x96xf32> to vector<8x32xf32>
    %492 = arith.mulf %491, %454 : vector<8x32xf32>
    %493 = vector.extract_strided_slice %488 {offsets = [0, 0], sizes = [8, 32], strides = [1, 1]} : vector<8x96xf32> to vector<8x32xf32>
    %494 = arith.mulf %493, %490 : vector<8x32xf32>
    %495 = arith.addf %492, %494 : vector<8x32xf32>
    %496 = vector.extract_strided_slice %488 {offsets = [0, 64], sizes = [8, 32], strides = [1, 1]} : vector<8x96xf32> to vector<8x32xf32>
    %497 = math.tanh %495 : vector<8x32xf32>
    %498 = arith.mulf %496, %497 : vector<8x32xf32>
    %499 = vector.extract_strided_slice %482 {offsets = [0, 0], sizes = [8, 96], strides = [1, 1]} : vector<8x128xf32> to vector<8x96xf32>
    %500 = arith.negf %499 : vector<8x96xf32>
    %501 = math.exp %500 : vector<8x96xf32>
    %cst_129 = arith.constant 1.000000e+00 : f32
    %502 = vector.broadcast %cst_129 : f32 to vector<8x96xf32>
    %503 = arith.addf %502, %501 : vector<8x96xf32>
    %504 = arith.divf %502, %503 : vector<8x96xf32>
    %505 = vector.extract_strided_slice %482 {offsets = [0, 96], sizes = [8, 32], strides = [1, 1]} : vector<8x128xf32> to vector<8x32xf32>
    %506 = math.tanh %505 : vector<8x32xf32>
    %507 = vector.extract_strided_slice %504 {offsets = [0, 32], sizes = [8, 32], strides = [1, 1]} : vector<8x96xf32> to vector<8x32xf32>
    %508 = arith.mulf %507, %470 : vector<8x32xf32>
    %509 = vector.extract_strided_slice %504 {offsets = [0, 0], sizes = [8, 32], strides = [1, 1]} : vector<8x96xf32> to vector<8x32xf32>
    %510 = arith.mulf %509, %506 : vector<8x32xf32>
    %511 = arith.addf %508, %510 : vector<8x32xf32>
    %512 = vector.extract_strided_slice %504 {offsets = [0, 64], sizes = [8, 32], strides = [1, 1]} : vector<8x96xf32> to vector<8x32xf32>
    %513 = math.tanh %511 : vector<8x32xf32>
    %514 = arith.mulf %512, %513 : vector<8x32xf32>
    %515 = tpu.concatenate %498, %514 in 1 : vector<8x32xf32>, vector<8x32xf32> -> vector<8x64xf32>
    %c0_130 = arith.constant 0 : index
    %c0_131 = arith.constant 0 : index
    %516 = vector.load %arg9[%c0_130, %c0_131] : memref<64x256xf32, #tpu.memory_space<vmem>>, vector<64x256xf32>
    %cst_132 = arith.constant dense<0.000000e+00> : vector<8x256xf32>
    %517 = tpu.matmul %515, %516, %cst_132 {dimension_numbers = #tpu.dot_dimension_numbers<[1], [0], [0], [1], [0, 0, 1, 1], [], []>} : vector<8x64xf32>, vector<64x256xf32>, vector<8x256xf32> -> vector<8x256xf32>
    %c24_133 = arith.constant 24 : index
    %c0_134 = arith.constant 0 : index
    %518 = vector.load %arg16[%c24_133, %c0_134] : memref<64x256xf32, #tpu.memory_space<vmem>>, vector<8x128xf32>
    %519 = vector.extract_strided_slice %517 {offsets = [0, 0], sizes = [8, 128], strides = [1, 1]} : vector<8x256xf32> to vector<8x128xf32>
    %520 = arith.addf %518, %519 : vector<8x128xf32>
    %c32_135 = arith.constant 32 : index
    %c128_136 = arith.constant 128 : index
    %521 = vector.load %arg16[%c32_135, %c128_136] : memref<64x256xf32, #tpu.memory_space<vmem>>, vector<8x128xf32>
    %522 = vector.extract_strided_slice %517 {offsets = [0, 128], sizes = [8, 128], strides = [1, 1]} : vector<8x256xf32> to vector<8x128xf32>
    %523 = arith.addf %521, %522 : vector<8x128xf32>
    %524 = vector.extract_strided_slice %520 {offsets = [0, 0], sizes = [8, 96], strides = [1, 1]} : vector<8x128xf32> to vector<8x96xf32>
    %525 = arith.negf %524 : vector<8x96xf32>
    %526 = math.exp %525 : vector<8x96xf32>
    %cst_137 = arith.constant 1.000000e+00 : f32
    %527 = vector.broadcast %cst_137 : f32 to vector<8x96xf32>
    %528 = arith.addf %527, %526 : vector<8x96xf32>
    %529 = arith.divf %527, %528 : vector<8x96xf32>
    %530 = vector.extract_strided_slice %520 {offsets = [0, 96], sizes = [8, 32], strides = [1, 1]} : vector<8x128xf32> to vector<8x32xf32>
    %531 = math.tanh %530 : vector<8x32xf32>
    %532 = vector.extract_strided_slice %529 {offsets = [0, 32], sizes = [8, 32], strides = [1, 1]} : vector<8x96xf32> to vector<8x32xf32>
    %533 = arith.mulf %532, %495 : vector<8x32xf32>
    %534 = vector.extract_strided_slice %529 {offsets = [0, 0], sizes = [8, 32], strides = [1, 1]} : vector<8x96xf32> to vector<8x32xf32>
    %535 = arith.mulf %534, %531 : vector<8x32xf32>
    %536 = arith.addf %533, %535 : vector<8x32xf32>
    %537 = vector.extract_strided_slice %529 {offsets = [0, 64], sizes = [8, 32], strides = [1, 1]} : vector<8x96xf32> to vector<8x32xf32>
    %538 = math.tanh %536 : vector<8x32xf32>
    %539 = arith.mulf %537, %538 : vector<8x32xf32>
    %540 = vector.extract_strided_slice %523 {offsets = [0, 0], sizes = [8, 96], strides = [1, 1]} : vector<8x128xf32> to vector<8x96xf32>
    %541 = arith.negf %540 : vector<8x96xf32>
    %542 = math.exp %541 : vector<8x96xf32>
    %cst_138 = arith.constant 1.000000e+00 : f32
    %543 = vector.broadcast %cst_138 : f32 to vector<8x96xf32>
    %544 = arith.addf %543, %542 : vector<8x96xf32>
    %545 = arith.divf %543, %544 : vector<8x96xf32>
    %546 = vector.extract_strided_slice %523 {offsets = [0, 96], sizes = [8, 32], strides = [1, 1]} : vector<8x128xf32> to vector<8x32xf32>
    %547 = math.tanh %546 : vector<8x32xf32>
    %548 = vector.extract_strided_slice %545 {offsets = [0, 32], sizes = [8, 32], strides = [1, 1]} : vector<8x96xf32> to vector<8x32xf32>
    %549 = arith.mulf %548, %511 : vector<8x32xf32>
    %550 = vector.extract_strided_slice %545 {offsets = [0, 0], sizes = [8, 32], strides = [1, 1]} : vector<8x96xf32> to vector<8x32xf32>
    %551 = arith.mulf %550, %547 : vector<8x32xf32>
    %552 = arith.addf %549, %551 : vector<8x32xf32>
    %553 = vector.extract_strided_slice %545 {offsets = [0, 64], sizes = [8, 32], strides = [1, 1]} : vector<8x96xf32> to vector<8x32xf32>
    %554 = math.tanh %552 : vector<8x32xf32>
    %555 = arith.mulf %553, %554 : vector<8x32xf32>
    %556 = tpu.concatenate %539, %555 in 1 : vector<8x32xf32>, vector<8x32xf32> -> vector<8x64xf32>
    %c0_139 = arith.constant 0 : index
    %c0_140 = arith.constant 0 : index
    %557 = vector.load %arg9[%c0_139, %c0_140] : memref<64x256xf32, #tpu.memory_space<vmem>>, vector<64x256xf32>
    %cst_141 = arith.constant dense<0.000000e+00> : vector<8x256xf32>
    %558 = tpu.matmul %556, %557, %cst_141 {dimension_numbers = #tpu.dot_dimension_numbers<[1], [0], [0], [1], [0, 0, 1, 1], [], []>} : vector<8x64xf32>, vector<64x256xf32>, vector<8x256xf32> -> vector<8x256xf32>
    %c32_142 = arith.constant 32 : index
    %c0_143 = arith.constant 0 : index
    %559 = vector.load %arg16[%c32_142, %c0_143] : memref<64x256xf32, #tpu.memory_space<vmem>>, vector<8x128xf32>
    %560 = vector.extract_strided_slice %558 {offsets = [0, 0], sizes = [8, 128], strides = [1, 1]} : vector<8x256xf32> to vector<8x128xf32>
    %561 = arith.addf %559, %560 : vector<8x128xf32>
    %c24_144 = arith.constant 24 : index
    %c128_145 = arith.constant 128 : index
    %562 = vector.load %arg16[%c24_144, %c128_145] : memref<64x256xf32, #tpu.memory_space<vmem>>, vector<8x128xf32>
    %563 = vector.extract_strided_slice %558 {offsets = [0, 128], sizes = [8, 128], strides = [1, 1]} : vector<8x256xf32> to vector<8x128xf32>
    %564 = arith.addf %562, %563 : vector<8x128xf32>
    %565 = vector.extract_strided_slice %561 {offsets = [0, 0], sizes = [8, 96], strides = [1, 1]} : vector<8x128xf32> to vector<8x96xf32>
    %566 = arith.negf %565 : vector<8x96xf32>
    %567 = math.exp %566 : vector<8x96xf32>
    %cst_146 = arith.constant 1.000000e+00 : f32
    %568 = vector.broadcast %cst_146 : f32 to vector<8x96xf32>
    %569 = arith.addf %568, %567 : vector<8x96xf32>
    %570 = arith.divf %568, %569 : vector<8x96xf32>
    %571 = vector.extract_strided_slice %561 {offsets = [0, 96], sizes = [8, 32], strides = [1, 1]} : vector<8x128xf32> to vector<8x32xf32>
    %572 = math.tanh %571 : vector<8x32xf32>
    %573 = vector.extract_strided_slice %570 {offsets = [0, 32], sizes = [8, 32], strides = [1, 1]} : vector<8x96xf32> to vector<8x32xf32>
    %574 = arith.mulf %573, %536 : vector<8x32xf32>
    %575 = vector.extract_strided_slice %570 {offsets = [0, 0], sizes = [8, 32], strides = [1, 1]} : vector<8x96xf32> to vector<8x32xf32>
    %576 = arith.mulf %575, %572 : vector<8x32xf32>
    %577 = arith.addf %574, %576 : vector<8x32xf32>
    %578 = vector.extract_strided_slice %570 {offsets = [0, 64], sizes = [8, 32], strides = [1, 1]} : vector<8x96xf32> to vector<8x32xf32>
    %579 = math.tanh %577 : vector<8x32xf32>
    %580 = arith.mulf %578, %579 : vector<8x32xf32>
    %581 = vector.extract_strided_slice %564 {offsets = [0, 0], sizes = [8, 96], strides = [1, 1]} : vector<8x128xf32> to vector<8x96xf32>
    %582 = arith.negf %581 : vector<8x96xf32>
    %583 = math.exp %582 : vector<8x96xf32>
    %cst_147 = arith.constant 1.000000e+00 : f32
    %584 = vector.broadcast %cst_147 : f32 to vector<8x96xf32>
    %585 = arith.addf %584, %583 : vector<8x96xf32>
    %586 = arith.divf %584, %585 : vector<8x96xf32>
    %587 = vector.extract_strided_slice %564 {offsets = [0, 96], sizes = [8, 32], strides = [1, 1]} : vector<8x128xf32> to vector<8x32xf32>
    %588 = math.tanh %587 : vector<8x32xf32>
    %589 = vector.extract_strided_slice %586 {offsets = [0, 32], sizes = [8, 32], strides = [1, 1]} : vector<8x96xf32> to vector<8x32xf32>
    %590 = arith.mulf %589, %552 : vector<8x32xf32>
    %591 = vector.extract_strided_slice %586 {offsets = [0, 0], sizes = [8, 32], strides = [1, 1]} : vector<8x96xf32> to vector<8x32xf32>
    %592 = arith.mulf %591, %588 : vector<8x32xf32>
    %593 = arith.addf %590, %592 : vector<8x32xf32>
    %594 = vector.extract_strided_slice %586 {offsets = [0, 64], sizes = [8, 32], strides = [1, 1]} : vector<8x96xf32> to vector<8x32xf32>
    %595 = math.tanh %593 : vector<8x32xf32>
    %596 = arith.mulf %594, %595 : vector<8x32xf32>
    %597 = tpu.concatenate %580, %596 in 1 : vector<8x32xf32>, vector<8x32xf32> -> vector<8x64xf32>
    %c0_148 = arith.constant 0 : index
    %c0_149 = arith.constant 0 : index
    %598 = vector.load %arg9[%c0_148, %c0_149] : memref<64x256xf32, #tpu.memory_space<vmem>>, vector<64x256xf32>
    %cst_150 = arith.constant dense<0.000000e+00> : vector<8x256xf32>
    %599 = tpu.matmul %597, %598, %cst_150 {dimension_numbers = #tpu.dot_dimension_numbers<[1], [0], [0], [1], [0, 0, 1, 1], [], []>} : vector<8x64xf32>, vector<64x256xf32>, vector<8x256xf32> -> vector<8x256xf32>
    %c40_151 = arith.constant 40 : index
    %c0_152 = arith.constant 0 : index
    %600 = vector.load %arg16[%c40_151, %c0_152] : memref<64x256xf32, #tpu.memory_space<vmem>>, vector<8x128xf32>
    %601 = vector.extract_strided_slice %599 {offsets = [0, 0], sizes = [8, 128], strides = [1, 1]} : vector<8x256xf32> to vector<8x128xf32>
    %602 = arith.addf %600, %601 : vector<8x128xf32>
    %c16_153 = arith.constant 16 : index
    %c128_154 = arith.constant 128 : index
    %603 = vector.load %arg16[%c16_153, %c128_154] : memref<64x256xf32, #tpu.memory_space<vmem>>, vector<8x128xf32>
    %604 = vector.extract_strided_slice %599 {offsets = [0, 128], sizes = [8, 128], strides = [1, 1]} : vector<8x256xf32> to vector<8x128xf32>
    %605 = arith.addf %603, %604 : vector<8x128xf32>
    %606 = vector.extract_strided_slice %602 {offsets = [0, 0], sizes = [8, 96], strides = [1, 1]} : vector<8x128xf32> to vector<8x96xf32>
    %607 = arith.negf %606 : vector<8x96xf32>
    %608 = math.exp %607 : vector<8x96xf32>
    %cst_155 = arith.constant 1.000000e+00 : f32
    %609 = vector.broadcast %cst_155 : f32 to vector<8x96xf32>
    %610 = arith.addf %609, %608 : vector<8x96xf32>
    %611 = arith.divf %609, %610 : vector<8x96xf32>
    %612 = vector.extract_strided_slice %602 {offsets = [0, 96], sizes = [8, 32], strides = [1, 1]} : vector<8x128xf32> to vector<8x32xf32>
    %613 = math.tanh %612 : vector<8x32xf32>
    %614 = vector.extract_strided_slice %611 {offsets = [0, 32], sizes = [8, 32], strides = [1, 1]} : vector<8x96xf32> to vector<8x32xf32>
    %615 = arith.mulf %614, %577 : vector<8x32xf32>
    %616 = vector.extract_strided_slice %611 {offsets = [0, 0], sizes = [8, 32], strides = [1, 1]} : vector<8x96xf32> to vector<8x32xf32>
    %617 = arith.mulf %616, %613 : vector<8x32xf32>
    %618 = arith.addf %615, %617 : vector<8x32xf32>
    %619 = vector.extract_strided_slice %611 {offsets = [0, 64], sizes = [8, 32], strides = [1, 1]} : vector<8x96xf32> to vector<8x32xf32>
    %620 = math.tanh %618 : vector<8x32xf32>
    %621 = arith.mulf %619, %620 : vector<8x32xf32>
    %622 = vector.extract_strided_slice %605 {offsets = [0, 0], sizes = [8, 96], strides = [1, 1]} : vector<8x128xf32> to vector<8x96xf32>
    %623 = arith.negf %622 : vector<8x96xf32>
    %624 = math.exp %623 : vector<8x96xf32>
    %cst_156 = arith.constant 1.000000e+00 : f32
    %625 = vector.broadcast %cst_156 : f32 to vector<8x96xf32>
    %626 = arith.addf %625, %624 : vector<8x96xf32>
    %627 = arith.divf %625, %626 : vector<8x96xf32>
    %628 = vector.extract_strided_slice %605 {offsets = [0, 96], sizes = [8, 32], strides = [1, 1]} : vector<8x128xf32> to vector<8x32xf32>
    %629 = math.tanh %628 : vector<8x32xf32>
    %630 = vector.extract_strided_slice %627 {offsets = [0, 32], sizes = [8, 32], strides = [1, 1]} : vector<8x96xf32> to vector<8x32xf32>
    %631 = arith.mulf %630, %593 : vector<8x32xf32>
    %632 = vector.extract_strided_slice %627 {offsets = [0, 0], sizes = [8, 32], strides = [1, 1]} : vector<8x96xf32> to vector<8x32xf32>
    %633 = arith.mulf %632, %629 : vector<8x32xf32>
    %634 = arith.addf %631, %633 : vector<8x32xf32>
    %635 = vector.extract_strided_slice %627 {offsets = [0, 64], sizes = [8, 32], strides = [1, 1]} : vector<8x96xf32> to vector<8x32xf32>
    %636 = math.tanh %634 : vector<8x32xf32>
    %637 = arith.mulf %635, %636 : vector<8x32xf32>
    %638 = tpu.concatenate %621, %637 in 1 : vector<8x32xf32>, vector<8x32xf32> -> vector<8x64xf32>
    %c0_157 = arith.constant 0 : index
    %c0_158 = arith.constant 0 : index
    %639 = vector.load %arg9[%c0_157, %c0_158] : memref<64x256xf32, #tpu.memory_space<vmem>>, vector<64x256xf32>
    %cst_159 = arith.constant dense<0.000000e+00> : vector<8x256xf32>
    %640 = tpu.matmul %638, %639, %cst_159 {dimension_numbers = #tpu.dot_dimension_numbers<[1], [0], [0], [1], [0, 0, 1, 1], [], []>} : vector<8x64xf32>, vector<64x256xf32>, vector<8x256xf32> -> vector<8x256xf32>
    %c48_160 = arith.constant 48 : index
    %c0_161 = arith.constant 0 : index
    %641 = vector.load %arg16[%c48_160, %c0_161] : memref<64x256xf32, #tpu.memory_space<vmem>>, vector<8x128xf32>
    %642 = vector.extract_strided_slice %640 {offsets = [0, 0], sizes = [8, 128], strides = [1, 1]} : vector<8x256xf32> to vector<8x128xf32>
    %643 = arith.addf %641, %642 : vector<8x128xf32>
    %c8_162 = arith.constant 8 : index
    %c128_163 = arith.constant 128 : index
    %644 = vector.load %arg16[%c8_162, %c128_163] : memref<64x256xf32, #tpu.memory_space<vmem>>, vector<8x128xf32>
    %645 = vector.extract_strided_slice %640 {offsets = [0, 128], sizes = [8, 128], strides = [1, 1]} : vector<8x256xf32> to vector<8x128xf32>
    %646 = arith.addf %644, %645 : vector<8x128xf32>
    %647 = vector.extract_strided_slice %643 {offsets = [0, 0], sizes = [8, 96], strides = [1, 1]} : vector<8x128xf32> to vector<8x96xf32>
    %648 = arith.negf %647 : vector<8x96xf32>
    %649 = math.exp %648 : vector<8x96xf32>
    %cst_164 = arith.constant 1.000000e+00 : f32
    %650 = vector.broadcast %cst_164 : f32 to vector<8x96xf32>
    %651 = arith.addf %650, %649 : vector<8x96xf32>
    %652 = arith.divf %650, %651 : vector<8x96xf32>
    %653 = vector.extract_strided_slice %643 {offsets = [0, 96], sizes = [8, 32], strides = [1, 1]} : vector<8x128xf32> to vector<8x32xf32>
    %654 = math.tanh %653 : vector<8x32xf32>
    %655 = vector.extract_strided_slice %652 {offsets = [0, 32], sizes = [8, 32], strides = [1, 1]} : vector<8x96xf32> to vector<8x32xf32>
    %656 = arith.mulf %655, %618 : vector<8x32xf32>
    %657 = vector.extract_strided_slice %652 {offsets = [0, 0], sizes = [8, 32], strides = [1, 1]} : vector<8x96xf32> to vector<8x32xf32>
    %658 = arith.mulf %657, %654 : vector<8x32xf32>
    %659 = arith.addf %656, %658 : vector<8x32xf32>
    %660 = vector.extract_strided_slice %652 {offsets = [0, 64], sizes = [8, 32], strides = [1, 1]} : vector<8x96xf32> to vector<8x32xf32>
    %661 = math.tanh %659 : vector<8x32xf32>
    %662 = arith.mulf %660, %661 : vector<8x32xf32>
    %663 = vector.extract_strided_slice %646 {offsets = [0, 0], sizes = [8, 96], strides = [1, 1]} : vector<8x128xf32> to vector<8x96xf32>
    %664 = arith.negf %663 : vector<8x96xf32>
    %665 = math.exp %664 : vector<8x96xf32>
    %cst_165 = arith.constant 1.000000e+00 : f32
    %666 = vector.broadcast %cst_165 : f32 to vector<8x96xf32>
    %667 = arith.addf %666, %665 : vector<8x96xf32>
    %668 = arith.divf %666, %667 : vector<8x96xf32>
    %669 = vector.extract_strided_slice %646 {offsets = [0, 96], sizes = [8, 32], strides = [1, 1]} : vector<8x128xf32> to vector<8x32xf32>
    %670 = math.tanh %669 : vector<8x32xf32>
    %671 = vector.extract_strided_slice %668 {offsets = [0, 32], sizes = [8, 32], strides = [1, 1]} : vector<8x96xf32> to vector<8x32xf32>
    %672 = arith.mulf %671, %634 : vector<8x32xf32>
    %673 = vector.extract_strided_slice %668 {offsets = [0, 0], sizes = [8, 32], strides = [1, 1]} : vector<8x96xf32> to vector<8x32xf32>
    %674 = arith.mulf %673, %670 : vector<8x32xf32>
    %675 = arith.addf %672, %674 : vector<8x32xf32>
    %676 = vector.extract_strided_slice %668 {offsets = [0, 64], sizes = [8, 32], strides = [1, 1]} : vector<8x96xf32> to vector<8x32xf32>
    %677 = math.tanh %675 : vector<8x32xf32>
    %678 = arith.mulf %676, %677 : vector<8x32xf32>
    %679 = tpu.concatenate %662, %678 in 1 : vector<8x32xf32>, vector<8x32xf32> -> vector<8x64xf32>
    %c0_166 = arith.constant 0 : index
    %c0_167 = arith.constant 0 : index
    %680 = vector.load %arg9[%c0_166, %c0_167] : memref<64x256xf32, #tpu.memory_space<vmem>>, vector<64x256xf32>
    %cst_168 = arith.constant dense<0.000000e+00> : vector<8x256xf32>
    %681 = tpu.matmul %679, %680, %cst_168 {dimension_numbers = #tpu.dot_dimension_numbers<[1], [0], [0], [1], [0, 0, 1, 1], [], []>} : vector<8x64xf32>, vector<64x256xf32>, vector<8x256xf32> -> vector<8x256xf32>
    %c56_169 = arith.constant 56 : index
    %c0_170 = arith.constant 0 : index
    %682 = vector.load %arg16[%c56_169, %c0_170] : memref<64x256xf32, #tpu.memory_space<vmem>>, vector<8x128xf32>
    %683 = vector.extract_strided_slice %681 {offsets = [0, 0], sizes = [8, 128], strides = [1, 1]} : vector<8x256xf32> to vector<8x128xf32>
    %684 = arith.addf %682, %683 : vector<8x128xf32>
    %c0_171 = arith.constant 0 : index
    %c128_172 = arith.constant 128 : index
    %685 = vector.load %arg16[%c0_171, %c128_172] : memref<64x256xf32, #tpu.memory_space<vmem>>, vector<8x128xf32>
    %686 = vector.extract_strided_slice %681 {offsets = [0, 128], sizes = [8, 128], strides = [1, 1]} : vector<8x256xf32> to vector<8x128xf32>
    %687 = arith.addf %685, %686 : vector<8x128xf32>
    %688 = vector.extract_strided_slice %684 {offsets = [0, 0], sizes = [8, 96], strides = [1, 1]} : vector<8x128xf32> to vector<8x96xf32>
    %689 = arith.negf %688 : vector<8x96xf32>
    %690 = math.exp %689 : vector<8x96xf32>
    %cst_173 = arith.constant 1.000000e+00 : f32
    %691 = vector.broadcast %cst_173 : f32 to vector<8x96xf32>
    %692 = arith.addf %691, %690 : vector<8x96xf32>
    %693 = arith.divf %691, %692 : vector<8x96xf32>
    %694 = vector.extract_strided_slice %684 {offsets = [0, 96], sizes = [8, 32], strides = [1, 1]} : vector<8x128xf32> to vector<8x32xf32>
    %695 = math.tanh %694 : vector<8x32xf32>
    %696 = vector.extract_strided_slice %693 {offsets = [0, 32], sizes = [8, 32], strides = [1, 1]} : vector<8x96xf32> to vector<8x32xf32>
    %697 = arith.mulf %696, %659 : vector<8x32xf32>
    %698 = vector.extract_strided_slice %693 {offsets = [0, 0], sizes = [8, 32], strides = [1, 1]} : vector<8x96xf32> to vector<8x32xf32>
    %699 = arith.mulf %698, %695 : vector<8x32xf32>
    %700 = arith.addf %697, %699 : vector<8x32xf32>
    %701 = vector.extract_strided_slice %693 {offsets = [0, 64], sizes = [8, 32], strides = [1, 1]} : vector<8x96xf32> to vector<8x32xf32>
    %702 = math.tanh %700 : vector<8x32xf32>
    %703 = arith.mulf %701, %702 : vector<8x32xf32>
    %704 = vector.extract_strided_slice %687 {offsets = [0, 0], sizes = [8, 96], strides = [1, 1]} : vector<8x128xf32> to vector<8x96xf32>
    %705 = arith.negf %704 : vector<8x96xf32>
    %706 = math.exp %705 : vector<8x96xf32>
    %cst_174 = arith.constant 1.000000e+00 : f32
    %707 = vector.broadcast %cst_174 : f32 to vector<8x96xf32>
    %708 = arith.addf %707, %706 : vector<8x96xf32>
    %709 = arith.divf %707, %708 : vector<8x96xf32>
    %710 = vector.extract_strided_slice %687 {offsets = [0, 96], sizes = [8, 32], strides = [1, 1]} : vector<8x128xf32> to vector<8x32xf32>
    %711 = math.tanh %710 : vector<8x32xf32>
    %712 = vector.extract_strided_slice %709 {offsets = [0, 32], sizes = [8, 32], strides = [1, 1]} : vector<8x96xf32> to vector<8x32xf32>
    %713 = arith.mulf %712, %675 : vector<8x32xf32>
    %714 = vector.extract_strided_slice %709 {offsets = [0, 0], sizes = [8, 32], strides = [1, 1]} : vector<8x96xf32> to vector<8x32xf32>
    %715 = arith.mulf %714, %711 : vector<8x32xf32>
    %716 = arith.addf %713, %715 : vector<8x32xf32>
    %717 = vector.extract_strided_slice %709 {offsets = [0, 64], sizes = [8, 32], strides = [1, 1]} : vector<8x96xf32> to vector<8x32xf32>
    %718 = math.tanh %716 : vector<8x32xf32>
    %719 = arith.mulf %717, %718 : vector<8x32xf32>
    %720 = tpu.concatenate %416, %719 in 1 : vector<8x32xf32>, vector<8x32xf32> -> vector<8x64xf32>
    %721 = tpu.concatenate %457, %678 in 1 : vector<8x32xf32>, vector<8x32xf32> -> vector<8x64xf32>
    %722 = tpu.concatenate %498, %637 in 1 : vector<8x32xf32>, vector<8x32xf32> -> vector<8x64xf32>
    %723 = tpu.concatenate %539, %596 in 1 : vector<8x32xf32>, vector<8x32xf32> -> vector<8x64xf32>
    %724 = tpu.concatenate %580, %555 in 1 : vector<8x32xf32>, vector<8x32xf32> -> vector<8x64xf32>
    %725 = tpu.concatenate %621, %514 in 1 : vector<8x32xf32>, vector<8x32xf32> -> vector<8x64xf32>
    %726 = tpu.concatenate %662, %473 in 1 : vector<8x32xf32>, vector<8x32xf32> -> vector<8x64xf32>
    %727 = tpu.concatenate %703, %432 in 1 : vector<8x32xf32>, vector<8x32xf32> -> vector<8x64xf32>
    %728 = tpu.concatenate %720, %721, %722, %723, %724, %725, %726, %727 in 0 : vector<8x64xf32>, vector<8x64xf32>, vector<8x64xf32>, vector<8x64xf32>, vector<8x64xf32>, vector<8x64xf32>, vector<8x64xf32>, vector<8x64xf32> -> vector<64x64xf32>
    %cst_175 = arith.constant 0.000000e+00 : f32
    %729 = vector.broadcast %cst_175 : f32 to vector<64x64xf32>
    %730 = arith.cmpf ogt, %728, %729 : vector<64x64xf32>
    %cst_176 = arith.constant 0.00999999977 : f32
    %731 = vector.broadcast %cst_176 : f32 to vector<64x64xf32>
    %732 = arith.mulf %731, %728 : vector<64x64xf32>
    %733 = arith.select %730, %728, %732 : vector<64x64xi1>, vector<64x64xf32>
    %734 = vector.broadcast %0 : vector<64x1xf32> to vector<64x64xf32>
    %735 = arith.mulf %733, %734 : vector<64x64xf32>
    %cst_177 = arith.constant dense<0.000000e+00> : vector<64xf32>
    %736 = vector.multi_reduction <add>, %735, %cst_177 [0] : vector<64x64xf32> to vector<64xf32>
    %737 = vector.shape_cast %736 : vector<64xf32> to vector<1x64xf32>
    %738 = arith.mulf %733, %735 : vector<64x64xf32>
    %cst_178 = arith.constant dense<0.000000e+00> : vector<64xf32>
    %739 = vector.multi_reduction <add>, %738, %cst_178 [0] : vector<64x64xf32> to vector<64xf32>
    %740 = vector.shape_cast %739 : vector<64xf32> to vector<1x64xf32>
    %cst_179 = arith.constant 1.600000e+01 : f32
    %741 = vector.broadcast %cst_179 : f32 to vector<1x64xf32>
    %742 = arith.divf %737, %741 : vector<1x64xf32>
    %cst_180 = arith.constant 1.600000e+01 : f32
    %743 = vector.broadcast %cst_180 : f32 to vector<1x64xf32>
    %744 = arith.divf %740, %743 : vector<1x64xf32>
    %745 = arith.mulf %742, %742 : vector<1x64xf32>
    %746 = arith.subf %744, %745 : vector<1x64xf32>
    %747 = vector.broadcast %742 : vector<1x64xf32> to vector<64x64xf32>
    %748 = arith.subf %733, %747 : vector<64x64xf32>
    %cst_181 = arith.constant 9.99999974E-6 : f32
    %749 = vector.broadcast %cst_181 : f32 to vector<1x64xf32>
    %750 = arith.addf %746, %749 : vector<1x64xf32>
    %751 = math.rsqrt %750 : vector<1x64xf32>
    %752 = vector.broadcast %751 : vector<1x64xf32> to vector<64x64xf32>
    %753 = arith.mulf %748, %752 : vector<64x64xf32>
    %c0_182 = arith.constant 0 : index
    %c0_183 = arith.constant 0 : index
    %754 = vector.load %arg10[%c0_182, %c0_183] : memref<1x64xf32, #tpu.memory_space<vmem>>, vector<1x64xf32>
    %755 = vector.broadcast %754 : vector<1x64xf32> to vector<64x64xf32>
    %756 = arith.mulf %753, %755 : vector<64x64xf32>
    %c0_184 = arith.constant 0 : index
    %c0_185 = arith.constant 0 : index
    %757 = vector.load %arg11[%c0_184, %c0_185] : memref<1x64xf32, #tpu.memory_space<vmem>>, vector<1x64xf32>
    %758 = vector.broadcast %757 : vector<1x64xf32> to vector<64x64xf32>
    %759 = arith.addf %756, %758 : vector<64x64xf32>
    %760 = vector.extract_strided_slice %759 {offsets = [56, 0], sizes = [8, 64], strides = [1, 1]} : vector<64x64xf32> to vector<8x64xf32>
    %c0_186 = arith.constant 0 : index
    %c0_187 = arith.constant 0 : index
    %761 = vector.load %arg12[%c0_186, %c0_187] : memref<64x1xf32, #tpu.memory_space<vmem>>, vector<64x1xf32>
    %cst_188 = arith.constant dense<0.000000e+00> : vector<8x1xf32>
    %762 = tpu.matmul %760, %761, %cst_188 {dimension_numbers = #tpu.dot_dimension_numbers<[1], [0], [0], [1], [0, 0, 1, 1], [], []>} : vector<8x64xf32>, vector<64x1xf32>, vector<8x1xf32> -> vector<8x1xf32>
    %c0_189 = arith.constant 0 : index
    %c0_190 = arith.constant 0 : index
    %763 = vector.load %arg13[%c0_189, %c0_190] : memref<1x1xf32, #tpu.memory_space<vmem>>, vector<1x1xf32>
    %764 = vector.broadcast %763 : vector<1x1xf32> to vector<8x1xf32>
    %765 = arith.addf %762, %764 : vector<8x1xf32>
    %766 = arith.negf %765 : vector<8x1xf32>
    %767 = math.exp %766 : vector<8x1xf32>
    %cst_191 = arith.constant 1.000000e+00 : f32
    %768 = vector.broadcast %cst_191 : f32 to vector<8x1xf32>
    %769 = arith.addf %768, %767 : vector<8x1xf32>
    %770 = arith.divf %768, %769 : vector<8x1xf32>
    %c0_192 = arith.constant 0 : index
    %c0_193 = arith.constant 0 : index
    %771 = vector.load %arg14[%c0_192, %c0_193] : memref<8x1xf32, #tpu.memory_space<vmem>>, vector<8x1xf32>
    tpu.vector_store %arg14[%c0_192, %c0_193], %770 {strides = array<i32>} : memref<8x1xf32, #tpu.memory_space<vmem>>, vector<8x1xf32>,
    return
  }
}

</mosaic_0001>

<llo_original>
// kernel: _lambda_.1
$region0: #{_lambda_.1}
  #allocation0 [shape = 'u32[]', space=smem, size = 0x4, offset = 0x4, fixed_abs, tag = 'smem constant byte address 0x4 - core index']
  #allocation1 [shape = 'u32[144,128]{1,0:T(1,128)}', space=vmem, size = 0x12000, scoped, tag = 'internal scratch']
  #allocation2 [shape = 'f32[64,64]{1,0:T(8,128)}', space=vmem, size = 0x8000, scoped, tag = 'scratch operand']
  #allocation3 [shape = 'f32[64,256]{1,0:T(8,128)}', space=vmem, size = 0x10000, scoped, tag = 'scratch operand']
  #allocation4 [shape = 'f32[1,1]{1,0:T(1,128)S(1)}', space=vmem, size = 0x200, scoped, tag = 'scoped memory for _lambda_.1']
  %s0 = inlined_call_operand.vmem [shape: f32[64,4], index: 0, kind: input, shape index: {}]
  %s1 = inlined_call_operand.vmem [shape: f32[64,1], index: 1, kind: input, shape index: {}]
  %s2 = inlined_call_operand.vmem [shape: f32[4,256], index: 2, kind: input, shape index: {}]
  %s3 = inlined_call_operand.vmem [shape: f32[1,256], index: 3, kind: input, shape index: {}]
  %s4 = inlined_call_operand.hbm [shape: f32[64,256], index: 4, kind: input, shape index: {}]
  %s5 = inlined_call_operand.vmem [shape: f32[1,64], index: 5, kind: input, shape index: {}, may-alias: {5,10}]
  %s6 = inlined_call_operand.vmem [shape: f32[1,64], index: 6, kind: input, shape index: {}, may-alias: {6,11}]
  %s7 = inlined_call_operand.hbm [shape: f32[64,256], index: 7, kind: input, shape index: {}]
  %s8 = inlined_call_operand.vmem [shape: f32[1,256], index: 8, kind: input, shape index: {}]
  %s9 = inlined_call_operand.vmem [shape: f32[64,256], index: 9, kind: input, shape index: {}]
  %s10 = inlined_call_operand.vmem [shape: f32[1,64], index: 10, kind: input, shape index: {}, may-alias: {5,10}]
  %s11 = inlined_call_operand.vmem [shape: f32[1,64], index: 11, kind: input, shape index: {}, may-alias: {6,11}]
  %s12 = inlined_call_operand.hbm [shape: f32[64,1], index: 12, kind: input, shape index: {}]
  %s13 = inlined_call_operand.<no memory space> [shape: f32[1,1], index: 13, kind: input, shape index: {}]
  %s14 = inlined_call_operand.vmem [shape: f32[8,1], index: 14, kind: output, shape index: {}]
  %s15 = sld [smem:[#allocation0]]
  $region78: #{_lambda_.1} parent=0
    _
  %s17 = ssub.s32 1, %s15
  %s18 = scalar_select 0, %s17, %s15
  %v19 = vstv %s13
  %20 = vst [vmem:[#allocation4] sm:$0x1] %v19
  $region1: #{_lambda_.1} parent=0
    #allocation5 [shape = 'u8[65536]{0}', space=vmem, size = 0x10000, scoped, tag = 'input window, operand 4, single buffered']
    #allocation6 [shape = 's32[1]{0}', space=sflag, size = 0x4, scoped, tag = 'scoped memory for _lambda_.1']
    #allocation7 [shape = 'u8[65536]{0}', space=vmem, size = 0x10000, scoped, tag = 'input window, operand 7, single buffered']
    #allocation8 [shape = 's32[1]{0}', space=sflag, size = 0x4, scoped, tag = 'scoped memory for _lambda_.1']
    #allocation9 [shape = 'u8[32768]{0}', space=vmem, size = 0x8000, scoped, tag = 'input window, operand 12, single buffered']
    %21 = vsyncpa [#allocation6], 0
    %22 = vsyncpa [#allocation8], 0
    // Predicated region
    $region2: #{_lambda_.1} parent=1 // pred_check
      _
    $region3: #{_lambda_.1} parent=1 // pred_check_branch
      %24 = sbr.rel (0) target = $region5
    $region4: #{_lambda_.1} parent=1 // pred_region
      _
    $region5: #{_lambda_.1} parent=1 // pred_fallthru
      _
    // Predicated region
    $region6: #{_lambda_.1} parent=1 // pred_check
      _
    $region7: #{_lambda_.1} parent=1 // pred_check_branch
      %26 = sbr.rel (0) target = $region9
    $region8: #{_lambda_.1} parent=1 // pred_region
      _
    $region9: #{_lambda_.1} parent=1 // pred_fallthru
      _
    // Predicated region
    $region10: #{_lambda_.1} parent=1 // pred_check
      _
    $region11: #{_lambda_.1} parent=1 // pred_check_branch
      %28 = sbr.rel (0) target = $region13
    $region12: #{_lambda_.1} parent=1 // pred_region
      _
    $region13: #{_lambda_.1} parent=1 // pred_fallthru
      _
    // Predicated region
    $region14: #{_lambda_.1} parent=1 // pred_check
      _
    $region15: #{_lambda_.1} parent=1 // pred_check_branch
      %30 = sbr.rel (0) target = $region17
    $region16: #{_lambda_.1} parent=1 // pred_region
      _
    $region17: #{_lambda_.1} parent=1 // pred_fallthru
      _
    // Predicated region
    $region18: #{_lambda_.1} parent=1 // pred_check
      _
    $region19: #{_lambda_.1} parent=1 // pred_check_branch
      %32 = sbr.rel (0) target = $region21
    $region20: #{_lambda_.1} parent=1 // pred_region
      %s34 = ssub.s32 2048, 2048
      %35 = vsyncadd [#allocation6], %s34
      %s36 = sshll.u32 [#allocation5], 4
      %s37 = int_to_ptr.vmem [resolvable:$true] %s36
      %42 = dma.hbm_to_vmem [thread:$0]  %s4, 2048, %s37, [#allocation6], 256, 256, 16
    $region21: #{_lambda_.1} parent=1 // pred_fallthru
      _
    // Predicated region
    $region22: #{_lambda_.1} parent=1 // pred_check
      _
    $region23: #{_lambda_.1} parent=1 // pred_check_branch
      %44 = sbr.rel (0) target = $region25
    $region24: #{_lambda_.1} parent=1 // pred_region
      _
    $region25: #{_lambda_.1} parent=1 // pred_fallthru
      _
    // Predicated region
    $region26: #{_lambda_.1} parent=1 // pred_check
      _
    $region27: #{_lambda_.1} parent=1 // pred_check_branch
      %46 = sbr.rel (0) target = $region29
    $region28: #{_lambda_.1} parent=1 // pred_region
      _
    $region29: #{_lambda_.1} parent=1 // pred_fallthru
      _
    // Predicated region
    $region30: #{_lambda_.1} parent=1 // pred_check
      _
    $region31: #{_lambda_.1} parent=1 // pred_check_branch
      %48 = sbr.rel (0) target = $region33
    $region32: #{_lambda_.1} parent=1 // pred_region
      %s50 = ssub.s32 2048, 2048
      %51 = vsyncadd [#allocation8], %s50
      %s52 = sshll.u32 [#allocation7], 4
      %s53 = int_to_ptr.vmem [resolvable:$true] %s52
      %58 = dma.hbm_to_vmem [thread:$0]  %s7, 2048, %s53, [#allocation8], 256, 256, 16
    $region33: #{_lambda_.1} parent=1 // pred_fallthru
      _
    // Predicated region
    $region34: #{_lambda_.1} parent=1 // pred_check
      _
    $region35: #{_lambda_.1} parent=1 // pred_check_branch
      %60 = sbr.rel (0) target = $region37
    $region36: #{_lambda_.1} parent=1 // pred_region
      _
    $region37: #{_lambda_.1} parent=1 // pred_fallthru
      _
    // Predicated region
    $region38: #{_lambda_.1} parent=1 // pred_check
      _
    $region39: #{_lambda_.1} parent=1 // pred_check_branch
      %62 = sbr.rel (0) target = $region41
    $region40: #{_lambda_.1} parent=1 // pred_region
      _
    $region41: #{_lambda_.1} parent=1 // pred_fallthru
      _
    // Predicated region
    $region42: #{_lambda_.1} parent=1 // pred_check
      _
    $region43: #{_lambda_.1} parent=1 // pred_check_branch
      %64 = sbr.rel (0) target = $region45
    $region44: #{_lambda_.1} parent=1 // pred_region
      _
    $region45: #{_lambda_.1} parent=1 // pred_fallthru
      _
    // Predicated region
    $region46: #{_lambda_.1} parent=1 // pred_check
      _
    $region47: #{_lambda_.1} parent=1 // pred_check_branch
      %66 = sbr.rel (0) target = $region49
    $region48: #{_lambda_.1} parent=1 // pred_region
      _
    $region49: #{_lambda_.1} parent=1 // pred_fallthru
      _
    // Predicated region
    $region50: #{_lambda_.1} parent=1 // pred_check
      _
    $region51: #{_lambda_.1} parent=1 // pred_check_branch
      %68 = sbr.rel (0) target = $region53
    $region52: #{_lambda_.1} parent=1 // pred_region
      %s70 = ssub.s32 1024, 1024
      %71 = vsyncadd [#allocation8], %s70
      %s72 = sshll.u32 [#allocation9], 4
      %s73 = int_to_ptr.vmem [resolvable:$true] %s72
      %78 = dma.hbm_to_vmem [thread:$0]  %s12, 1024, %s73, [#allocation8], 128, 128, 8
    $region53: #{_lambda_.1} parent=1 // pred_fallthru
      _
    // Predicated region
    $region54: #{_lambda_.1} parent=1 // pred_check
      _
    $region55: #{_lambda_.1} parent=1 // pred_check_branch
      %80 = sbr.rel (0) target = $region57
    $region56: #{_lambda_.1} parent=1 // pred_region
      _
    $region57: #{_lambda_.1} parent=1 // pred_fallthru
      _
    // Predicated region
    $region58: #{_lambda_.1} parent=1 // pred_check
      _
    $region59: #{_lambda_.1} parent=1 // pred_check_branch
      %82 = sbr.rel (0) target = $region61
    $region60: #{_lambda_.1} parent=1 // pred_region
      %83 = dma.done [#allocation6], 2048
    $region61: #{_lambda_.1} parent=1 // pred_fallthru
      _
    // Predicated region
    $region62: #{_lambda_.1} parent=1 // pred_check
      _
    $region63: #{_lambda_.1} parent=1 // pred_check_branch
      %85 = sbr.rel (0) target = $region65
    $region64: #{_lambda_.1} parent=1 // pred_region
      %86 = dma.done [#allocation8], 2048
    $region65: #{_lambda_.1} parent=1 // pred_fallthru
      _
    // Predicated region
    $region66: #{_lambda_.1} parent=1 // pred_check
      _
    $region67: #{_lambda_.1} parent=1 // pred_check_branch
      %88 = sbr.rel (0) target = $region69
    $region68: #{_lambda_.1} parent=1 // pred_region
      %89 = dma.done [#allocation8], 1024
    $region69: #{_lambda_.1} parent=1 // pred_fallthru
      _
    %v90 = vld [vmem:[%s1] sm:$0xff]
    %v91 = vld [vmem:[%s1 + $0x8] sm:$0xff]
    %v92 = vld [vmem:[%s1 + $0x10] sm:$0xff]
    %v93 = vld [vmem:[%s1 + $0x18] sm:$0xff]
    %v94 = vld [vmem:[%s1 + $0x20] sm:$0xff]
    %v95 = vld [vmem:[%s1 + $0x28] sm:$0xff]
    %v96 = vld [vmem:[%s1 + $0x30] sm:$0xff]
    %v97 = vld [vmem:[%s1 + $0x38] sm:$0xff]
    %v98 = vld [vmem:[%s0] sm:$0xff]
    %v99 = vld [vmem:[%s0 + $0x8] sm:$0xff]
    %v100 = vld [vmem:[%s0 + $0x10] sm:$0xff]
    %v101 = vld [vmem:[%s0 + $0x18] sm:$0xff]
    %v102 = vld [vmem:[%s0 + $0x20] sm:$0xff]
    %v103 = vld [vmem:[%s0 + $0x28] sm:$0xff]
    %v104 = vld [vmem:[%s0 + $0x30] sm:$0xff]
    %v105 = vld [vmem:[%s0 + $0x38] sm:$0xff]
    %v106 = vld [vmem:[%s2] sm:$0xff]
    %v107 = vld [vmem:[%s3] sm:$0x3]
    %v109 = vlaneseq
    %v110 = vshrl.u32 %v109, 7
    %v111 = vsub.s32 0, %v110
    %v112 = vrot.slane %v107, %v111
    %v113 = vlaneseq
    %v114 = vshrl.u32 %v113, 7
    %v115 = vsub.s32 1, %v114
    %v116 = vrot.slane %v107, %v115
    %v120 = vcombine.high %v106, %v106
    %vm121 = vcmask 31744
    %v123 = vsel %vm121, %v98, 0
    %v126 = vsel %vm121, %v99, 0
    %v129 = vsel %vm121, %v100, 0
    %v132 = vsel %vm121, %v101, 0
    %v135 = vsel %vm121, %v102, 0
    %v138 = vsel %vm121, %v103, 0
    %v141 = vsel %vm121, %v104, 0
    %v144 = vsel %vm121, %v105, 0
    %vm146 = vcmask 1043456
    %v147 = vsel %vm146, %v106, 0
    %v149 = vsel %vm146, %v120, 0
    %151 = vmatprep.subr.mxu0 0.0
    %152 = vmatpush1.msra.mxu0 0.0
    %153 = vmatprep.subr.mxu0 0.0
    %154 = vmatpush1.msra.mxu0 0.0
    %155 = vmatprep.subr.mxu0 0.0
    %156 = vmatpush1.msra.mxu0 0.0
    %157 = vmatprep.subr.mxu0 0.0
    %158 = vmatpush1.msra.mxu0 0.0
    %159 = vmatprep.subr.mxu0 0.0
    %160 = vmatpush1.msra.mxu0 0.0
    %161 = vmatprep.subr.mxu0 0.0
    %162 = vmatpush1.msra.mxu0 0.0
    %163 = vmatprep.subr.mxu0 0.0
    %164 = vmatpush1.msra.mxu0 0.0
    %165 = vmatprep.subr.mxu0 0.0
    %166 = vmatpush1.msra.mxu0 0.0
    %167 = vmatprep.subr.mxu0 0.0
    %168 = vmatpush1.msra.mxu0 0.0
    %169 = vmatprep.subr.mxu0 0.0
    %170 = vmatpush1.msra.mxu0 0.0
    %171 = vmatprep.subr.mxu0 0.0
    %172 = vmatpush1.msra.mxu0 0.0
    %173 = vmatprep.subr.mxu0 0.0
    %174 = vmatpush1.msra.mxu0 0.0
    %175 = vmatprep.subr.mxu0 0.0
    %176 = vmatpush1.msra.mxu0 0.0
    %177 = vmatprep.subr.mxu0 0.0
    %178 = vmatpush1.msra.mxu0 0.0
    %179 = vmatprep.subr.mxu0 0.0
    %180 = vmatpush1.msra.mxu0 0.0
    %181 = vmatprep.subr.mxu0 %v149
    %182 = vmatpush1.msra.mxu0 %v147
    %183 = vmatprep.subr.mxu0 0.0
    %184 = vmatpush2.msra.mxu0 0.0
    %185 = vmatprep.subr.mxu0 0.0
    %186 = vmatpush2.msra.mxu0 0.0
    %187 = vmatprep.subr.mxu0 0.0
    %188 = vmatpush2.msra.mxu0 0.0
    %189 = vmatprep.subr.mxu0 0.0
    %190 = vmatpush2.msra.mxu0 0.0
    %191 = vmatprep.subr.mxu0 0.0
    %192 = vmatpush2.msra.mxu0 0.0
    %193 = vmatprep.subr.mxu0 0.0
    %194 = vmatpush2.msra.mxu0 0.0
    %195 = vmatprep.subr.mxu0 0.0
    %196 = vmatpush2.msra.mxu0 0.0
    %197 = vmatprep.subr.mxu0 0.0
    %198 = vmatpush2.msra.mxu0 0.0
    %199 = vmatprep.subr.mxu0 0.0
    %200 = vmatpush2.msra.mxu0 0.0
    %201 = vmatprep.subr.mxu0 0.0
    %202 = vmatpush2.msra.mxu0 0.0
    %203 = vmatprep.subr.mxu0 0.0
    %204 = vmatpush2.msra.mxu0 0.0
    %205 = vmatprep.subr.mxu0 0.0
    %206 = vmatpush2.msra.mxu0 0.0
    %207 = vmatprep.subr.mxu0 0.0
    %208 = vmatpush2.msra.mxu0 0.0
    %209 = vmatprep.subr.mxu0 0.0
    %210 = vmatpush2.msra.mxu0 0.0
    %211 = vmatprep.subr.mxu0 0.0
    %212 = vmatpush2.msra.mxu0 0.0
    %213 = vmatprep.subr.mxu0 0.0
    %214 = vmatpush2.msra.mxu0 0.0
    %215 = vmatprep.mubr.f32.mxu0 0.0
    %216 = vmatmul.mubr.f32.gmra.mxu0 %v123
    %v217 = vpop.f32.mrf.mxu0
    %v218 = vadd.f32 %v112, %v217
    %v219 = vpop.f32.mrf.mxu0
    %v220 = vadd.f32 %v116, %v219
    %221 = vmatprep.mubr.f32.mxu0 0.0
    %222 = vmatmul.mubr.f32.gmra.mxu0 %v126
    %v223 = vpop.f32.mrf.mxu0
    %v224 = vadd.f32 %v112, %v223
    %v225 = vpop.f32.mrf.mxu0
    %v226 = vadd.f32 %v116, %v225
    %227 = vmatprep.mubr.f32.mxu0 0.0
    %228 = vmatmul.mubr.f32.gmra.mxu0 %v129
    %v229 = vpop.f32.mrf.mxu0
    %v230 = vadd.f32 %v112, %v229
    %v231 = vpop.f32.mrf.mxu0
    %v232 = vadd.f32 %v116, %v231
    %233 = vmatprep.mubr.f32.mxu0 0.0
    %234 = vmatmul.mubr.f32.gmra.mxu0 %v132
    %v235 = vpop.f32.mrf.mxu0
    %v236 = vadd.f32 %v112, %v235
    %v237 = vpop.f32.mrf.mxu0
    %v238 = vadd.f32 %v116, %v237
    %239 = vmatprep.mubr.f32.mxu0 0.0
    %240 = vmatmul.mubr.f32.gmra.mxu0 %v135
    %v241 = vpop.f32.mrf.mxu0
    %v242 = vadd.f32 %v112, %v241
    %v243 = vpop.f32.mrf.mxu0
    %v244 = vadd.f32 %v116, %v243
    %245 = vmatprep.mubr.f32.mxu0 0.0
    %246 = vmatmul.mubr.f32.gmra.mxu0 %v138
    %v247 = vpop.f32.mrf.mxu0
    %v248 = vadd.f32 %v112, %v247
    %v249 = vpop.f32.mrf.mxu0
    %v250 = vadd.f32 %v116, %v249
    %251 = vmatprep.mubr.f32.mxu0 0.0
    %252 = vmatmul.mubr.f32.gmra.mxu0 %v141
    %v253 = vpop.f32.mrf.mxu0
    %v254 = vadd.f32 %v112, %v253
    %v255 = vpop.f32.mrf.mxu0
    %v256 = vadd.f32 %v116, %v255
    %257 = vmatprep.mubr.f32.mxu0 0.0
    %258 = vmatmul.mubr.f32.gmra.mxu0 %v144
    %v259 = vpop.f32.mrf.mxu0
    %v260 = vadd.f32 %v112, %v259
    %v261 = vpop.f32.mrf.mxu0
    %v262 = vadd.f32 %v116, %v261
    %263 = vdwg.mxu0
    %264 = vst [vmem:[#allocation3] sm:$0xff] %v218
    %265 = vst [vmem:[#allocation3 + $0x8] sm:$0xff] %v220
    %266 = vst [vmem:[#allocation3 + $0x10] sm:$0xff] %v224
    %267 = vst [vmem:[#allocation3 + $0x18] sm:$0xff] %v226
    %268 = vst [vmem:[#allocation3 + $0x20] sm:$0xff] %v230
    %269 = vst [vmem:[#allocation3 + $0x28] sm:$0xff] %v232
    %270 = vst [vmem:[#allocation3 + $0x30] sm:$0xff] %v236
    %271 = vst [vmem:[#allocation3 + $0x38] sm:$0xff] %v238
    %272 = vst [vmem:[#allocation3 + $0x40] sm:$0xff] %v242
    %273 = vst [vmem:[#allocation3 + $0x48] sm:$0xff] %v244
    %274 = vst [vmem:[#allocation3 + $0x50] sm:$0xff] %v248
    %275 = vst [vmem:[#allocation3 + $0x58] sm:$0xff] %v250
    %276 = vst [vmem:[#allocation3 + $0x60] sm:$0xff] %v254
    %277 = vst [vmem:[#allocation3 + $0x68] sm:$0xff] %v256
    %278 = vst [vmem:[#allocation3 + $0x70] sm:$0xff] %v260
    %279 = vst [vmem:[#allocation3 + $0x78] sm:$0xff] %v262
    %v280 = vld [vmem:[#allocation5] sm:$0xff]
    %v281 = vld [vmem:[#allocation5 + $0x8] sm:$0xff]
    %v282 = vld [vmem:[#allocation5 + $0x10] sm:$0xff]
    %v283 = vld [vmem:[#allocation5 + $0x18] sm:$0xff]
    %v284 = vld [vmem:[#allocation5 + $0x20] sm:$0xff]
    %v285 = vld [vmem:[#allocation5 + $0x28] sm:$0xff]
    %v286 = vld [vmem:[#allocation5 + $0x30] sm:$0xff]
    %v287 = vld [vmem:[#allocation5 + $0x38] sm:$0xff]
    %v288 = vld [vmem:[#allocation5 + $0x40] sm:$0xff]
    %v289 = vld [vmem:[#allocation5 + $0x48] sm:$0xff]
    %v290 = vld [vmem:[#allocation5 + $0x50] sm:$0xff]
    %v291 = vld [vmem:[#allocation5 + $0x58] sm:$0xff]
    %v292 = vld [vmem:[#allocation5 + $0x60] sm:$0xff]
    %v293 = vld [vmem:[#allocation5 + $0x68] sm:$0xff]
    %v294 = vld [vmem:[#allocation5 + $0x70] sm:$0xff]
    %v295 = vld [vmem:[#allocation5 + $0x78] sm:$0xff]
    %vm296 = vcmask 523264
    %v298 = vsel %vm296, 0.0, 0
    %300 = vmatprep.subr.mxu0 0.0
    %301 = vmatpush1.msra.mxu0 0.0
    %302 = vmatprep.subr.mxu0 0.0
    %303 = vmatpush1.msra.mxu0 0.0
    %304 = vmatprep.subr.mxu0 0.0
    %305 = vmatpush1.msra.mxu0 0.0
    %306 = vmatprep.subr.mxu0 0.0
    %307 = vmatpush1.msra.mxu0 0.0
    %308 = vmatprep.subr.mxu0 0.0
    %309 = vmatpush1.msra.mxu0 0.0
    %310 = vmatprep.subr.mxu0 0.0
    %311 = vmatpush1.msra.mxu0 0.0
    %312 = vmatprep.subr.mxu0 0.0
    %313 = vmatpush1.msra.mxu0 0.0
    %314 = vmatprep.subr.mxu0 0.0
    %315 = vmatpush1.msra.mxu0 0.0
    %316 = vmatprep.subr.mxu0 %v295
    %317 = vmatpush1.msra.mxu0 %v294
    %318 = vmatprep.subr.mxu0 %v293
    %319 = vmatpush1.msra.mxu0 %v292
    %320 = vmatprep.subr.mxu0 %v291
    %321 = vmatpush1.msra.mxu0 %v290
    %322 = vmatprep.subr.mxu0 %v289
    %323 = vmatpush1.msra.mxu0 %v288
    %324 = vmatprep.subr.mxu0 %v287
    %325 = vmatpush1.msra.mxu0 %v286
    %326 = vmatprep.subr.mxu0 %v285
    %327 = vmatpush1.msra.mxu0 %v284
    %328 = vmatprep.subr.mxu0 %v283
    %329 = vmatpush1.msra.mxu0 %v282
    %330 = vmatprep.subr.mxu0 %v281
    %331 = vmatpush1.msra.mxu0 %v280
    %332 = vmatprep.subr.mxu0 0.0
    %333 = vmatpush2.msra.mxu0 0.0
    %334 = vmatprep.subr.mxu0 0.0
    %335 = vmatpush2.msra.mxu0 0.0
    %336 = vmatprep.subr.mxu0 0.0
    %337 = vmatpush2.msra.mxu0 0.0
    %338 = vmatprep.subr.mxu0 0.0
    %339 = vmatpush2.msra.mxu0 0.0
    %340 = vmatprep.subr.mxu0 0.0
    %341 = vmatpush2.msra.mxu0 0.0
    %342 = vmatprep.subr.mxu0 0.0
    %343 = vmatpush2.msra.mxu0 0.0
    %344 = vmatprep.subr.mxu0 0.0
    %345 = vmatpush2.msra.mxu0 0.0
    %346 = vmatprep.subr.mxu0 0.0
    %347 = vmatpush2.msra.mxu0 0.0
    %348 = vmatprep.subr.mxu0 0.0
    %349 = vmatpush2.msra.mxu0 0.0
    %350 = vmatprep.subr.mxu0 0.0
    %351 = vmatpush2.msra.mxu0 0.0
    %352 = vmatprep.subr.mxu0 0.0
    %353 = vmatpush2.msra.mxu0 0.0
    %354 = vmatprep.subr.mxu0 0.0
    %355 = vmatpush2.msra.mxu0 0.0
    %356 = vmatprep.subr.mxu0 0.0
    %357 = vmatpush2.msra.mxu0 0.0
    %358 = vmatprep.subr.mxu0 0.0
    %359 = vmatpush2.msra.mxu0 0.0
    %360 = vmatprep.subr.mxu0 0.0
    %361 = vmatpush2.msra.mxu0 0.0
    %362 = vmatprep.subr.mxu0 0.0
    %363 = vmatpush2.msra.mxu0 0.0
    %364 = vmatprep.mubr.f32.mxu0 0.0
    %365 = vmatmul.mubr.f32.gmra.mxu0 %v298
    %v366 = vpop.f32.mrf.mxu0
    %v367 = vadd.f32 0.0, %v366
    %v368 = vpop.f32.mrf.mxu0
    %v369 = vadd.f32 0.0, %v368
    %370 = vdwg.mxu0
    %v371 = vld [vmem:[#allocation3] sm:$0xff]
    %v372 = vadd.f32 %v371, %v367
    %v373 = vld [vmem:[#allocation3 + $0x78] sm:$0xff]
    %v374 = vadd.f32 %v373, %v369
    %v375 = vxor.u32 %v372, 2147483648
    %v376 = vmul.f32 %v375, 1.442695
    %v377 = vpow.pop %v376
    %v378 = vadd.f32 %v377, 1.0
    %v379 = vrcp.pop %v378
    %v380 = vmul.f32 1.0, %v379
    %v381 = vtanh.pop %v372
    %v382 = vmul.f32 %v380, 0.0
    %384 = vrot.lane.b32.xlu0 %v381, 32
    %v385 = vpop.permute.xlu0 %384
    %v387 = vmul.f32 %v380, %v385
    %389 = vrot.lane.b32.xlu0 %v387, 32
    %v390 = vpop.permute.xlu0 %389
    %v392 = vadd.f32 %v382, %v390
    %v393 = vtanh.pop %v392
    %395 = vrot.lane.b32.xlu0 %v393, 32
    %v396 = vpop.permute.xlu0 %395
    %v398 = vmul.f32 %v380, %v396
    %v399 = vxor.u32 %v374, 2147483648
    %v400 = vmul.f32 %v399, 1.442695
    %v401 = vpow.pop %v400
    %v402 = vadd.f32 %v401, 1.0
    %v403 = vrcp.pop %v402
    %v404 = vmul.f32 1.0, %v403
    %v405 = vtanh.pop %v374
    %v406 = vmul.f32 %v404, 0.0
    %408 = vrot.lane.b32.xlu0 %v405, 32
    %v409 = vpop.permute.xlu0 %408
    %v411 = vmul.f32 %v404, %v409
    %413 = vrot.lane.b32.xlu0 %v411, 32
    %v414 = vpop.permute.xlu0 %413
    %v416 = vadd.f32 %v406, %v414
    %v417 = vtanh.pop %v416
    %419 = vrot.lane.b32.xlu0 %v417, 32
    %v420 = vpop.permute.xlu0 %419
    %v422 = vmul.f32 %v404, %v420
    %424 = vrot.lane.b32.xlu0 %v398, 64
    %v425 = vpop.permute.xlu0 %424
    %428 = vrot.lane.b32.xlu0 %v422, 96
    %v429 = vpop.permute.xlu0 %428
    %vm431 = vcmask 261120
    %v432 = vsel %vm431, %v425, %v429
    %v434 = vsel %vm296, %v432, 0
    %436 = vmatprep.subr.mxu0 0.0
    %437 = vmatpush1.msra.mxu0 0.0
    %438 = vmatprep.subr.mxu0 0.0
    %439 = vmatpush1.msra.mxu0 0.0
    %440 = vmatprep.subr.mxu0 0.0
    %441 = vmatpush1.msra.mxu0 0.0
    %442 = vmatprep.subr.mxu0 0.0
    %443 = vmatpush1.msra.mxu0 0.0
    %444 = vmatprep.subr.mxu0 0.0
    %445 = vmatpush1.msra.mxu0 0.0
    %446 = vmatprep.subr.mxu0 0.0
    %447 = vmatpush1.msra.mxu0 0.0
    %448 = vmatprep.subr.mxu0 0.0
    %449 = vmatpush1.msra.mxu0 0.0
    %450 = vmatprep.subr.mxu0 0.0
    %451 = vmatpush1.msra.mxu0 0.0
    %452 = vmatprep.subr.mxu0 %v295
    %453 = vmatpush1.msra.mxu0 %v294
    %454 = vmatprep.subr.mxu0 %v293
    %455 = vmatpush1.msra.mxu0 %v292
    %456 = vmatprep.subr.mxu0 %v291
    %457 = vmatpush1.msra.mxu0 %v290
    %458 = vmatprep.subr.mxu0 %v289
    %459 = vmatpush1.msra.mxu0 %v288
    %460 = vmatprep.subr.mxu0 %v287
    %461 = vmatpush1.msra.mxu0 %v286
    %462 = vmatprep.subr.mxu0 %v285
    %463 = vmatpush1.msra.mxu0 %v284
    %464 = vmatprep.subr.mxu0 %v283
    %465 = vmatpush1.msra.mxu0 %v282
    %466 = vmatprep.subr.mxu0 %v281
    %467 = vmatpush1.msra.mxu0 %v280
    %468 = vmatprep.subr.mxu0 0.0
    %469 = vmatpush2.msra.mxu0 0.0
    %470 = vmatprep.subr.mxu0 0.0
    %471 = vmatpush2.msra.mxu0 0.0
    %472 = vmatprep.subr.mxu0 0.0
    %473 = vmatpush2.msra.mxu0 0.0
    %474 = vmatprep.subr.mxu0 0.0
    %475 = vmatpush2.msra.mxu0 0.0
    %476 = vmatprep.subr.mxu0 0.0
    %477 = vmatpush2.msra.mxu0 0.0
    %478 = vmatprep.subr.mxu0 0.0
    %479 = vmatpush2.msra.mxu0 0.0
    %480 = vmatprep.subr.mxu0 0.0
    %481 = vmatpush2.msra.mxu0 0.0
    %482 = vmatprep.subr.mxu0 0.0
    %483 = vmatpush2.msra.mxu0 0.0
    %484 = vmatprep.subr.mxu0 0.0
    %485 = vmatpush2.msra.mxu0 0.0
    %486 = vmatprep.subr.mxu0 0.0
    %487 = vmatpush2.msra.mxu0 0.0
    %488 = vmatprep.subr.mxu0 0.0
    %489 = vmatpush2.msra.mxu0 0.0
    %490 = vmatprep.subr.mxu0 0.0
    %491 = vmatpush2.msra.mxu0 0.0
    %492 = vmatprep.subr.mxu0 0.0
    %493 = vmatpush2.msra.mxu0 0.0
    %494 = vmatprep.subr.mxu0 0.0
    %495 = vmatpush2.msra.mxu0 0.0
    %496 = vmatprep.subr.mxu0 0.0
    %497 = vmatpush2.msra.mxu0 0.0
    %498 = vmatprep.subr.mxu0 0.0
    %499 = vmatpush2.msra.mxu0 0.0
    %500 = vmatprep.mubr.f32.mxu0 0.0
    %501 = vmatmul.mubr.f32.gmra.mxu0 %v434
    %v502 = vpop.f32.mrf.mxu0
    %v503 = vadd.f32 0.0, %v502
    %v504 = vpop.f32.mrf.mxu0
    %v505 = vadd.f32 0.0, %v504
    %506 = vdwg.mxu0
    %v507 = vld [vmem:[#allocation3 + $0x10] sm:$0xff]
    %v508 = vadd.f32 %v507, %v503
    %v509 = vld [vmem:[#allocation3 + $0x68] sm:$0xff]
    %v510 = vadd.f32 %v509, %v505
    %v511 = vxor.u32 %v508, 2147483648
    %v512 = vmul.f32 %v511, 1.442695
    %v513 = vpow.pop %v512
    %v514 = vadd.f32 %v513, 1.0
    %v515 = vrcp.pop %v514
    %v516 = vmul.f32 1.0, %v515
    %v517 = vtanh.pop %v508
    %v518 = vmul.f32 %v516, %v392
    %520 = vrot.lane.b32.xlu0 %v517, 32
    %v521 = vpop.permute.xlu0 %520
    %v523 = vmul.f32 %v516, %v521
    %525 = vrot.lane.b32.xlu0 %v523, 32
    %v526 = vpop.permute.xlu0 %525
    %v528 = vadd.f32 %v518, %v526
    %v529 = vtanh.pop %v528
    %531 = vrot.lane.b32.xlu0 %v529, 32
    %v532 = vpop.permute.xlu0 %531
    %v534 = vmul.f32 %v516, %v532
    %v535 = vxor.u32 %v510, 2147483648
    %v536 = vmul.f32 %v535, 1.442695
    %v537 = vpow.pop %v536
    %v538 = vadd.f32 %v537, 1.0
    %v539 = vrcp.pop %v538
    %v540 = vmul.f32 1.0, %v539
    %v541 = vtanh.pop %v510
    %v542 = vmul.f32 %v540, %v416
    %544 = vrot.lane.b32.xlu0 %v541, 32
    %v545 = vpop.permute.xlu0 %544
    %v547 = vmul.f32 %v540, %v545
    %549 = vrot.lane.b32.xlu0 %v547, 32
    %v550 = vpop.permute.xlu0 %549
    %v552 = vadd.f32 %v542, %v550
    %v553 = vtanh.pop %v552
    %555 = vrot.lane.b32.xlu0 %v553, 32
    %v556 = vpop.permute.xlu0 %555
    %v558 = vmul.f32 %v540, %v556
    %560 = vrot.lane.b32.xlu0 %v534, 64
    %v561 = vpop.permute.xlu0 %560
    %564 = vrot.lane.b32.xlu0 %v558, 96
    %v565 = vpop.permute.xlu0 %564
    %v567 = vsel %vm431, %v561, %v565
    %v569 = vsel %vm296, %v567, 0
    %571 = vmatprep.subr.mxu0 0.0
    %572 = vmatpush1.msra.mxu0 0.0
    %573 = vmatprep.subr.mxu0 0.0
    %574 = vmatpush1.msra.mxu0 0.0
    %575 = vmatprep.subr.mxu0 0.0
    %576 = vmatpush1.msra.mxu0 0.0
    %577 = vmatprep.subr.mxu0 0.0
    %578 = vmatpush1.msra.mxu0 0.0
    %579 = vmatprep.subr.mxu0 0.0
    %580 = vmatpush1.msra.mxu0 0.0
    %581 = vmatprep.subr.mxu0 0.0
    %582 = vmatpush1.msra.mxu0 0.0
    %583 = vmatprep.subr.mxu0 0.0
    %584 = vmatpush1.msra.mxu0 0.0
    %585 = vmatprep.subr.mxu0 0.0
    %586 = vmatpush1.msra.mxu0 0.0
    %587 = vmatprep.subr.mxu0 %v295
    %588 = vmatpush1.msra.mxu0 %v294
    %589 = vmatprep.subr.mxu0 %v293
    %590 = vmatpush1.msra.mxu0 %v292
    %591 = vmatprep.subr.mxu0 %v291
    %592 = vmatpush1.msra.mxu0 %v290
    %593 = vmatprep.subr.mxu0 %v289
    %594 = vmatpush1.msra.mxu0 %v288
    %595 = vmatprep.subr.mxu0 %v287
    %596 = vmatpush1.msra.mxu0 %v286
    %597 = vmatprep.subr.mxu0 %v285
    %598 = vmatpush1.msra.mxu0 %v284
    %599 = vmatprep.subr.mxu0 %v283
    %600 = vmatpush1.msra.mxu0 %v282
    %601 = vmatprep.subr.mxu0 %v281
    %602 = vmatpush1.msra.mxu0 %v280
    %603 = vmatprep.subr.mxu0 0.0
    %604 = vmatpush2.msra.mxu0 0.0
    %605 = vmatprep.subr.mxu0 0.0
    %606 = vmatpush2.msra.mxu0 0.0
    %607 = vmatprep.subr.mxu0 0.0
    %608 = vmatpush2.msra.mxu0 0.0
    %609 = vmatprep.subr.mxu0 0.0
    %610 = vmatpush2.msra.mxu0 0.0
    %611 = vmatprep.subr.mxu0 0.0
    %612 = vmatpush2.msra.mxu0 0.0
    %613 = vmatprep.subr.mxu0 0.0
    %614 = vmatpush2.msra.mxu0 0.0
    %615 = vmatprep.subr.mxu0 0.0
    %616 = vmatpush2.msra.mxu0 0.0
    %617 = vmatprep.subr.mxu0 0.0
    %618 = vmatpush2.msra.mxu0 0.0
    %619 = vmatprep.subr.mxu0 0.0
    %620 = vmatpush2.msra.mxu0 0.0
    %621 = vmatprep.subr.mxu0 0.0
    %622 = vmatpush2.msra.mxu0 0.0
    %623 = vmatprep.subr.mxu0 0.0
    %624 = vmatpush2.msra.mxu0 0.0
    %625 = vmatprep.subr.mxu0 0.0
    %626 = vmatpush2.msra.mxu0 0.0
    %627 = vmatprep.subr.mxu0 0.0
    %628 = vmatpush2.msra.mxu0 0.0
    %629 = vmatprep.subr.mxu0 0.0
    %630 = vmatpush2.msra.mxu0 0.0
    %631 = vmatprep.subr.mxu0 0.0
    %632 = vmatpush2.msra.mxu0 0.0
    %633 = vmatprep.subr.mxu0 0.0
    %634 = vmatpush2.msra.mxu0 0.0
    %635 = vmatprep.mubr.f32.mxu0 0.0
    %636 = vmatmul.mubr.f32.gmra.mxu0 %v569
    %v637 = vpop.f32.mrf.mxu0
    %v638 = vadd.f32 0.0, %v637
    %v639 = vpop.f32.mrf.mxu0
    %v640 = vadd.f32 0.0, %v639
    %641 = vdwg.mxu0
    %v642 = vld [vmem:[#allocation3 + $0x20] sm:$0xff]
    %v643 = vadd.f32 %v642, %v638
    %v644 = vld [vmem:[#allocation3 + $0x58] sm:$0xff]
    %v645 = vadd.f32 %v644, %v640
    %v646 = vxor.u32 %v643, 2147483648
    %v647 = vmul.f32 %v646, 1.442695
    %v648 = vpow.pop %v647
    %v649 = vadd.f32 %v648, 1.0
    %v650 = vrcp.pop %v649
    %v651 = vmul.f32 1.0, %v650
    %v652 = vtanh.pop %v643
    %v653 = vmul.f32 %v651, %v528
    %655 = vrot.lane.b32.xlu0 %v652, 32
    %v656 = vpop.permute.xlu0 %655
    %v658 = vmul.f32 %v651, %v656
    %660 = vrot.lane.b32.xlu0 %v658, 32
    %v661 = vpop.permute.xlu0 %660
    %v663 = vadd.f32 %v653, %v661
    %v664 = vtanh.pop %v663
    %666 = vrot.lane.b32.xlu0 %v664, 32
    %v667 = vpop.permute.xlu0 %666
    %v669 = vmul.f32 %v651, %v667
    %v670 = vxor.u32 %v645, 2147483648
    %v671 = vmul.f32 %v670, 1.442695
    %v672 = vpow.pop %v671
    %v673 = vadd.f32 %v672, 1.0
    %v674 = vrcp.pop %v673
    %v675 = vmul.f32 1.0, %v674
    %v676 = vtanh.pop %v645
    %v677 = vmul.f32 %v675, %v552
    %679 = vrot.lane.b32.xlu0 %v676, 32
    %v680 = vpop.permute.xlu0 %679
    %v682 = vmul.f32 %v675, %v680
    %684 = vrot.lane.b32.xlu0 %v682, 32
    %v685 = vpop.permute.xlu0 %684
    %v687 = vadd.f32 %v677, %v685
    %v688 = vtanh.pop %v687
    %690 = vrot.lane.b32.xlu0 %v688, 32
    %v691 = vpop.permute.xlu0 %690
    %v693 = vmul.f32 %v675, %v691
    %695 = vrot.lane.b32.xlu0 %v669, 64
    %v696 = vpop.permute.xlu0 %695
    %699 = vrot.lane.b32.xlu0 %v693, 96
    %v700 = vpop.permute.xlu0 %699
    %v702 = vsel %vm431, %v696, %v700
    %v704 = vsel %vm296, %v702, 0
    %706 = vmatprep.subr.mxu0 0.0
    %707 = vmatpush1.msra.mxu0 0.0
    %708 = vmatprep.subr.mxu0 0.0
    %709 = vmatpush1.msra.mxu0 0.0
    %710 = vmatprep.subr.mxu0 0.0
    %711 = vmatpush1.msra.mxu0 0.0
    %712 = vmatprep.subr.mxu0 0.0
    %713 = vmatpush1.msra.mxu0 0.0
    %714 = vmatprep.subr.mxu0 0.0
    %715 = vmatpush1.msra.mxu0 0.0
    %716 = vmatprep.subr.mxu0 0.0
    %717 = vmatpush1.msra.mxu0 0.0
    %718 = vmatprep.subr.mxu0 0.0
    %719 = vmatpush1.msra.mxu0 0.0
    %720 = vmatprep.subr.mxu0 0.0
    %721 = vmatpush1.msra.mxu0 0.0
    %722 = vmatprep.subr.mxu0 %v295
    %723 = vmatpush1.msra.mxu0 %v294
    %724 = vmatprep.subr.mxu0 %v293
    %725 = vmatpush1.msra.mxu0 %v292
    %726 = vmatprep.subr.mxu0 %v291
    %727 = vmatpush1.msra.mxu0 %v290
    %728 = vmatprep.subr.mxu0 %v289
    %729 = vmatpush1.msra.mxu0 %v288
    %730 = vmatprep.subr.mxu0 %v287
    %731 = vmatpush1.msra.mxu0 %v286
    %732 = vmatprep.subr.mxu0 %v285
    %733 = vmatpush1.msra.mxu0 %v284
    %734 = vmatprep.subr.mxu0 %v283
    %735 = vmatpush1.msra.mxu0 %v282
    %736 = vmatprep.subr.mxu0 %v281
    %737 = vmatpush1.msra.mxu0 %v280
    %738 = vmatprep.subr.mxu0 0.0
    %739 = vmatpush2.msra.mxu0 0.0
    %740 = vmatprep.subr.mxu0 0.0
    %741 = vmatpush2.msra.mxu0 0.0
    %742 = vmatprep.subr.mxu0 0.0
    %743 = vmatpush2.msra.mxu0 0.0
    %744 = vmatprep.subr.mxu0 0.0
    %745 = vmatpush2.msra.mxu0 0.0
    %746 = vmatprep.subr.mxu0 0.0
    %747 = vmatpush2.msra.mxu0 0.0
    %748 = vmatprep.subr.mxu0 0.0
    %749 = vmatpush2.msra.mxu0 0.0
    %750 = vmatprep.subr.mxu0 0.0
    %751 = vmatpush2.msra.mxu0 0.0
    %752 = vmatprep.subr.mxu0 0.0
    %753 = vmatpush2.msra.mxu0 0.0
    %754 = vmatprep.subr.mxu0 0.0
    %755 = vmatpush2.msra.mxu0 0.0
    %756 = vmatprep.subr.mxu0 0.0
    %757 = vmatpush2.msra.mxu0 0.0
    %758 = vmatprep.subr.mxu0 0.0
    %759 = vmatpush2.msra.mxu0 0.0
    %760 = vmatprep.subr.mxu0 0.0
    %761 = vmatpush2.msra.mxu0 0.0
    %762 = vmatprep.subr.mxu0 0.0
    %763 = vmatpush2.msra.mxu0 0.0
    %764 = vmatprep.subr.mxu0 0.0
    %765 = vmatpush2.msra.mxu0 0.0
    %766 = vmatprep.subr.mxu0 0.0
    %767 = vmatpush2.msra.mxu0 0.0
    %768 = vmatprep.subr.mxu0 0.0
    %769 = vmatpush2.msra.mxu0 0.0
    %770 = vmatprep.mubr.f32.mxu0 0.0
    %771 = vmatmul.mubr.f32.gmra.mxu0 %v704
    %v772 = vpop.f32.mrf.mxu0
    %v773 = vadd.f32 0.0, %v772
    %v774 = vpop.f32.mrf.mxu0
    %v775 = vadd.f32 0.0, %v774
    %776 = vdwg.mxu0
    %v777 = vld [vmem:[#allocation3 + $0x30] sm:$0xff]
    %v778 = vadd.f32 %v777, %v773
    %v779 = vld [vmem:[#allocation3 + $0x48] sm:$0xff]
    %v780 = vadd.f32 %v779, %v775
    %v781 = vxor.u32 %v778, 2147483648
    %v782 = vmul.f32 %v781, 1.442695
    %v783 = vpow.pop %v782
    %v784 = vadd.f32 %v783, 1.0
    %v785 = vrcp.pop %v784
    %v786 = vmul.f32 1.0, %v785
    %v787 = vtanh.pop %v778
    %v788 = vmul.f32 %v786, %v663
    %790 = vrot.lane.b32.xlu0 %v787, 32
    %v791 = vpop.permute.xlu0 %790
    %v793 = vmul.f32 %v786, %v791
    %795 = vrot.lane.b32.xlu0 %v793, 32
    %v796 = vpop.permute.xlu0 %795
    %v798 = vadd.f32 %v788, %v796
    %v799 = vtanh.pop %v798
    %801 = vrot.lane.b32.xlu0 %v799, 32
    %v802 = vpop.permute.xlu0 %801
    %v804 = vmul.f32 %v786, %v802
    %v805 = vxor.u32 %v780, 2147483648
    %v806 = vmul.f32 %v805, 1.442695
    %v807 = vpow.pop %v806
    %v808 = vadd.f32 %v807, 1.0
    %v809 = vrcp.pop %v808
    %v810 = vmul.f32 1.0, %v809
    %v811 = vtanh.pop %v780
    %v812 = vmul.f32 %v810, %v687
    %814 = vrot.lane.b32.xlu0 %v811, 32
    %v815 = vpop.permute.xlu0 %814
    %v817 = vmul.f32 %v810, %v815
    %819 = vrot.lane.b32.xlu0 %v817, 32
    %v820 = vpop.permute.xlu0 %819
    %v822 = vadd.f32 %v812, %v820
    %v823 = vtanh.pop %v822
    %825 = vrot.lane.b32.xlu0 %v823, 32
    %v826 = vpop.permute.xlu0 %825
    %v828 = vmul.f32 %v810, %v826
    %830 = vrot.lane.b32.xlu0 %v804, 64
    %v831 = vpop.permute.xlu0 %830
    %834 = vrot.lane.b32.xlu0 %v828, 96
    %v835 = vpop.permute.xlu0 %834
    %v837 = vsel %vm431, %v831, %v835
    %v839 = vsel %vm296, %v837, 0
    %841 = vmatprep.subr.mxu0 0.0
    %842 = vmatpush1.msra.mxu0 0.0
    %843 = vmatprep.subr.mxu0 0.0
    %844 = vmatpush1.msra.mxu0 0.0
    %845 = vmatprep.subr.mxu0 0.0
    %846 = vmatpush1.msra.mxu0 0.0
    %847 = vmatprep.subr.mxu0 0.0
    %848 = vmatpush1.msra.mxu0 0.0
    %849 = vmatprep.subr.mxu0 0.0
    %850 = vmatpush1.msra.mxu0 0.0
    %851 = vmatprep.subr.mxu0 0.0
    %852 = vmatpush1.msra.mxu0 0.0
    %853 = vmatprep.subr.mxu0 0.0
    %854 = vmatpush1.msra.mxu0 0.0
    %855 = vmatprep.subr.mxu0 0.0
    %856 = vmatpush1.msra.mxu0 0.0
    %857 = vmatprep.subr.mxu0 %v295
    %858 = vmatpush1.msra.mxu0 %v294
    %859 = vmatprep.subr.mxu0 %v293
    %860 = vmatpush1.msra.mxu0 %v292
    %861 = vmatprep.subr.mxu0 %v291
    %862 = vmatpush1.msra.mxu0 %v290
    %863 = vmatprep.subr.mxu0 %v289
    %864 = vmatpush1.msra.mxu0 %v288
    %865 = vmatprep.subr.mxu0 %v287
    %866 = vmatpush1.msra.mxu0 %v286
    %867 = vmatprep.subr.mxu0 %v285
    %868 = vmatpush1.msra.mxu0 %v284
    %869 = vmatprep.subr.mxu0 %v283
    %870 = vmatpush1.msra.mxu0 %v282
    %871 = vmatprep.subr.mxu0 %v281
    %872 = vmatpush1.msra.mxu0 %v280
    %873 = vmatprep.subr.mxu0 0.0
    %874 = vmatpush2.msra.mxu0 0.0
    %875 = vmatprep.subr.mxu0 0.0
    %876 = vmatpush2.msra.mxu0 0.0
    %877 = vmatprep.subr.mxu0 0.0
    %878 = vmatpush2.msra.mxu0 0.0
    %879 = vmatprep.subr.mxu0 0.0
    %880 = vmatpush2.msra.mxu0 0.0
    %881 = vmatprep.subr.mxu0 0.0
    %882 = vmatpush2.msra.mxu0 0.0
    %883 = vmatprep.subr.mxu0 0.0
    %884 = vmatpush2.msra.mxu0 0.0
    %885 = vmatprep.subr.mxu0 0.0
    %886 = vmatpush2.msra.mxu0 0.0
    %887 = vmatprep.subr.mxu0 0.0
    %888 = vmatpush2.msra.mxu0 0.0
    %889 = vmatprep.subr.mxu0 0.0
    %890 = vmatpush2.msra.mxu0 0.0
    %891 = vmatprep.subr.mxu0 0.0
    %892 = vmatpush2.msra.mxu0 0.0
    %893 = vmatprep.subr.mxu0 0.0
    %894 = vmatpush2.msra.mxu0 0.0
    %895 = vmatprep.subr.mxu0 0.0
    %896 = vmatpush2.msra.mxu0 0.0
    %897 = vmatprep.subr.mxu0 0.0
    %898 = vmatpush2.msra.mxu0 0.0
    %899 = vmatprep.subr.mxu0 0.0
    %900 = vmatpush2.msra.mxu0 0.0
    %901 = vmatprep.subr.mxu0 0.0
    %902 = vmatpush2.msra.mxu0 0.0
    %903 = vmatprep.subr.mxu0 0.0
    %904 = vmatpush2.msra.mxu0 0.0
    %905 = vmatprep.mubr.f32.mxu0 0.0
    %906 = vmatmul.mubr.f32.gmra.mxu0 %v839
    %v907 = vpop.f32.mrf.mxu0
    %v908 = vadd.f32 0.0, %v907
    %v909 = vpop.f32.mrf.mxu0
    %v910 = vadd.f32 0.0, %v909
    %911 = vdwg.mxu0
    %v912 = vld [vmem:[#allocation3 + $0x40] sm:$0xff]
    %v913 = vadd.f32 %v912, %v908
    %v914 = vld [vmem:[#allocation3 + $0x38] sm:$0xff]
    %v915 = vadd.f32 %v914, %v910
    %v916 = vxor.u32 %v913, 2147483648
    %v917 = vmul.f32 %v916, 1.442695
    %v918 = vpow.pop %v917
    %v919 = vadd.f32 %v918, 1.0
    %v920 = vrcp.pop %v919
    %v921 = vmul.f32 1.0, %v920
    %v922 = vtanh.pop %v913
    %v923 = vmul.f32 %v921, %v798
    %925 = vrot.lane.b32.xlu0 %v922, 32
    %v926 = vpop.permute.xlu0 %925
    %v928 = vmul.f32 %v921, %v926
    %930 = vrot.lane.b32.xlu0 %v928, 32
    %v931 = vpop.permute.xlu0 %930
    %v933 = vadd.f32 %v923, %v931
    %v934 = vtanh.pop %v933
    %936 = vrot.lane.b32.xlu0 %v934, 32
    %v937 = vpop.permute.xlu0 %936
    %v939 = vmul.f32 %v921, %v937
    %v940 = vxor.u32 %v915, 2147483648
    %v941 = vmul.f32 %v940, 1.442695
    %v942 = vpow.pop %v941
    %v943 = vadd.f32 %v942, 1.0
    %v944 = vrcp.pop %v943
    %v945 = vmul.f32 1.0, %v944
    %v946 = vtanh.pop %v915
    %v947 = vmul.f32 %v945, %v822
    %949 = vrot.lane.b32.xlu0 %v946, 32
    %v950 = vpop.permute.xlu0 %949
    %v952 = vmul.f32 %v945, %v950
    %954 = vrot.lane.b32.xlu0 %v952, 32
    %v955 = vpop.permute.xlu0 %954
    %v957 = vadd.f32 %v947, %v955
    %v958 = vtanh.pop %v957
    %960 = vrot.lane.b32.xlu0 %v958, 32
    %v961 = vpop.permute.xlu0 %960
    %v963 = vmul.f32 %v945, %v961
    %965 = vrot.lane.b32.xlu0 %v939, 64
    %v966 = vpop.permute.xlu0 %965
    %969 = vrot.lane.b32.xlu0 %v963, 96
    %v970 = vpop.permute.xlu0 %969
    %v972 = vsel %vm431, %v966, %v970
    %v974 = vsel %vm296, %v972, 0
    %976 = vmatprep.subr.mxu0 0.0
    %977 = vmatpush1.msra.mxu0 0.0
    %978 = vmatprep.subr.mxu0 0.0
    %979 = vmatpush1.msra.mxu0 0.0
    %980 = vmatprep.subr.mxu0 0.0
    %981 = vmatpush1.msra.mxu0 0.0
    %982 = vmatprep.subr.mxu0 0.0
    %983 = vmatpush1.msra.mxu0 0.0
    %984 = vmatprep.subr.mxu0 0.0
    %985 = vmatpush1.msra.mxu0 0.0
    %986 = vmatprep.subr.mxu0 0.0
    %987 = vmatpush1.msra.mxu0 0.0
    %988 = vmatprep.subr.mxu0 0.0
    %989 = vmatpush1.msra.mxu0 0.0
    %990 = vmatprep.subr.mxu0 0.0
    %991 = vmatpush1.msra.mxu0 0.0
    %992 = vmatprep.subr.mxu0 %v295
    %993 = vmatpush1.msra.mxu0 %v294
    %994 = vmatprep.subr.mxu0 %v293
    %995 = vmatpush1.msra.mxu0 %v292
    %996 = vmatprep.subr.mxu0 %v291
    %997 = vmatpush1.msra.mxu0 %v290
    %998 = vmatprep.subr.mxu0 %v289
    %999 = vmatpush1.msra.mxu0 %v288
    %1000 = vmatprep.subr.mxu0 %v287
    %1001 = vmatpush1.msra.mxu0 %v286
    %1002 = vmatprep.subr.mxu0 %v285
    %1003 = vmatpush1.msra.mxu0 %v284
    %1004 = vmatprep.subr.mxu0 %v283
    %1005 = vmatpush1.msra.mxu0 %v282
    %1006 = vmatprep.subr.mxu0 %v281
    %1007 = vmatpush1.msra.mxu0 %v280
    %1008 = vmatprep.subr.mxu0 0.0
    %1009 = vmatpush2.msra.mxu0 0.0
    %1010 = vmatprep.subr.mxu0 0.0
    %1011 = vmatpush2.msra.mxu0 0.0
    %1012 = vmatprep.subr.mxu0 0.0
    %1013 = vmatpush2.msra.mxu0 0.0
    %1014 = vmatprep.subr.mxu0 0.0
    %1015 = vmatpush2.msra.mxu0 0.0
    %1016 = vmatprep.subr.mxu0 0.0
    %1017 = vmatpush2.msra.mxu0 0.0
    %1018 = vmatprep.subr.mxu0 0.0
    %1019 = vmatpush2.msra.mxu0 0.0
    %1020 = vmatprep.subr.mxu0 0.0
    %1021 = vmatpush2.msra.mxu0 0.0
    %1022 = vmatprep.subr.mxu0 0.0
    %1023 = vmatpush2.msra.mxu0 0.0
    %1024 = vmatprep.subr.mxu0 0.0
    %1025 = vmatpush2.msra.mxu0 0.0
    %1026 = vmatprep.subr.mxu0 0.0
    %1027 = vmatpush2.msra.mxu0 0.0
    %1028 = vmatprep.subr.mxu0 0.0
    %1029 = vmatpush2.msra.mxu0 0.0
    %1030 = vmatprep.subr.mxu0 0.0
    %1031 = vmatpush2.msra.mxu0 0.0
    %1032 = vmatprep.subr.mxu0 0.0
    %1033 = vmatpush2.msra.mxu0 0.0
    %1034 = vmatprep.subr.mxu0 0.0
    %1035 = vmatpush2.msra.mxu0 0.0
    %1036 = vmatprep.subr.mxu0 0.0
    %1037 = vmatpush2.msra.mxu0 0.0
    %1038 = vmatprep.subr.mxu0 0.0
    %1039 = vmatpush2.msra.mxu0 0.0
    %1040 = vmatprep.mubr.f32.mxu0 0.0
    %1041 = vmatmul.mubr.f32.gmra.mxu0 %v974
    %v1042 = vpop.f32.mrf.mxu0
    %v1043 = vadd.f32 0.0, %v1042
    %v1044 = vpop.f32.mrf.mxu0
    %v1045 = vadd.f32 0.0, %v1044
    %1046 = vdwg.mxu0
    %v1047 = vld [vmem:[#allocation3 + $0x50] sm:$0xff]
    %v1048 = vadd.f32 %v1047, %v1043
    %v1049 = vld [vmem:[#allocation3 + $0x28] sm:$0xff]
    %v1050 = vadd.f32 %v1049, %v1045
    %v1051 = vxor.u32 %v1048, 2147483648
    %v1052 = vmul.f32 %v1051, 1.442695
    %v1053 = vpow.pop %v1052
    %v1054 = vadd.f32 %v1053, 1.0
    %v1055 = vrcp.pop %v1054
    %v1056 = vmul.f32 1.0, %v1055
    %v1057 = vtanh.pop %v1048
    %v1058 = vmul.f32 %v1056, %v933
    %1060 = vrot.lane.b32.xlu0 %v1057, 32
    %v1061 = vpop.permute.xlu0 %1060
    %v1063 = vmul.f32 %v1056, %v1061
    %1065 = vrot.lane.b32.xlu0 %v1063, 32
    %v1066 = vpop.permute.xlu0 %1065
    %v1068 = vadd.f32 %v1058, %v1066
    %v1069 = vtanh.pop %v1068
    %1071 = vrot.lane.b32.xlu0 %v1069, 32
    %v1072 = vpop.permute.xlu0 %1071
    %v1074 = vmul.f32 %v1056, %v1072
    %v1075 = vxor.u32 %v1050, 2147483648
    %v1076 = vmul.f32 %v1075, 1.442695
    %v1077 = vpow.pop %v1076
    %v1078 = vadd.f32 %v1077, 1.0
    %v1079 = vrcp.pop %v1078
    %v1080 = vmul.f32 1.0, %v1079
    %v1081 = vtanh.pop %v1050
    %v1082 = vmul.f32 %v1080, %v957
    %1084 = vrot.lane.b32.xlu0 %v1081, 32
    %v1085 = vpop.permute.xlu0 %1084
    %v1087 = vmul.f32 %v1080, %v1085
    %1089 = vrot.lane.b32.xlu0 %v1087, 32
    %v1090 = vpop.permute.xlu0 %1089
    %v1092 = vadd.f32 %v1082, %v1090
    %v1093 = vtanh.pop %v1092
    %1095 = vrot.lane.b32.xlu0 %v1093, 32
    %v1096 = vpop.permute.xlu0 %1095
    %v1098 = vmul.f32 %v1080, %v1096
    %1100 = vrot.lane.b32.xlu0 %v1074, 64
    %v1101 = vpop.permute.xlu0 %1100
    %1104 = vrot.lane.b32.xlu0 %v1098, 96
    %v1105 = vpop.permute.xlu0 %1104
    %v1107 = vsel %vm431, %v1101, %v1105
    %v1109 = vsel %vm296, %v1107, 0
    %1111 = vmatprep.subr.mxu0 0.0
    %1112 = vmatpush1.msra.mxu0 0.0
    %1113 = vmatprep.subr.mxu0 0.0
    %1114 = vmatpush1.msra.mxu0 0.0
    %1115 = vmatprep.subr.mxu0 0.0
    %1116 = vmatpush1.msra.mxu0 0.0
    %1117 = vmatprep.subr.mxu0 0.0
    %1118 = vmatpush1.msra.mxu0 0.0
    %1119 = vmatprep.subr.mxu0 0.0
    %1120 = vmatpush1.msra.mxu0 0.0
    %1121 = vmatprep.subr.mxu0 0.0
    %1122 = vmatpush1.msra.mxu0 0.0
    %1123 = vmatprep.subr.mxu0 0.0
    %1124 = vmatpush1.msra.mxu0 0.0
    %1125 = vmatprep.subr.mxu0 0.0
    %1126 = vmatpush1.msra.mxu0 0.0
    %1127 = vmatprep.subr.mxu0 %v295
    %1128 = vmatpush1.msra.mxu0 %v294
    %1129 = vmatprep.subr.mxu0 %v293
    %1130 = vmatpush1.msra.mxu0 %v292
    %1131 = vmatprep.subr.mxu0 %v291
    %1132 = vmatpush1.msra.mxu0 %v290
    %1133 = vmatprep.subr.mxu0 %v289
    %1134 = vmatpush1.msra.mxu0 %v288
    %1135 = vmatprep.subr.mxu0 %v287
    %1136 = vmatpush1.msra.mxu0 %v286
    %1137 = vmatprep.subr.mxu0 %v285
    %1138 = vmatpush1.msra.mxu0 %v284
    %1139 = vmatprep.subr.mxu0 %v283
    %1140 = vmatpush1.msra.mxu0 %v282
    %1141 = vmatprep.subr.mxu0 %v281
    %1142 = vmatpush1.msra.mxu0 %v280
    %1143 = vmatprep.subr.mxu0 0.0
    %1144 = vmatpush2.msra.mxu0 0.0
    %1145 = vmatprep.subr.mxu0 0.0
    %1146 = vmatpush2.msra.mxu0 0.0
    %1147 = vmatprep.subr.mxu0 0.0
    %1148 = vmatpush2.msra.mxu0 0.0
    %1149 = vmatprep.subr.mxu0 0.0
    %1150 = vmatpush2.msra.mxu0 0.0
    %1151 = vmatprep.subr.mxu0 0.0
    %1152 = vmatpush2.msra.mxu0 0.0
    %1153 = vmatprep.subr.mxu0 0.0
    %1154 = vmatpush2.msra.mxu0 0.0
    %1155 = vmatprep.subr.mxu0 0.0
    %1156 = vmatpush2.msra.mxu0 0.0
    %1157 = vmatprep.subr.mxu0 0.0
    %1158 = vmatpush2.msra.mxu0 0.0
    %1159 = vmatprep.subr.mxu0 0.0
    %1160 = vmatpush2.msra.mxu0 0.0
    %1161 = vmatprep.subr.mxu0 0.0
    %1162 = vmatpush2.msra.mxu0 0.0
    %1163 = vmatprep.subr.mxu0 0.0
    %1164 = vmatpush2.msra.mxu0 0.0
    %1165 = vmatprep.subr.mxu0 0.0
    %1166 = vmatpush2.msra.mxu0 0.0
    %1167 = vmatprep.subr.mxu0 0.0
    %1168 = vmatpush2.msra.mxu0 0.0
    %1169 = vmatprep.subr.mxu0 0.0
    %1170 = vmatpush2.msra.mxu0 0.0
    %1171 = vmatprep.subr.mxu0 0.0
    %1172 = vmatpush2.msra.mxu0 0.0
    %1173 = vmatprep.subr.mxu0 0.0
    %1174 = vmatpush2.msra.mxu0 0.0
    %1175 = vmatprep.mubr.f32.mxu0 0.0
    %1176 = vmatmul.mubr.f32.gmra.mxu0 %v1109
    %v1177 = vpop.f32.mrf.mxu0
    %v1178 = vadd.f32 0.0, %v1177
    %v1179 = vpop.f32.mrf.mxu0
    %v1180 = vadd.f32 0.0, %v1179
    %1181 = vdwg.mxu0
    %v1182 = vld [vmem:[#allocation3 + $0x60] sm:$0xff]
    %v1183 = vadd.f32 %v1182, %v1178
    %v1184 = vld [vmem:[#allocation3 + $0x18] sm:$0xff]
    %v1185 = vadd.f32 %v1184, %v1180
    %v1186 = vxor.u32 %v1183, 2147483648
    %v1187 = vmul.f32 %v1186, 1.442695
    %v1188 = vpow.pop %v1187
    %v1189 = vadd.f32 %v1188, 1.0
    %v1190 = vrcp.pop %v1189
    %v1191 = vmul.f32 1.0, %v1190
    %v1192 = vtanh.pop %v1183
    %v1193 = vmul.f32 %v1191, %v1068
    %1195 = vrot.lane.b32.xlu0 %v1192, 32
    %v1196 = vpop.permute.xlu0 %1195
    %v1198 = vmul.f32 %v1191, %v1196
    %1200 = vrot.lane.b32.xlu0 %v1198, 32
    %v1201 = vpop.permute.xlu0 %1200
    %v1203 = vadd.f32 %v1193, %v1201
    %v1204 = vtanh.pop %v1203
    %1206 = vrot.lane.b32.xlu0 %v1204, 32
    %v1207 = vpop.permute.xlu0 %1206
    %v1209 = vmul.f32 %v1191, %v1207
    %v1210 = vxor.u32 %v1185, 2147483648
    %v1211 = vmul.f32 %v1210, 1.442695
    %v1212 = vpow.pop %v1211
    %v1213 = vadd.f32 %v1212, 1.0
    %v1214 = vrcp.pop %v1213
    %v1215 = vmul.f32 1.0, %v1214
    %v1216 = vtanh.pop %v1185
    %v1217 = vmul.f32 %v1215, %v1092
    %1219 = vrot.lane.b32.xlu0 %v1216, 32
    %v1220 = vpop.permute.xlu0 %1219
    %v1222 = vmul.f32 %v1215, %v1220
    %1224 = vrot.lane.b32.xlu0 %v1222, 32
    %v1225 = vpop.permute.xlu0 %1224
    %v1227 = vadd.f32 %v1217, %v1225
    %v1228 = vtanh.pop %v1227
    %1230 = vrot.lane.b32.xlu0 %v1228, 32
    %v1231 = vpop.permute.xlu0 %1230
    %v1233 = vmul.f32 %v1215, %v1231
    %1235 = vrot.lane.b32.xlu0 %v1209, 64
    %v1236 = vpop.permute.xlu0 %1235
    %1239 = vrot.lane.b32.xlu0 %v1233, 96
    %v1240 = vpop.permute.xlu0 %1239
    %v1242 = vsel %vm431, %v1236, %v1240
    %v1244 = vsel %vm296, %v1242, 0
    %1246 = vmatprep.subr.mxu0 0.0
    %1247 = vmatpush1.msra.mxu0 0.0
    %1248 = vmatprep.subr.mxu0 0.0
    %1249 = vmatpush1.msra.mxu0 0.0
    %1250 = vmatprep.subr.mxu0 0.0
    %1251 = vmatpush1.msra.mxu0 0.0
    %1252 = vmatprep.subr.mxu0 0.0
    %1253 = vmatpush1.msra.mxu0 0.0
    %1254 = vmatprep.subr.mxu0 0.0
    %1255 = vmatpush1.msra.mxu0 0.0
    %1256 = vmatprep.subr.mxu0 0.0
    %1257 = vmatpush1.msra.mxu0 0.0
    %1258 = vmatprep.subr.mxu0 0.0
    %1259 = vmatpush1.msra.mxu0 0.0
    %1260 = vmatprep.subr.mxu0 0.0
    %1261 = vmatpush1.msra.mxu0 0.0
    %1262 = vmatprep.subr.mxu0 %v295
    %1263 = vmatpush1.msra.mxu0 %v294
    %1264 = vmatprep.subr.mxu0 %v293
    %1265 = vmatpush1.msra.mxu0 %v292
    %1266 = vmatprep.subr.mxu0 %v291
    %1267 = vmatpush1.msra.mxu0 %v290
    %1268 = vmatprep.subr.mxu0 %v289
    %1269 = vmatpush1.msra.mxu0 %v288
    %1270 = vmatprep.subr.mxu0 %v287
    %1271 = vmatpush1.msra.mxu0 %v286
    %1272 = vmatprep.subr.mxu0 %v285
    %1273 = vmatpush1.msra.mxu0 %v284
    %1274 = vmatprep.subr.mxu0 %v283
    %1275 = vmatpush1.msra.mxu0 %v282
    %1276 = vmatprep.subr.mxu0 %v281
    %1277 = vmatpush1.msra.mxu0 %v280
    %1278 = vmatprep.subr.mxu0 0.0
    %1279 = vmatpush2.msra.mxu0 0.0
    %1280 = vmatprep.subr.mxu0 0.0
    %1281 = vmatpush2.msra.mxu0 0.0
    %1282 = vmatprep.subr.mxu0 0.0
    %1283 = vmatpush2.msra.mxu0 0.0
    %1284 = vmatprep.subr.mxu0 0.0
    %1285 = vmatpush2.msra.mxu0 0.0
    %1286 = vmatprep.subr.mxu0 0.0
    %1287 = vmatpush2.msra.mxu0 0.0
    %1288 = vmatprep.subr.mxu0 0.0
    %1289 = vmatpush2.msra.mxu0 0.0
    %1290 = vmatprep.subr.mxu0 0.0
    %1291 = vmatpush2.msra.mxu0 0.0
    %1292 = vmatprep.subr.mxu0 0.0
    %1293 = vmatpush2.msra.mxu0 0.0
    %1294 = vmatprep.subr.mxu0 0.0
    %1295 = vmatpush2.msra.mxu0 0.0
    %1296 = vmatprep.subr.mxu0 0.0
    %1297 = vmatpush2.msra.mxu0 0.0
    %1298 = vmatprep.subr.mxu0 0.0
    %1299 = vmatpush2.msra.mxu0 0.0
    %1300 = vmatprep.subr.mxu0 0.0
    %1301 = vmatpush2.msra.mxu0 0.0
    %1302 = vmatprep.subr.mxu0 0.0
    %1303 = vmatpush2.msra.mxu0 0.0
    %1304 = vmatprep.subr.mxu0 0.0
    %1305 = vmatpush2.msra.mxu0 0.0
    %1306 = vmatprep.subr.mxu0 0.0
    %1307 = vmatpush2.msra.mxu0 0.0
    %1308 = vmatprep.subr.mxu0 0.0
    %1309 = vmatpush2.msra.mxu0 0.0
    %1310 = vmatprep.mubr.f32.mxu0 0.0
    %1311 = vmatmul.mubr.f32.gmra.mxu0 %v1244
    %v1312 = vpop.f32.mrf.mxu0
    %v1313 = vadd.f32 0.0, %v1312
    %v1314 = vpop.f32.mrf.mxu0
    %v1315 = vadd.f32 0.0, %v1314
    %1316 = vdwg.mxu0
    %v1317 = vld [vmem:[#allocation3 + $0x70] sm:$0xff]
    %v1318 = vadd.f32 %v1317, %v1313
    %v1319 = vld [vmem:[#allocation3 + $0x8] sm:$0xff]
    %v1320 = vadd.f32 %v1319, %v1315
    %v1321 = vxor.u32 %v1318, 2147483648
    %v1322 = vmul.f32 %v1321, 1.442695
    %v1323 = vpow.pop %v1322
    %v1324 = vadd.f32 %v1323, 1.0
    %v1325 = vrcp.pop %v1324
    %v1326 = vmul.f32 1.0, %v1325
    %v1327 = vtanh.pop %v1318
    %v1328 = vmul.f32 %v1326, %v1203
    %1330 = vrot.lane.b32.xlu0 %v1327, 32
    %v1331 = vpop.permute.xlu0 %1330
    %v1333 = vmul.f32 %v1326, %v1331
    %1335 = vrot.lane.b32.xlu0 %v1333, 32
    %v1336 = vpop.permute.xlu0 %1335
    %v1338 = vadd.f32 %v1328, %v1336
    %v1339 = vtanh.pop %v1338
    %1341 = vrot.lane.b32.xlu0 %v1339, 32
    %v1342 = vpop.permute.xlu0 %1341
    %v1344 = vmul.f32 %v1326, %v1342
    %v1345 = vxor.u32 %v1320, 2147483648
    %v1346 = vmul.f32 %v1345, 1.442695
    %v1347 = vpow.pop %v1346
    %v1348 = vadd.f32 %v1347, 1.0
    %v1349 = vrcp.pop %v1348
    %v1350 = vmul.f32 1.0, %v1349
    %v1351 = vtanh.pop %v1320
    %v1352 = vmul.f32 %v1350, %v1227
    %1354 = vrot.lane.b32.xlu0 %v1351, 32
    %v1355 = vpop.permute.xlu0 %1354
    %v1357 = vmul.f32 %v1350, %v1355
    %1359 = vrot.lane.b32.xlu0 %v1357, 32
    %v1360 = vpop.permute.xlu0 %1359
    %v1362 = vadd.f32 %v1352, %v1360
    %v1363 = vtanh.pop %v1362
    %1365 = vrot.lane.b32.xlu0 %v1363, 32
    %v1366 = vpop.permute.xlu0 %1365
    %v1368 = vmul.f32 %v1350, %v1366
    %1370 = vrot.lane.b32.xlu0 %v1368, 96
    %v1371 = vpop.permute.xlu0 %1370
    %v1373 = vsel %vm431, %v425, %v1371
    %v1374 = vsel %vm431, %v561, %v1240
    %v1375 = vsel %vm431, %v696, %v1105
    %v1376 = vsel %vm431, %v831, %v970
    %v1377 = vsel %vm431, %v966, %v835
    %v1378 = vsel %vm431, %v1101, %v700
    %v1379 = vsel %vm431, %v1236, %v565
    %1381 = vrot.lane.b32.xlu0 %v1344, 64
    %v1382 = vpop.permute.xlu0 %1381
    %v1384 = vsel %vm431, %v1382, %v429
    %vm1385 = vcmp.gt.f32.partialorder %v1373, 0.0
    %vm1386 = vcmp.gt.f32.partialorder %v1374, 0.0
    %vm1387 = vcmp.gt.f32.partialorder %v1375, 0.0
    %vm1388 = vcmp.gt.f32.partialorder %v1376, 0.0
    %vm1389 = vcmp.gt.f32.partialorder %v1377, 0.0
    %vm1390 = vcmp.gt.f32.partialorder %v1378, 0.0
    %vm1391 = vcmp.gt.f32.partialorder %v1379, 0.0
    %vm1392 = vcmp.gt.f32.partialorder %v1384, 0.0
    %v1393 = vmul.f32 %v1373, 0.01
    %v1394 = vmul.f32 %v1374, 0.01
    %v1395 = vmul.f32 %v1375, 0.01
    %v1396 = vmul.f32 %v1376, 0.01
    %v1397 = vmul.f32 %v1377, 0.01
    %v1398 = vmul.f32 %v1378, 0.01
    %v1399 = vmul.f32 %v1379, 0.01
    %v1400 = vmul.f32 %v1384, 0.01
    %v1401 = vsel %vm1385, %v1373, %v1393
    %v1402 = vsel %vm1386, %v1374, %v1394
    %v1403 = vsel %vm1387, %v1375, %v1395
    %v1404 = vsel %vm1388, %v1376, %v1396
    %v1405 = vsel %vm1389, %v1377, %v1397
    %v1406 = vsel %vm1390, %v1378, %v1398
    %v1407 = vsel %vm1391, %v1379, %v1399
    %v1408 = vsel %vm1392, %v1384, %v1400
    %1410 = vset.pattern.permute.xlu0 0
    %1411 = vperm.xlu0 %1410, %v90
    %v1412 = vpop.permute.xlu0 %1411
    %1415 = vset.pattern.permute.xlu0 0
    %1416 = vperm.xlu0 %1415, %v91
    %v1417 = vpop.permute.xlu0 %1416
    %1420 = vset.pattern.permute.xlu0 0
    %1421 = vperm.xlu0 %1420, %v92
    %v1422 = vpop.permute.xlu0 %1421
    %1425 = vset.pattern.permute.xlu0 0
    %1426 = vperm.xlu0 %1425, %v93
    %v1427 = vpop.permute.xlu0 %1426
    %1430 = vset.pattern.permute.xlu0 0
    %1431 = vperm.xlu0 %1430, %v94
    %v1432 = vpop.permute.xlu0 %1431
    %1435 = vset.pattern.permute.xlu0 0
    %1436 = vperm.xlu0 %1435, %v95
    %v1437 = vpop.permute.xlu0 %1436
    %1440 = vset.pattern.permute.xlu0 0
    %1441 = vperm.xlu0 %1440, %v96
    %v1442 = vpop.permute.xlu0 %1441
    %1445 = vset.pattern.permute.xlu0 0
    %1446 = vperm.xlu0 %1445, %v97
    %v1447 = vpop.permute.xlu0 %1446
    %v1449 = vmul.f32 %v1401, %v1412
    %v1450 = vmul.f32 %v1402, %v1417
    %v1451 = vmul.f32 %v1403, %v1422
    %v1452 = vmul.f32 %v1404, %v1427
    %v1453 = vmul.f32 %v1405, %v1432
    %v1454 = vmul.f32 %v1406, %v1437
    %v1455 = vmul.f32 %v1407, %v1442
    %v1456 = vmul.f32 %v1408, %v1447
    %v1457 = vsel %vm296, %v1449, 0.0
    %v1458 = vsel %vm296, %v1450, 0.0
    %v1459 = vadd.f32 %v1457, %v1458
    %v1460 = vsel %vm296, %v1451, 0.0
    %v1461 = vadd.f32 %v1459, %v1460
    %v1462 = vsel %vm296, %v1452, 0.0
    %v1463 = vadd.f32 %v1461, %v1462
    %v1464 = vsel %vm296, %v1453, 0.0
    %v1465 = vadd.f32 %v1463, %v1464
    %v1466 = vsel %vm296, %v1454, 0.0
    %v1467 = vadd.f32 %v1465, %v1466
    %v1468 = vsel %vm296, %v1455, 0.0
    %v1469 = vadd.f32 %v1467, %v1468
    %v1470 = vsel %vm296, %v1456, 0.0
    %v1471 = vadd.f32 %v1469, %v1470
    %v1472 = vrot.slane %v1471, 4
    %v1473 = vadd.f32 %v1471, %v1472
    %v1474 = vrot.slane %v1473, 2
    %v1475 = vadd.f32 %v1473, %v1474
    %v1476 = vrot.slane %v1475, 1
    %v1477 = vadd.f32 %v1475, %v1476
    %v1478 = vmul.f32 %v1401, %v1449
    %v1479 = vmul.f32 %v1402, %v1450
    %v1480 = vmul.f32 %v1403, %v1451
    %v1481 = vmul.f32 %v1404, %v1452
    %v1482 = vmul.f32 %v1405, %v1453
    %v1483 = vmul.f32 %v1406, %v1454
    %v1484 = vmul.f32 %v1407, %v1455
    %v1485 = vmul.f32 %v1408, %v1456
    %v1486 = vsel %vm296, %v1478, 0.0
    %v1487 = vsel %vm296, %v1479, 0.0
    %v1488 = vadd.f32 %v1486, %v1487
    %v1489 = vsel %vm296, %v1480, 0.0
    %v1490 = vadd.f32 %v1488, %v1489
    %v1491 = vsel %vm296, %v1481, 0.0
    %v1492 = vadd.f32 %v1490, %v1491
    %v1493 = vsel %vm296, %v1482, 0.0
    %v1494 = vadd.f32 %v1492, %v1493
    %v1495 = vsel %vm296, %v1483, 0.0
    %v1496 = vadd.f32 %v1494, %v1495
    %v1497 = vsel %vm296, %v1484, 0.0
    %v1498 = vadd.f32 %v1496, %v1497
    %v1499 = vsel %vm296, %v1485, 0.0
    %v1500 = vadd.f32 %v1498, %v1499
    %v1501 = vrot.slane %v1500, 4
    %v1502 = vadd.f32 %v1500, %v1501
    %v1503 = vrot.slane %v1502, 2
    %v1504 = vadd.f32 %v1502, %v1503
    %v1505 = vrot.slane %v1504, 1
    %v1506 = vadd.f32 %v1504, %v1505
    %v1507 = vrcp.pop 16.0
    %v1508 = vmul.f32 %v1477, %v1507
    %v1509 = vmul.f32 %v1506, %v1507
    %v1510 = vmul.f32 %v1508, %v1508
    %v1511 = vsub.f32 %v1509, %v1510
    %v1512 = vsub.f32 %v1401, %v1508
    %v1513 = vsub.f32 %v1402, %v1508
    %v1514 = vsub.f32 %v1403, %v1508
    %v1515 = vsub.f32 %v1404, %v1508
    %v1516 = vsub.f32 %v1405, %v1508
    %v1517 = vsub.f32 %v1406, %v1508
    %v1518 = vsub.f32 %v1407, %v1508
    %v1519 = vsub.f32 %v1408, %v1508
    %v1520 = vadd.f32 %v1511, 1e-05
    %v1521 = vrsqrt.pop %v1520
    %v1522 = vmul.f32 %v1512, %v1521
    %v1523 = vmul.f32 %v1513, %v1521
    %v1524 = vmul.f32 %v1514, %v1521
    %v1525 = vmul.f32 %v1515, %v1521
    %v1526 = vmul.f32 %v1516, %v1521
    %v1527 = vmul.f32 %v1517, %v1521
    %v1528 = vmul.f32 %v1518, %v1521
    %v1529 = vmul.f32 %v1519, %v1521
    %v1530 = vld [vmem:[%s5] sm:$0x1]
    %v1532 = vlaneseq
    %v1533 = vshrl.u32 %v1532, 7
    %v1534 = vsub.s32 0, %v1533
    %v1535 = vrot.slane %v1530, %v1534
    %v1537 = vmul.f32 %v1522, %v1535
    %v1538 = vmul.f32 %v1523, %v1535
    %v1539 = vmul.f32 %v1524, %v1535
    %v1540 = vmul.f32 %v1525, %v1535
    %v1541 = vmul.f32 %v1526, %v1535
    %v1542 = vmul.f32 %v1527, %v1535
    %v1543 = vmul.f32 %v1528, %v1535
    %v1544 = vmul.f32 %v1529, %v1535
    %v1545 = vld [vmem:[%s6] sm:$0x1]
    %v1547 = vlaneseq
    %v1548 = vshrl.u32 %v1547, 7
    %v1549 = vsub.s32 0, %v1548
    %v1550 = vrot.slane %v1545, %v1549
    %v1552 = vadd.f32 %v1537, %v1550
    %v1553 = vadd.f32 %v1538, %v1550
    %v1554 = vadd.f32 %v1539, %v1550
    %v1555 = vadd.f32 %v1540, %v1550
    %v1556 = vadd.f32 %v1541, %v1550
    %v1557 = vadd.f32 %v1542, %v1550
    %v1558 = vadd.f32 %v1543, %v1550
    %v1559 = vadd.f32 %v1544, %v1550
    %1560 = vst.msk [vmem:[#allocation2] sm:$0xff] %vm296, %v1552
    %1561 = vst.msk [vmem:[#allocation2 + $0x8] sm:$0xff] %vm296, %v1553
    %1562 = vst.msk [vmem:[#allocation2 + $0x10] sm:$0xff] %vm296, %v1554
    %1563 = vst.msk [vmem:[#allocation2 + $0x18] sm:$0xff] %vm296, %v1555
    %1564 = vst.msk [vmem:[#allocation2 + $0x20] sm:$0xff] %vm296, %v1556
    %1565 = vst.msk [vmem:[#allocation2 + $0x28] sm:$0xff] %vm296, %v1557
    %1566 = vst.msk [vmem:[#allocation2 + $0x30] sm:$0xff] %vm296, %v1558
    %1567 = vst.msk [vmem:[#allocation2 + $0x38] sm:$0xff] %vm296, %v1559
    %v1568 = vld [vmem:[#allocation2] sm:$0xff]
    %v1569 = vld [vmem:[#allocation2 + $0x8] sm:$0xff]
    %v1570 = vld [vmem:[#allocation2 + $0x10] sm:$0xff]
    %v1571 = vld [vmem:[#allocation2 + $0x18] sm:$0xff]
    %v1572 = vld [vmem:[#allocation2 + $0x20] sm:$0xff]
    %v1573 = vld [vmem:[#allocation2 + $0x28] sm:$0xff]
    %v1574 = vld [vmem:[#allocation2 + $0x30] sm:$0xff]
    %v1575 = vld [vmem:[#allocation2 + $0x38] sm:$0xff]
    %v1576 = vld [vmem:[#allocation7] sm:$0xff]
    %v1577 = vld [vmem:[#allocation7 + $0x8] sm:$0xff]
    %v1578 = vld [vmem:[#allocation7 + $0x10] sm:$0xff]
    %v1579 = vld [vmem:[#allocation7 + $0x18] sm:$0xff]
    %v1580 = vld [vmem:[#allocation7 + $0x20] sm:$0xff]
    %v1581 = vld [vmem:[#allocation7 + $0x28] sm:$0xff]
    %v1582 = vld [vmem:[#allocation7 + $0x30] sm:$0xff]
    %v1583 = vld [vmem:[#allocation7 + $0x38] sm:$0xff]
    %v1584 = vld [vmem:[#allocation7 + $0x40] sm:$0xff]
    %v1585 = vld [vmem:[#allocation7 + $0x48] sm:$0xff]
    %v1586 = vld [vmem:[#allocation7 + $0x50] sm:$0xff]
    %v1587 = vld [vmem:[#allocation7 + $0x58] sm:$0xff]
    %v1588 = vld [vmem:[#allocation7 + $0x60] sm:$0xff]
    %v1589 = vld [vmem:[#allocation7 + $0x68] sm:$0xff]
    %v1590 = vld [vmem:[#allocation7 + $0x70] sm:$0xff]
    %v1591 = vld [vmem:[#allocation7 + $0x78] sm:$0xff]
    %v1592 = vld [vmem:[%s8] sm:$0x3]
    %v1594 = vlaneseq
    %v1595 = vshrl.u32 %v1594, 7
    %v1596 = vsub.s32 0, %v1595
    %v1597 = vrot.slane %v1592, %v1596
    %v1598 = vlaneseq
    %v1599 = vshrl.u32 %v1598, 7
    %v1600 = vsub.s32 1, %v1599
    %v1601 = vrot.slane %v1592, %v1600
    %v1605 = vsel %vm296, %v1568, 0
    %v1608 = vsel %vm296, %v1569, 0
    %v1611 = vsel %vm296, %v1570, 0
    %v1614 = vsel %vm296, %v1571, 0
    %v1617 = vsel %vm296, %v1572, 0
    %v1620 = vsel %vm296, %v1573, 0
    %v1623 = vsel %vm296, %v1574, 0
    %v1626 = vsel %vm296, %v1575, 0
    %1628 = vmatprep.subr.mxu0 0.0
    %1629 = vmatpush1.msra.mxu0 0.0
    %1630 = vmatprep.subr.mxu0 0.0
    %1631 = vmatpush1.msra.mxu0 0.0
    %1632 = vmatprep.subr.mxu0 0.0
    %1633 = vmatpush1.msra.mxu0 0.0
    %1634 = vmatprep.subr.mxu0 0.0
    %1635 = vmatpush1.msra.mxu0 0.0
    %1636 = vmatprep.subr.mxu0 0.0
    %1637 = vmatpush1.msra.mxu0 0.0
    %1638 = vmatprep.subr.mxu0 0.0
    %1639 = vmatpush1.msra.mxu0 0.0
    %1640 = vmatprep.subr.mxu0 0.0
    %1641 = vmatpush1.msra.mxu0 0.0
    %1642 = vmatprep.subr.mxu0 0.0
    %1643 = vmatpush1.msra.mxu0 0.0
    %1644 = vmatprep.subr.mxu0 %v1591
    %1645 = vmatpush1.msra.mxu0 %v1590
    %1646 = vmatprep.subr.mxu0 %v1589
    %1647 = vmatpush1.msra.mxu0 %v1588
    %1648 = vmatprep.subr.mxu0 %v1587
    %1649 = vmatpush1.msra.mxu0 %v1586
    %1650 = vmatprep.subr.mxu0 %v1585
    %1651 = vmatpush1.msra.mxu0 %v1584
    %1652 = vmatprep.subr.mxu0 %v1583
    %1653 = vmatpush1.msra.mxu0 %v1582
    %1654 = vmatprep.subr.mxu0 %v1581
    %1655 = vmatpush1.msra.mxu0 %v1580
    %1656 = vmatprep.subr.mxu0 %v1579
    %1657 = vmatpush1.msra.mxu0 %v1578
    %1658 = vmatprep.subr.mxu0 %v1577
    %1659 = vmatpush1.msra.mxu0 %v1576
    %1660 = vmatprep.subr.mxu0 0.0
    %1661 = vmatpush2.msra.mxu0 0.0
    %1662 = vmatprep.subr.mxu0 0.0
    %1663 = vmatpush2.msra.mxu0 0.0
    %1664 = vmatprep.subr.mxu0 0.0
    %1665 = vmatpush2.msra.mxu0 0.0
    %1666 = vmatprep.subr.mxu0 0.0
    %1667 = vmatpush2.msra.mxu0 0.0
    %1668 = vmatprep.subr.mxu0 0.0
    %1669 = vmatpush2.msra.mxu0 0.0
    %1670 = vmatprep.subr.mxu0 0.0
    %1671 = vmatpush2.msra.mxu0 0.0
    %1672 = vmatprep.subr.mxu0 0.0
    %1673 = vmatpush2.msra.mxu0 0.0
    %1674 = vmatprep.subr.mxu0 0.0
    %1675 = vmatpush2.msra.mxu0 0.0
    %1676 = vmatprep.subr.mxu0 0.0
    %1677 = vmatpush2.msra.mxu0 0.0
    %1678 = vmatprep.subr.mxu0 0.0
    %1679 = vmatpush2.msra.mxu0 0.0
    %1680 = vmatprep.subr.mxu0 0.0
    %1681 = vmatpush2.msra.mxu0 0.0
    %1682 = vmatprep.subr.mxu0 0.0
    %1683 = vmatpush2.msra.mxu0 0.0
    %1684 = vmatprep.subr.mxu0 0.0
    %1685 = vmatpush2.msra.mxu0 0.0
    %1686 = vmatprep.subr.mxu0 0.0
    %1687 = vmatpush2.msra.mxu0 0.0
    %1688 = vmatprep.subr.mxu0 0.0
    %1689 = vmatpush2.msra.mxu0 0.0
    %1690 = vmatprep.subr.mxu0 0.0
    %1691 = vmatpush2.msra.mxu0 0.0
    %1692 = vmatprep.mubr.f32.mxu0 0.0
    %1693 = vmatmul.mubr.f32.gmra.mxu0 %v1605
    %v1694 = vpop.f32.mrf.mxu0
    %v1695 = vadd.f32 %v1597, %v1694
    %v1696 = vpop.f32.mrf.mxu0
    %v1697 = vadd.f32 %v1601, %v1696
    %1698 = vmatprep.mubr.f32.mxu0 0.0
    %1699 = vmatmul.mubr.f32.gmra.mxu0 %v1608
    %v1700 = vpop.f32.mrf.mxu0
    %v1701 = vadd.f32 %v1597, %v1700
    %v1702 = vpop.f32.mrf.mxu0
    %v1703 = vadd.f32 %v1601, %v1702
    %1704 = vmatprep.mubr.f32.mxu0 0.0
    %1705 = vmatmul.mubr.f32.gmra.mxu0 %v1611
    %v1706 = vpop.f32.mrf.mxu0
    %v1707 = vadd.f32 %v1597, %v1706
    %v1708 = vpop.f32.mrf.mxu0
    %v1709 = vadd.f32 %v1601, %v1708
    %1710 = vmatprep.mubr.f32.mxu0 0.0
    %1711 = vmatmul.mubr.f32.gmra.mxu0 %v1614
    %v1712 = vpop.f32.mrf.mxu0
    %v1713 = vadd.f32 %v1597, %v1712
    %v1714 = vpop.f32.mrf.mxu0
    %v1715 = vadd.f32 %v1601, %v1714
    %1716 = vmatprep.mubr.f32.mxu0 0.0
    %1717 = vmatmul.mubr.f32.gmra.mxu0 %v1617
    %v1718 = vpop.f32.mrf.mxu0
    %v1719 = vadd.f32 %v1597, %v1718
    %v1720 = vpop.f32.mrf.mxu0
    %v1721 = vadd.f32 %v1601, %v1720
    %1722 = vmatprep.mubr.f32.mxu0 0.0
    %1723 = vmatmul.mubr.f32.gmra.mxu0 %v1620
    %v1724 = vpop.f32.mrf.mxu0
    %v1725 = vadd.f32 %v1597, %v1724
    %v1726 = vpop.f32.mrf.mxu0
    %v1727 = vadd.f32 %v1601, %v1726
    %1728 = vmatprep.mubr.f32.mxu0 0.0
    %1729 = vmatmul.mubr.f32.gmra.mxu0 %v1623
    %v1730 = vpop.f32.mrf.mxu0
    %v1731 = vadd.f32 %v1597, %v1730
    %v1732 = vpop.f32.mrf.mxu0
    %v1733 = vadd.f32 %v1601, %v1732
    %1734 = vmatprep.mubr.f32.mxu0 0.0
    %1735 = vmatmul.mubr.f32.gmra.mxu0 %v1626
    %v1736 = vpop.f32.mrf.mxu0
    %v1737 = vadd.f32 %v1597, %v1736
    %v1738 = vpop.f32.mrf.mxu0
    %v1739 = vadd.f32 %v1601, %v1738
    %1740 = vdwg.mxu0
    %1741 = vst [vmem:[#allocation3] sm:$0xff] %v1695
    %1742 = vst [vmem:[#allocation3 + $0x8] sm:$0xff] %v1697
    %1743 = vst [vmem:[#allocation3 + $0x10] sm:$0xff] %v1701
    %1744 = vst [vmem:[#allocation3 + $0x18] sm:$0xff] %v1703
    %1745 = vst [vmem:[#allocation3 + $0x20] sm:$0xff] %v1707
    %1746 = vst [vmem:[#allocation3 + $0x28] sm:$0xff] %v1709
    %1747 = vst [vmem:[#allocation3 + $0x30] sm:$0xff] %v1713
    %1748 = vst [vmem:[#allocation3 + $0x38] sm:$0xff] %v1715
    %1749 = vst [vmem:[#allocation3 + $0x40] sm:$0xff] %v1719
    %1750 = vst [vmem:[#allocation3 + $0x48] sm:$0xff] %v1721
    %1751 = vst [vmem:[#allocation3 + $0x50] sm:$0xff] %v1725
    %1752 = vst [vmem:[#allocation3 + $0x58] sm:$0xff] %v1727
    %1753 = vst [vmem:[#allocation3 + $0x60] sm:$0xff] %v1731
    %1754 = vst [vmem:[#allocation3 + $0x68] sm:$0xff] %v1733
    %1755 = vst [vmem:[#allocation3 + $0x70] sm:$0xff] %v1737
    %1756 = vst [vmem:[#allocation3 + $0x78] sm:$0xff] %v1739
    %v1757 = vld [vmem:[%s9] sm:$0xff]
    %v1758 = vld [vmem:[%s9 + $0x8] sm:$0xff]
    %v1759 = vld [vmem:[%s9 + $0x10] sm:$0xff]
    %v1760 = vld [vmem:[%s9 + $0x18] sm:$0xff]
    %v1761 = vld [vmem:[%s9 + $0x20] sm:$0xff]
    %v1762 = vld [vmem:[%s9 + $0x28] sm:$0xff]
    %v1763 = vld [vmem:[%s9 + $0x30] sm:$0xff]
    %v1764 = vld [vmem:[%s9 + $0x38] sm:$0xff]
    %v1765 = vld [vmem:[%s9 + $0x40] sm:$0xff]
    %v1766 = vld [vmem:[%s9 + $0x48] sm:$0xff]
    %v1767 = vld [vmem:[%s9 + $0x50] sm:$0xff]
    %v1768 = vld [vmem:[%s9 + $0x58] sm:$0xff]
    %v1769 = vld [vmem:[%s9 + $0x60] sm:$0xff]
    %v1770 = vld [vmem:[%s9 + $0x68] sm:$0xff]
    %v1771 = vld [vmem:[%s9 + $0x70] sm:$0xff]
    %v1772 = vld [vmem:[%s9 + $0x78] sm:$0xff]
    %1773 = vmatprep.subr.mxu0 0.0
    %1774 = vmatpush1.msra.mxu0 0.0
    %1775 = vmatprep.subr.mxu0 0.0
    %1776 = vmatpush1.msra.mxu0 0.0
    %1777 = vmatprep.subr.mxu0 0.0
    %1778 = vmatpush1.msra.mxu0 0.0
    %1779 = vmatprep.subr.mxu0 0.0
    %1780 = vmatpush1.msra.mxu0 0.0
    %1781 = vmatprep.subr.mxu0 0.0
    %1782 = vmatpush1.msra.mxu0 0.0
    %1783 = vmatprep.subr.mxu0 0.0
    %1784 = vmatpush1.msra.mxu0 0.0
    %1785 = vmatprep.subr.mxu0 0.0
    %1786 = vmatpush1.msra.mxu0 0.0
    %1787 = vmatprep.subr.mxu0 0.0
    %1788 = vmatpush1.msra.mxu0 0.0
    %1789 = vmatprep.subr.mxu0 %v1772
    %1790 = vmatpush1.msra.mxu0 %v1771
    %1791 = vmatprep.subr.mxu0 %v1770
    %1792 = vmatpush1.msra.mxu0 %v1769
    %1793 = vmatprep.subr.mxu0 %v1768
    %1794 = vmatpush1.msra.mxu0 %v1767
    %1795 = vmatprep.subr.mxu0 %v1766
    %1796 = vmatpush1.msra.mxu0 %v1765
    %1797 = vmatprep.subr.mxu0 %v1764
    %1798 = vmatpush1.msra.mxu0 %v1763
    %1799 = vmatprep.subr.mxu0 %v1762
    %1800 = vmatpush1.msra.mxu0 %v1761
    %1801 = vmatprep.subr.mxu0 %v1760
    %1802 = vmatpush1.msra.mxu0 %v1759
    %1803 = vmatprep.subr.mxu0 %v1758
    %1804 = vmatpush1.msra.mxu0 %v1757
    %1805 = vmatprep.subr.mxu0 0.0
    %1806 = vmatpush2.msra.mxu0 0.0
    %1807 = vmatprep.subr.mxu0 0.0
    %1808 = vmatpush2.msra.mxu0 0.0
    %1809 = vmatprep.subr.mxu0 0.0
    %1810 = vmatpush2.msra.mxu0 0.0
    %1811 = vmatprep.subr.mxu0 0.0
    %1812 = vmatpush2.msra.mxu0 0.0
    %1813 = vmatprep.subr.mxu0 0.0
    %1814 = vmatpush2.msra.mxu0 0.0
    %1815 = vmatprep.subr.mxu0 0.0
    %1816 = vmatpush2.msra.mxu0 0.0
    %1817 = vmatprep.subr.mxu0 0.0
    %1818 = vmatpush2.msra.mxu0 0.0
    %1819 = vmatprep.subr.mxu0 0.0
    %1820 = vmatpush2.msra.mxu0 0.0
    %1821 = vmatprep.subr.mxu0 0.0
    %1822 = vmatpush2.msra.mxu0 0.0
    %1823 = vmatprep.subr.mxu0 0.0
    %1824 = vmatpush2.msra.mxu0 0.0
    %1825 = vmatprep.subr.mxu0 0.0
    %1826 = vmatpush2.msra.mxu0 0.0
    %1827 = vmatprep.subr.mxu0 0.0
    %1828 = vmatpush2.msra.mxu0 0.0
    %1829 = vmatprep.subr.mxu0 0.0
    %1830 = vmatpush2.msra.mxu0 0.0
    %1831 = vmatprep.subr.mxu0 0.0
    %1832 = vmatpush2.msra.mxu0 0.0
    %1833 = vmatprep.subr.mxu0 0.0
    %1834 = vmatpush2.msra.mxu0 0.0
    %1835 = vmatprep.subr.mxu0 0.0
    %1836 = vmatpush2.msra.mxu0 0.0
    %1837 = vmatprep.mubr.f32.mxu0 0.0
    %1838 = vmatmul.mubr.f32.gmra.mxu0 %v298
    %v1839 = vpop.f32.mrf.mxu0
    %v1840 = vadd.f32 0.0, %v1839
    %v1841 = vpop.f32.mrf.mxu0
    %v1842 = vadd.f32 0.0, %v1841
    %1843 = vdwg.mxu0
    %v1844 = vld [vmem:[#allocation3] sm:$0xff]
    %v1845 = vadd.f32 %v1844, %v1840
    %v1846 = vld [vmem:[#allocation3 + $0x78] sm:$0xff]
    %v1847 = vadd.f32 %v1846, %v1842
    %v1848 = vxor.u32 %v1845, 2147483648
    %v1849 = vmul.f32 %v1848, 1.442695
    %v1850 = vpow.pop %v1849
    %v1851 = vadd.f32 %v1850, 1.0
    %v1852 = vrcp.pop %v1851
    %v1853 = vmul.f32 1.0, %v1852
    %v1854 = vtanh.pop %v1845
    %v1855 = vmul.f32 %v1853, 0.0
    %1857 = vrot.lane.b32.xlu0 %v1854, 32
    %v1858 = vpop.permute.xlu0 %1857
    %v1860 = vmul.f32 %v1853, %v1858
    %1862 = vrot.lane.b32.xlu0 %v1860, 32
    %v1863 = vpop.permute.xlu0 %1862
    %v1865 = vadd.f32 %v1855, %v1863
    %v1866 = vtanh.pop %v1865
    %1868 = vrot.lane.b32.xlu0 %v1866, 32
    %v1869 = vpop.permute.xlu0 %1868
    %v1871 = vmul.f32 %v1853, %v1869
    %v1872 = vxor.u32 %v1847, 2147483648
    %v1873 = vmul.f32 %v1872, 1.442695
    %v1874 = vpow.pop %v1873
    %v1875 = vadd.f32 %v1874, 1.0
    %v1876 = vrcp.pop %v1875
    %v1877 = vmul.f32 1.0, %v1876
    %v1878 = vtanh.pop %v1847
    %v1879 = vmul.f32 %v1877, 0.0
    %1881 = vrot.lane.b32.xlu0 %v1878, 32
    %v1882 = vpop.permute.xlu0 %1881
    %v1884 = vmul.f32 %v1877, %v1882
    %1886 = vrot.lane.b32.xlu0 %v1884, 32
    %v1887 = vpop.permute.xlu0 %1886
    %v1889 = vadd.f32 %v1879, %v1887
    %v1890 = vtanh.pop %v1889
    %1892 = vrot.lane.b32.xlu0 %v1890, 32
    %v1893 = vpop.permute.xlu0 %1892
    %v1895 = vmul.f32 %v1877, %v1893
    %1897 = vrot.lane.b32.xlu0 %v1871, 64
    %v1898 = vpop.permute.xlu0 %1897
    %1901 = vrot.lane.b32.xlu0 %v1895, 96
    %v1902 = vpop.permute.xlu0 %1901
    %v1904 = vsel %vm431, %v1898, %v1902
    %v1906 = vsel %vm296, %v1904, 0
    %1908 = vmatprep.subr.mxu0 0.0
    %1909 = vmatpush1.msra.mxu0 0.0
    %1910 = vmatprep.subr.mxu0 0.0
    %1911 = vmatpush1.msra.mxu0 0.0
    %1912 = vmatprep.subr.mxu0 0.0
    %1913 = vmatpush1.msra.mxu0 0.0
    %1914 = vmatprep.subr.mxu0 0.0
    %1915 = vmatpush1.msra.mxu0 0.0
    %1916 = vmatprep.subr.mxu0 0.0
    %1917 = vmatpush1.msra.mxu0 0.0
    %1918 = vmatprep.subr.mxu0 0.0
    %1919 = vmatpush1.msra.mxu0 0.0
    %1920 = vmatprep.subr.mxu0 0.0
    %1921 = vmatpush1.msra.mxu0 0.0
    %1922 = vmatprep.subr.mxu0 0.0
    %1923 = vmatpush1.msra.mxu0 0.0
    %1924 = vmatprep.subr.mxu0 %v1772
    %1925 = vmatpush1.msra.mxu0 %v1771
    %1926 = vmatprep.subr.mxu0 %v1770
    %1927 = vmatpush1.msra.mxu0 %v1769
    %1928 = vmatprep.subr.mxu0 %v1768
    %1929 = vmatpush1.msra.mxu0 %v1767
    %1930 = vmatprep.subr.mxu0 %v1766
    %1931 = vmatpush1.msra.mxu0 %v1765
    %1932 = vmatprep.subr.mxu0 %v1764
    %1933 = vmatpush1.msra.mxu0 %v1763
    %1934 = vmatprep.subr.mxu0 %v1762
    %1935 = vmatpush1.msra.mxu0 %v1761
    %1936 = vmatprep.subr.mxu0 %v1760
    %1937 = vmatpush1.msra.mxu0 %v1759
    %1938 = vmatprep.subr.mxu0 %v1758
    %1939 = vmatpush1.msra.mxu0 %v1757
    %1940 = vmatprep.subr.mxu0 0.0
    %1941 = vmatpush2.msra.mxu0 0.0
    %1942 = vmatprep.subr.mxu0 0.0
    %1943 = vmatpush2.msra.mxu0 0.0
    %1944 = vmatprep.subr.mxu0 0.0
    %1945 = vmatpush2.msra.mxu0 0.0
    %1946 = vmatprep.subr.mxu0 0.0
    %1947 = vmatpush2.msra.mxu0 0.0
    %1948 = vmatprep.subr.mxu0 0.0
    %1949 = vmatpush2.msra.mxu0 0.0
    %1950 = vmatprep.subr.mxu0 0.0
    %1951 = vmatpush2.msra.mxu0 0.0
    %1952 = vmatprep.subr.mxu0 0.0
    %1953 = vmatpush2.msra.mxu0 0.0
    %1954 = vmatprep.subr.mxu0 0.0
    %1955 = vmatpush2.msra.mxu0 0.0
    %1956 = vmatprep.subr.mxu0 0.0
    %1957 = vmatpush2.msra.mxu0 0.0
    %1958 = vmatprep.subr.mxu0 0.0
    %1959 = vmatpush2.msra.mxu0 0.0
    %1960 = vmatprep.subr.mxu0 0.0
    %1961 = vmatpush2.msra.mxu0 0.0
    %1962 = vmatprep.subr.mxu0 0.0
    %1963 = vmatpush2.msra.mxu0 0.0
    %1964 = vmatprep.subr.mxu0 0.0
    %1965 = vmatpush2.msra.mxu0 0.0
    %1966 = vmatprep.subr.mxu0 0.0
    %1967 = vmatpush2.msra.mxu0 0.0
    %1968 = vmatprep.subr.mxu0 0.0
    %1969 = vmatpush2.msra.mxu0 0.0
    %1970 = vmatprep.subr.mxu0 0.0
    %1971 = vmatpush2.msra.mxu0 0.0
    %1972 = vmatprep.mubr.f32.mxu0 0.0
    %1973 = vmatmul.mubr.f32.gmra.mxu0 %v1906
    %v1974 = vpop.f32.mrf.mxu0
    %v1975 = vadd.f32 0.0, %v1974
    %v1976 = vpop.f32.mrf.mxu0
    %v1977 = vadd.f32 0.0, %v1976
    %1978 = vdwg.mxu0
    %v1979 = vld [vmem:[#allocation3 + $0x10] sm:$0xff]
    %v1980 = vadd.f32 %v1979, %v1975
    %v1981 = vld [vmem:[#allocation3 + $0x68] sm:$0xff]
    %v1982 = vadd.f32 %v1981, %v1977
    %v1983 = vxor.u32 %v1980, 2147483648
    %v1984 = vmul.f32 %v1983, 1.442695
    %v1985 = vpow.pop %v1984
    %v1986 = vadd.f32 %v1985, 1.0
    %v1987 = vrcp.pop %v1986
    %v1988 = vmul.f32 1.0, %v1987
    %v1989 = vtanh.pop %v1980
    %v1990 = vmul.f32 %v1988, %v1865
    %1992 = vrot.lane.b32.xlu0 %v1989, 32
    %v1993 = vpop.permute.xlu0 %1992
    %v1995 = vmul.f32 %v1988, %v1993
    %1997 = vrot.lane.b32.xlu0 %v1995, 32
    %v1998 = vpop.permute.xlu0 %1997
    %v2000 = vadd.f32 %v1990, %v1998
    %v2001 = vtanh.pop %v2000
    %2003 = vrot.lane.b32.xlu0 %v2001, 32
    %v2004 = vpop.permute.xlu0 %2003
    %v2006 = vmul.f32 %v1988, %v2004
    %v2007 = vxor.u32 %v1982, 2147483648
    %v2008 = vmul.f32 %v2007, 1.442695
    %v2009 = vpow.pop %v2008
    %v2010 = vadd.f32 %v2009, 1.0
    %v2011 = vrcp.pop %v2010
    %v2012 = vmul.f32 1.0, %v2011
    %v2013 = vtanh.pop %v1982
    %v2014 = vmul.f32 %v2012, %v1889
    %2016 = vrot.lane.b32.xlu0 %v2013, 32
    %v2017 = vpop.permute.xlu0 %2016
    %v2019 = vmul.f32 %v2012, %v2017
    %2021 = vrot.lane.b32.xlu0 %v2019, 32
    %v2022 = vpop.permute.xlu0 %2021
    %v2024 = vadd.f32 %v2014, %v2022
    %v2025 = vtanh.pop %v2024
    %2027 = vrot.lane.b32.xlu0 %v2025, 32
    %v2028 = vpop.permute.xlu0 %2027
    %v2030 = vmul.f32 %v2012, %v2028
    %2032 = vrot.lane.b32.xlu0 %v2006, 64
    %v2033 = vpop.permute.xlu0 %2032
    %2036 = vrot.lane.b32.xlu0 %v2030, 96
    %v2037 = vpop.permute.xlu0 %2036
    %v2039 = vsel %vm431, %v2033, %v2037
    %v2041 = vsel %vm296, %v2039, 0
    %2043 = vmatprep.subr.mxu0 0.0
    %2044 = vmatpush1.msra.mxu0 0.0
    %2045 = vmatprep.subr.mxu0 0.0
    %2046 = vmatpush1.msra.mxu0 0.0
    %2047 = vmatprep.subr.mxu0 0.0
    %2048 = vmatpush1.msra.mxu0 0.0
    %2049 = vmatprep.subr.mxu0 0.0
    %2050 = vmatpush1.msra.mxu0 0.0
    %2051 = vmatprep.subr.mxu0 0.0
    %2052 = vmatpush1.msra.mxu0 0.0
    %2053 = vmatprep.subr.mxu0 0.0
    %2054 = vmatpush1.msra.mxu0 0.0
    %2055 = vmatprep.subr.mxu0 0.0
    %2056 = vmatpush1.msra.mxu0 0.0
    %2057 = vmatprep.subr.mxu0 0.0
    %2058 = vmatpush1.msra.mxu0 0.0
    %2059 = vmatprep.subr.mxu0 %v1772
    %2060 = vmatpush1.msra.mxu0 %v1771
    %2061 = vmatprep.subr.mxu0 %v1770
    %2062 = vmatpush1.msra.mxu0 %v1769
    %2063 = vmatprep.subr.mxu0 %v1768
    %2064 = vmatpush1.msra.mxu0 %v1767
    %2065 = vmatprep.subr.mxu0 %v1766
    %2066 = vmatpush1.msra.mxu0 %v1765
    %2067 = vmatprep.subr.mxu0 %v1764
    %2068 = vmatpush1.msra.mxu0 %v1763
    %2069 = vmatprep.subr.mxu0 %v1762
    %2070 = vmatpush1.msra.mxu0 %v1761
    %2071 = vmatprep.subr.mxu0 %v1760
    %2072 = vmatpush1.msra.mxu0 %v1759
    %2073 = vmatprep.subr.mxu0 %v1758
    %2074 = vmatpush1.msra.mxu0 %v1757
    %2075 = vmatprep.subr.mxu0 0.0
    %2076 = vmatpush2.msra.mxu0 0.0
    %2077 = vmatprep.subr.mxu0 0.0
    %2078 = vmatpush2.msra.mxu0 0.0
    %2079 = vmatprep.subr.mxu0 0.0
    %2080 = vmatpush2.msra.mxu0 0.0
    %2081 = vmatprep.subr.mxu0 0.0
    %2082 = vmatpush2.msra.mxu0 0.0
    %2083 = vmatprep.subr.mxu0 0.0
    %2084 = vmatpush2.msra.mxu0 0.0
    %2085 = vmatprep.subr.mxu0 0.0
    %2086 = vmatpush2.msra.mxu0 0.0
    %2087 = vmatprep.subr.mxu0 0.0
    %2088 = vmatpush2.msra.mxu0 0.0
    %2089 = vmatprep.subr.mxu0 0.0
    %2090 = vmatpush2.msra.mxu0 0.0
    %2091 = vmatprep.subr.mxu0 0.0
    %2092 = vmatpush2.msra.mxu0 0.0
    %2093 = vmatprep.subr.mxu0 0.0
    %2094 = vmatpush2.msra.mxu0 0.0
    %2095 = vmatprep.subr.mxu0 0.0
    %2096 = vmatpush2.msra.mxu0 0.0
    %2097 = vmatprep.subr.mxu0 0.0
    %2098 = vmatpush2.msra.mxu0 0.0
    %2099 = vmatprep.subr.mxu0 0.0
    %2100 = vmatpush2.msra.mxu0 0.0
    %2101 = vmatprep.subr.mxu0 0.0
    %2102 = vmatpush2.msra.mxu0 0.0
    %2103 = vmatprep.subr.mxu0 0.0
    %2104 = vmatpush2.msra.mxu0 0.0
    %2105 = vmatprep.subr.mxu0 0.0
    %2106 = vmatpush2.msra.mxu0 0.0
    %2107 = vmatprep.mubr.f32.mxu0 0.0
    %2108 = vmatmul.mubr.f32.gmra.mxu0 %v2041
    %v2109 = vpop.f32.mrf.mxu0
    %v2110 = vadd.f32 0.0, %v2109
    %v2111 = vpop.f32.mrf.mxu0
    %v2112 = vadd.f32 0.0, %v2111
    %2113 = vdwg.mxu0
    %v2114 = vld [vmem:[#allocation3 + $0x20] sm:$0xff]
    %v2115 = vadd.f32 %v2114, %v2110
    %v2116 = vld [vmem:[#allocation3 + $0x58] sm:$0xff]
    %v2117 = vadd.f32 %v2116, %v2112
    %v2118 = vxor.u32 %v2115, 2147483648
    %v2119 = vmul.f32 %v2118, 1.442695
    %v2120 = vpow.pop %v2119
    %v2121 = vadd.f32 %v2120, 1.0
    %v2122 = vrcp.pop %v2121
    %v2123 = vmul.f32 1.0, %v2122
    %v2124 = vtanh.pop %v2115
    %v2125 = vmul.f32 %v2123, %v2000
    %2127 = vrot.lane.b32.xlu0 %v2124, 32
    %v2128 = vpop.permute.xlu0 %2127
    %v2130 = vmul.f32 %v2123, %v2128
    %2132 = vrot.lane.b32.xlu0 %v2130, 32
    %v2133 = vpop.permute.xlu0 %2132
    %v2135 = vadd.f32 %v2125, %v2133
    %v2136 = vtanh.pop %v2135
    %2138 = vrot.lane.b32.xlu0 %v2136, 32
    %v2139 = vpop.permute.xlu0 %2138
    %v2141 = vmul.f32 %v2123, %v2139
    %v2142 = vxor.u32 %v2117, 2147483648
    %v2143 = vmul.f32 %v2142, 1.442695
    %v2144 = vpow.pop %v2143
    %v2145 = vadd.f32 %v2144, 1.0
    %v2146 = vrcp.pop %v2145
    %v2147 = vmul.f32 1.0, %v2146
    %v2148 = vtanh.pop %v2117
    %v2149 = vmul.f32 %v2147, %v2024
    %2151 = vrot.lane.b32.xlu0 %v2148, 32
    %v2152 = vpop.permute.xlu0 %2151
    %v2154 = vmul.f32 %v2147, %v2152
    %2156 = vrot.lane.b32.xlu0 %v2154, 32
    %v2157 = vpop.permute.xlu0 %2156
    %v2159 = vadd.f32 %v2149, %v2157
    %v2160 = vtanh.pop %v2159
    %2162 = vrot.lane.b32.xlu0 %v2160, 32
    %v2163 = vpop.permute.xlu0 %2162
    %v2165 = vmul.f32 %v2147, %v2163
    %2167 = vrot.lane.b32.xlu0 %v2141, 64
    %v2168 = vpop.permute.xlu0 %2167
    %2171 = vrot.lane.b32.xlu0 %v2165, 96
    %v2172 = vpop.permute.xlu0 %2171
    %v2174 = vsel %vm431, %v2168, %v2172
    %v2176 = vsel %vm296, %v2174, 0
    %2178 = vmatprep.subr.mxu0 0.0
    %2179 = vmatpush1.msra.mxu0 0.0
    %2180 = vmatprep.subr.mxu0 0.0
    %2181 = vmatpush1.msra.mxu0 0.0
    %2182 = vmatprep.subr.mxu0 0.0
    %2183 = vmatpush1.msra.mxu0 0.0
    %2184 = vmatprep.subr.mxu0 0.0
    %2185 = vmatpush1.msra.mxu0 0.0
    %2186 = vmatprep.subr.mxu0 0.0
    %2187 = vmatpush1.msra.mxu0 0.0
    %2188 = vmatprep.subr.mxu0 0.0
    %2189 = vmatpush1.msra.mxu0 0.0
    %2190 = vmatprep.subr.mxu0 0.0
    %2191 = vmatpush1.msra.mxu0 0.0
    %2192 = vmatprep.subr.mxu0 0.0
    %2193 = vmatpush1.msra.mxu0 0.0
    %2194 = vmatprep.subr.mxu0 %v1772
    %2195 = vmatpush1.msra.mxu0 %v1771
    %2196 = vmatprep.subr.mxu0 %v1770
    %2197 = vmatpush1.msra.mxu0 %v1769
    %2198 = vmatprep.subr.mxu0 %v1768
    %2199 = vmatpush1.msra.mxu0 %v1767
    %2200 = vmatprep.subr.mxu0 %v1766
    %2201 = vmatpush1.msra.mxu0 %v1765
    %2202 = vmatprep.subr.mxu0 %v1764
    %2203 = vmatpush1.msra.mxu0 %v1763
    %2204 = vmatprep.subr.mxu0 %v1762
    %2205 = vmatpush1.msra.mxu0 %v1761
    %2206 = vmatprep.subr.mxu0 %v1760
    %2207 = vmatpush1.msra.mxu0 %v1759
    %2208 = vmatprep.subr.mxu0 %v1758
    %2209 = vmatpush1.msra.mxu0 %v1757
    %2210 = vmatprep.subr.mxu0 0.0
    %2211 = vmatpush2.msra.mxu0 0.0
    %2212 = vmatprep.subr.mxu0 0.0
    %2213 = vmatpush2.msra.mxu0 0.0
    %2214 = vmatprep.subr.mxu0 0.0
    %2215 = vmatpush2.msra.mxu0 0.0
    %2216 = vmatprep.subr.mxu0 0.0
    %2217 = vmatpush2.msra.mxu0 0.0
    %2218 = vmatprep.subr.mxu0 0.0
    %2219 = vmatpush2.msra.mxu0 0.0
    %2220 = vmatprep.subr.mxu0 0.0
    %2221 = vmatpush2.msra.mxu0 0.0
    %2222 = vmatprep.subr.mxu0 0.0
    %2223 = vmatpush2.msra.mxu0 0.0
    %2224 = vmatprep.subr.mxu0 0.0
    %2225 = vmatpush2.msra.mxu0 0.0
    %2226 = vmatprep.subr.mxu0 0.0
    %2227 = vmatpush2.msra.mxu0 0.0
    %2228 = vmatprep.subr.mxu0 0.0
    %2229 = vmatpush2.msra.mxu0 0.0
    %2230 = vmatprep.subr.mxu0 0.0
    %2231 = vmatpush2.msra.mxu0 0.0
    %2232 = vmatprep.subr.mxu0 0.0
    %2233 = vmatpush2.msra.mxu0 0.0
    %2234 = vmatprep.subr.mxu0 0.0
    %2235 = vmatpush2.msra.mxu0 0.0
    %2236 = vmatprep.subr.mxu0 0.0
    %2237 = vmatpush2.msra.mxu0 0.0
    %2238 = vmatprep.subr.mxu0 0.0
    %2239 = vmatpush2.msra.mxu0 0.0
    %2240 = vmatprep.subr.mxu0 0.0
    %2241 = vmatpush2.msra.mxu0 0.0
    %2242 = vmatprep.mubr.f32.mxu0 0.0
    %2243 = vmatmul.mubr.f32.gmra.mxu0 %v2176
    %v2244 = vpop.f32.mrf.mxu0
    %v2245 = vadd.f32 0.0, %v2244
    %v2246 = vpop.f32.mrf.mxu0
    %v2247 = vadd.f32 0.0, %v2246
    %2248 = vdwg.mxu0
    %v2249 = vld [vmem:[#allocation3 + $0x30] sm:$0xff]
    %v2250 = vadd.f32 %v2249, %v2245
    %v2251 = vld [vmem:[#allocation3 + $0x48] sm:$0xff]
    %v2252 = vadd.f32 %v2251, %v2247
    %v2253 = vxor.u32 %v2250, 2147483648
    %v2254 = vmul.f32 %v2253, 1.442695
    %v2255 = vpow.pop %v2254
    %v2256 = vadd.f32 %v2255, 1.0
    %v2257 = vrcp.pop %v2256
    %v2258 = vmul.f32 1.0, %v2257
    %v2259 = vtanh.pop %v2250
    %v2260 = vmul.f32 %v2258, %v2135
    %2262 = vrot.lane.b32.xlu0 %v2259, 32
    %v2263 = vpop.permute.xlu0 %2262
    %v2265 = vmul.f32 %v2258, %v2263
    %2267 = vrot.lane.b32.xlu0 %v2265, 32
    %v2268 = vpop.permute.xlu0 %2267
    %v2270 = vadd.f32 %v2260, %v2268
    %v2271 = vtanh.pop %v2270
    %2273 = vrot.lane.b32.xlu0 %v2271, 32
    %v2274 = vpop.permute.xlu0 %2273
    %v2276 = vmul.f32 %v2258, %v2274
    %v2277 = vxor.u32 %v2252, 2147483648
    %v2278 = vmul.f32 %v2277, 1.442695
    %v2279 = vpow.pop %v2278
    %v2280 = vadd.f32 %v2279, 1.0
    %v2281 = vrcp.pop %v2280
    %v2282 = vmul.f32 1.0, %v2281
    %v2283 = vtanh.pop %v2252
    %v2284 = vmul.f32 %v2282, %v2159
    %2286 = vrot.lane.b32.xlu0 %v2283, 32
    %v2287 = vpop.permute.xlu0 %2286
    %v2289 = vmul.f32 %v2282, %v2287
    %2291 = vrot.lane.b32.xlu0 %v2289, 32
    %v2292 = vpop.permute.xlu0 %2291
    %v2294 = vadd.f32 %v2284, %v2292
    %v2295 = vtanh.pop %v2294
    %2297 = vrot.lane.b32.xlu0 %v2295, 32
    %v2298 = vpop.permute.xlu0 %2297
    %v2300 = vmul.f32 %v2282, %v2298
    %2302 = vrot.lane.b32.xlu0 %v2276, 64
    %v2303 = vpop.permute.xlu0 %2302
    %2306 = vrot.lane.b32.xlu0 %v2300, 96
    %v2307 = vpop.permute.xlu0 %2306
    %v2309 = vsel %vm431, %v2303, %v2307
    %v2311 = vsel %vm296, %v2309, 0
    %2313 = vmatprep.subr.mxu0 0.0
    %2314 = vmatpush1.msra.mxu0 0.0
    %2315 = vmatprep.subr.mxu0 0.0
    %2316 = vmatpush1.msra.mxu0 0.0
    %2317 = vmatprep.subr.mxu0 0.0
    %2318 = vmatpush1.msra.mxu0 0.0
    %2319 = vmatprep.subr.mxu0 0.0
    %2320 = vmatpush1.msra.mxu0 0.0
    %2321 = vmatprep.subr.mxu0 0.0
    %2322 = vmatpush1.msra.mxu0 0.0
    %2323 = vmatprep.subr.mxu0 0.0
    %2324 = vmatpush1.msra.mxu0 0.0
    %2325 = vmatprep.subr.mxu0 0.0
    %2326 = vmatpush1.msra.mxu0 0.0
    %2327 = vmatprep.subr.mxu0 0.0
    %2328 = vmatpush1.msra.mxu0 0.0
    %2329 = vmatprep.subr.mxu0 %v1772
    %2330 = vmatpush1.msra.mxu0 %v1771
    %2331 = vmatprep.subr.mxu0 %v1770
    %2332 = vmatpush1.msra.mxu0 %v1769
    %2333 = vmatprep.subr.mxu0 %v1768
    %2334 = vmatpush1.msra.mxu0 %v1767
    %2335 = vmatprep.subr.mxu0 %v1766
    %2336 = vmatpush1.msra.mxu0 %v1765
    %2337 = vmatprep.subr.mxu0 %v1764
    %2338 = vmatpush1.msra.mxu0 %v1763
    %2339 = vmatprep.subr.mxu0 %v1762
    %2340 = vmatpush1.msra.mxu0 %v1761
    %2341 = vmatprep.subr.mxu0 %v1760
    %2342 = vmatpush1.msra.mxu0 %v1759
    %2343 = vmatprep.subr.mxu0 %v1758
    %2344 = vmatpush1.msra.mxu0 %v1757
    %2345 = vmatprep.subr.mxu0 0.0
    %2346 = vmatpush2.msra.mxu0 0.0
    %2347 = vmatprep.subr.mxu0 0.0
    %2348 = vmatpush2.msra.mxu0 0.0
    %2349 = vmatprep.subr.mxu0 0.0
    %2350 = vmatpush2.msra.mxu0 0.0
    %2351 = vmatprep.subr.mxu0 0.0
    %2352 = vmatpush2.msra.mxu0 0.0
    %2353 = vmatprep.subr.mxu0 0.0
    %2354 = vmatpush2.msra.mxu0 0.0
    %2355 = vmatprep.subr.mxu0 0.0
    %2356 = vmatpush2.msra.mxu0 0.0
    %2357 = vmatprep.subr.mxu0 0.0
    %2358 = vmatpush2.msra.mxu0 0.0
    %2359 = vmatprep.subr.mxu0 0.0
    %2360 = vmatpush2.msra.mxu0 0.0
    %2361 = vmatprep.subr.mxu0 0.0
    %2362 = vmatpush2.msra.mxu0 0.0
    %2363 = vmatprep.subr.mxu0 0.0
    %2364 = vmatpush2.msra.mxu0 0.0
    %2365 = vmatprep.subr.mxu0 0.0
    %2366 = vmatpush2.msra.mxu0 0.0
    %2367 = vmatprep.subr.mxu0 0.0
    %2368 = vmatpush2.msra.mxu0 0.0
    %2369 = vmatprep.subr.mxu0 0.0
    %2370 = vmatpush2.msra.mxu0 0.0
    %2371 = vmatprep.subr.mxu0 0.0
    %2372 = vmatpush2.msra.mxu0 0.0
    %2373 = vmatprep.subr.mxu0 0.0
    %2374 = vmatpush2.msra.mxu0 0.0
    %2375 = vmatprep.subr.mxu0 0.0
    %2376 = vmatpush2.msra.mxu0 0.0
    %2377 = vmatprep.mubr.f32.mxu0 0.0
    %2378 = vmatmul.mubr.f32.gmra.mxu0 %v2311
    %v2379 = vpop.f32.mrf.mxu0
    %v2380 = vadd.f32 0.0, %v2379
    %v2381 = vpop.f32.mrf.mxu0
    %v2382 = vadd.f32 0.0, %v2381
    %2383 = vdwg.mxu0
    %v2384 = vld [vmem:[#allocation3 + $0x40] sm:$0xff]
    %v2385 = vadd.f32 %v2384, %v2380
    %v2386 = vld [vmem:[#allocation3 + $0x38] sm:$0xff]
    %v2387 = vadd.f32 %v2386, %v2382
    %v2388 = vxor.u32 %v2385, 2147483648
    %v2389 = vmul.f32 %v2388, 1.442695
    %v2390 = vpow.pop %v2389
    %v2391 = vadd.f32 %v2390, 1.0
    %v2392 = vrcp.pop %v2391
    %v2393 = vmul.f32 1.0, %v2392
    %v2394 = vtanh.pop %v2385
    %v2395 = vmul.f32 %v2393, %v2270
    %2397 = vrot.lane.b32.xlu0 %v2394, 32
    %v2398 = vpop.permute.xlu0 %2397
    %v2400 = vmul.f32 %v2393, %v2398
    %2402 = vrot.lane.b32.xlu0 %v2400, 32
    %v2403 = vpop.permute.xlu0 %2402
    %v2405 = vadd.f32 %v2395, %v2403
    %v2406 = vtanh.pop %v2405
    %2408 = vrot.lane.b32.xlu0 %v2406, 32
    %v2409 = vpop.permute.xlu0 %2408
    %v2411 = vmul.f32 %v2393, %v2409
    %v2412 = vxor.u32 %v2387, 2147483648
    %v2413 = vmul.f32 %v2412, 1.442695
    %v2414 = vpow.pop %v2413
    %v2415 = vadd.f32 %v2414, 1.0
    %v2416 = vrcp.pop %v2415
    %v2417 = vmul.f32 1.0, %v2416
    %v2418 = vtanh.pop %v2387
    %v2419 = vmul.f32 %v2417, %v2294
    %2421 = vrot.lane.b32.xlu0 %v2418, 32
    %v2422 = vpop.permute.xlu0 %2421
    %v2424 = vmul.f32 %v2417, %v2422
    %2426 = vrot.lane.b32.xlu0 %v2424, 32
    %v2427 = vpop.permute.xlu0 %2426
    %v2429 = vadd.f32 %v2419, %v2427
    %v2430 = vtanh.pop %v2429
    %2432 = vrot.lane.b32.xlu0 %v2430, 32
    %v2433 = vpop.permute.xlu0 %2432
    %v2435 = vmul.f32 %v2417, %v2433
    %2437 = vrot.lane.b32.xlu0 %v2411, 64
    %v2438 = vpop.permute.xlu0 %2437
    %2441 = vrot.lane.b32.xlu0 %v2435, 96
    %v2442 = vpop.permute.xlu0 %2441
    %v2444 = vsel %vm431, %v2438, %v2442
    %v2446 = vsel %vm296, %v2444, 0
    %2448 = vmatprep.subr.mxu0 0.0
    %2449 = vmatpush1.msra.mxu0 0.0
    %2450 = vmatprep.subr.mxu0 0.0
    %2451 = vmatpush1.msra.mxu0 0.0
    %2452 = vmatprep.subr.mxu0 0.0
    %2453 = vmatpush1.msra.mxu0 0.0
    %2454 = vmatprep.subr.mxu0 0.0
    %2455 = vmatpush1.msra.mxu0 0.0
    %2456 = vmatprep.subr.mxu0 0.0
    %2457 = vmatpush1.msra.mxu0 0.0
    %2458 = vmatprep.subr.mxu0 0.0
    %2459 = vmatpush1.msra.mxu0 0.0
    %2460 = vmatprep.subr.mxu0 0.0
    %2461 = vmatpush1.msra.mxu0 0.0
    %2462 = vmatprep.subr.mxu0 0.0
    %2463 = vmatpush1.msra.mxu0 0.0
    %2464 = vmatprep.subr.mxu0 %v1772
    %2465 = vmatpush1.msra.mxu0 %v1771
    %2466 = vmatprep.subr.mxu0 %v1770
    %2467 = vmatpush1.msra.mxu0 %v1769
    %2468 = vmatprep.subr.mxu0 %v1768
    %2469 = vmatpush1.msra.mxu0 %v1767
    %2470 = vmatprep.subr.mxu0 %v1766
    %2471 = vmatpush1.msra.mxu0 %v1765
    %2472 = vmatprep.subr.mxu0 %v1764
    %2473 = vmatpush1.msra.mxu0 %v1763
    %2474 = vmatprep.subr.mxu0 %v1762
    %2475 = vmatpush1.msra.mxu0 %v1761
    %2476 = vmatprep.subr.mxu0 %v1760
    %2477 = vmatpush1.msra.mxu0 %v1759
    %2478 = vmatprep.subr.mxu0 %v1758
    %2479 = vmatpush1.msra.mxu0 %v1757
    %2480 = vmatprep.subr.mxu0 0.0
    %2481 = vmatpush2.msra.mxu0 0.0
    %2482 = vmatprep.subr.mxu0 0.0
    %2483 = vmatpush2.msra.mxu0 0.0
    %2484 = vmatprep.subr.mxu0 0.0
    %2485 = vmatpush2.msra.mxu0 0.0
    %2486 = vmatprep.subr.mxu0 0.0
    %2487 = vmatpush2.msra.mxu0 0.0
    %2488 = vmatprep.subr.mxu0 0.0
    %2489 = vmatpush2.msra.mxu0 0.0
    %2490 = vmatprep.subr.mxu0 0.0
    %2491 = vmatpush2.msra.mxu0 0.0
    %2492 = vmatprep.subr.mxu0 0.0
    %2493 = vmatpush2.msra.mxu0 0.0
    %2494 = vmatprep.subr.mxu0 0.0
    %2495 = vmatpush2.msra.mxu0 0.0
    %2496 = vmatprep.subr.mxu0 0.0
    %2497 = vmatpush2.msra.mxu0 0.0
    %2498 = vmatprep.subr.mxu0 0.0
    %2499 = vmatpush2.msra.mxu0 0.0
    %2500 = vmatprep.subr.mxu0 0.0
    %2501 = vmatpush2.msra.mxu0 0.0
    %2502 = vmatprep.subr.mxu0 0.0
    %2503 = vmatpush2.msra.mxu0 0.0
    %2504 = vmatprep.subr.mxu0 0.0
    %2505 = vmatpush2.msra.mxu0 0.0
    %2506 = vmatprep.subr.mxu0 0.0
    %2507 = vmatpush2.msra.mxu0 0.0
    %2508 = vmatprep.subr.mxu0 0.0
    %2509 = vmatpush2.msra.mxu0 0.0
    %2510 = vmatprep.subr.mxu0 0.0
    %2511 = vmatpush2.msra.mxu0 0.0
    %2512 = vmatprep.mubr.f32.mxu0 0.0
    %2513 = vmatmul.mubr.f32.gmra.mxu0 %v2446
    %v2514 = vpop.f32.mrf.mxu0
    %v2515 = vadd.f32 0.0, %v2514
    %v2516 = vpop.f32.mrf.mxu0
    %v2517 = vadd.f32 0.0, %v2516
    %2518 = vdwg.mxu0
    %v2519 = vld [vmem:[#allocation3 + $0x50] sm:$0xff]
    %v2520 = vadd.f32 %v2519, %v2515
    %v2521 = vld [vmem:[#allocation3 + $0x28] sm:$0xff]
    %v2522 = vadd.f32 %v2521, %v2517
    %v2523 = vxor.u32 %v2520, 2147483648
    %v2524 = vmul.f32 %v2523, 1.442695
    %v2525 = vpow.pop %v2524
    %v2526 = vadd.f32 %v2525, 1.0
    %v2527 = vrcp.pop %v2526
    %v2528 = vmul.f32 1.0, %v2527
    %v2529 = vtanh.pop %v2520
    %v2530 = vmul.f32 %v2528, %v2405
    %2532 = vrot.lane.b32.xlu0 %v2529, 32
    %v2533 = vpop.permute.xlu0 %2532
    %v2535 = vmul.f32 %v2528, %v2533
    %2537 = vrot.lane.b32.xlu0 %v2535, 32
    %v2538 = vpop.permute.xlu0 %2537
    %v2540 = vadd.f32 %v2530, %v2538
    %v2541 = vtanh.pop %v2540
    %2543 = vrot.lane.b32.xlu0 %v2541, 32
    %v2544 = vpop.permute.xlu0 %2543
    %v2546 = vmul.f32 %v2528, %v2544
    %v2547 = vxor.u32 %v2522, 2147483648
    %v2548 = vmul.f32 %v2547, 1.442695
    %v2549 = vpow.pop %v2548
    %v2550 = vadd.f32 %v2549, 1.0
    %v2551 = vrcp.pop %v2550
    %v2552 = vmul.f32 1.0, %v2551
    %v2553 = vtanh.pop %v2522
    %v2554 = vmul.f32 %v2552, %v2429
    %2556 = vrot.lane.b32.xlu0 %v2553, 32
    %v2557 = vpop.permute.xlu0 %2556
    %v2559 = vmul.f32 %v2552, %v2557
    %2561 = vrot.lane.b32.xlu0 %v2559, 32
    %v2562 = vpop.permute.xlu0 %2561
    %v2564 = vadd.f32 %v2554, %v2562
    %v2565 = vtanh.pop %v2564
    %2567 = vrot.lane.b32.xlu0 %v2565, 32
    %v2568 = vpop.permute.xlu0 %2567
    %v2570 = vmul.f32 %v2552, %v2568
    %2572 = vrot.lane.b32.xlu0 %v2546, 64
    %v2573 = vpop.permute.xlu0 %2572
    %2576 = vrot.lane.b32.xlu0 %v2570, 96
    %v2577 = vpop.permute.xlu0 %2576
    %v2579 = vsel %vm431, %v2573, %v2577
    %v2581 = vsel %vm296, %v2579, 0
    %2583 = vmatprep.subr.mxu0 0.0
    %2584 = vmatpush1.msra.mxu0 0.0
    %2585 = vmatprep.subr.mxu0 0.0
    %2586 = vmatpush1.msra.mxu0 0.0
    %2587 = vmatprep.subr.mxu0 0.0
    %2588 = vmatpush1.msra.mxu0 0.0
    %2589 = vmatprep.subr.mxu0 0.0
    %2590 = vmatpush1.msra.mxu0 0.0
    %2591 = vmatprep.subr.mxu0 0.0
    %2592 = vmatpush1.msra.mxu0 0.0
    %2593 = vmatprep.subr.mxu0 0.0
    %2594 = vmatpush1.msra.mxu0 0.0
    %2595 = vmatprep.subr.mxu0 0.0
    %2596 = vmatpush1.msra.mxu0 0.0
    %2597 = vmatprep.subr.mxu0 0.0
    %2598 = vmatpush1.msra.mxu0 0.0
    %2599 = vmatprep.subr.mxu0 %v1772
    %2600 = vmatpush1.msra.mxu0 %v1771
    %2601 = vmatprep.subr.mxu0 %v1770
    %2602 = vmatpush1.msra.mxu0 %v1769
    %2603 = vmatprep.subr.mxu0 %v1768
    %2604 = vmatpush1.msra.mxu0 %v1767
    %2605 = vmatprep.subr.mxu0 %v1766
    %2606 = vmatpush1.msra.mxu0 %v1765
    %2607 = vmatprep.subr.mxu0 %v1764
    %2608 = vmatpush1.msra.mxu0 %v1763
    %2609 = vmatprep.subr.mxu0 %v1762
    %2610 = vmatpush1.msra.mxu0 %v1761
    %2611 = vmatprep.subr.mxu0 %v1760
    %2612 = vmatpush1.msra.mxu0 %v1759
    %2613 = vmatprep.subr.mxu0 %v1758
    %2614 = vmatpush1.msra.mxu0 %v1757
    %2615 = vmatprep.subr.mxu0 0.0
    %2616 = vmatpush2.msra.mxu0 0.0
    %2617 = vmatprep.subr.mxu0 0.0
    %2618 = vmatpush2.msra.mxu0 0.0
    %2619 = vmatprep.subr.mxu0 0.0
    %2620 = vmatpush2.msra.mxu0 0.0
    %2621 = vmatprep.subr.mxu0 0.0
    %2622 = vmatpush2.msra.mxu0 0.0
    %2623 = vmatprep.subr.mxu0 0.0
    %2624 = vmatpush2.msra.mxu0 0.0
    %2625 = vmatprep.subr.mxu0 0.0
    %2626 = vmatpush2.msra.mxu0 0.0
    %2627 = vmatprep.subr.mxu0 0.0
    %2628 = vmatpush2.msra.mxu0 0.0
    %2629 = vmatprep.subr.mxu0 0.0
    %2630 = vmatpush2.msra.mxu0 0.0
    %2631 = vmatprep.subr.mxu0 0.0
    %2632 = vmatpush2.msra.mxu0 0.0
    %2633 = vmatprep.subr.mxu0 0.0
    %2634 = vmatpush2.msra.mxu0 0.0
    %2635 = vmatprep.subr.mxu0 0.0
    %2636 = vmatpush2.msra.mxu0 0.0
    %2637 = vmatprep.subr.mxu0 0.0
    %2638 = vmatpush2.msra.mxu0 0.0
    %2639 = vmatprep.subr.mxu0 0.0
    %2640 = vmatpush2.msra.mxu0 0.0
    %2641 = vmatprep.subr.mxu0 0.0
    %2642 = vmatpush2.msra.mxu0 0.0
    %2643 = vmatprep.subr.mxu0 0.0
    %2644 = vmatpush2.msra.mxu0 0.0
    %2645 = vmatprep.subr.mxu0 0.0
    %2646 = vmatpush2.msra.mxu0 0.0
    %2647 = vmatprep.mubr.f32.mxu0 0.0
    %2648 = vmatmul.mubr.f32.gmra.mxu0 %v2581
    %v2649 = vpop.f32.mrf.mxu0
    %v2650 = vadd.f32 0.0, %v2649
    %v2651 = vpop.f32.mrf.mxu0
    %v2652 = vadd.f32 0.0, %v2651
    %2653 = vdwg.mxu0
    %v2654 = vld [vmem:[#allocation3 + $0x60] sm:$0xff]
    %v2655 = vadd.f32 %v2654, %v2650
    %v2656 = vld [vmem:[#allocation3 + $0x18] sm:$0xff]
    %v2657 = vadd.f32 %v2656, %v2652
    %v2658 = vxor.u32 %v2655, 2147483648
    %v2659 = vmul.f32 %v2658, 1.442695
    %v2660 = vpow.pop %v2659
    %v2661 = vadd.f32 %v2660, 1.0
    %v2662 = vrcp.pop %v2661
    %v2663 = vmul.f32 1.0, %v2662
    %v2664 = vtanh.pop %v2655
    %v2665 = vmul.f32 %v2663, %v2540
    %2667 = vrot.lane.b32.xlu0 %v2664, 32
    %v2668 = vpop.permute.xlu0 %2667
    %v2670 = vmul.f32 %v2663, %v2668
    %2672 = vrot.lane.b32.xlu0 %v2670, 32
    %v2673 = vpop.permute.xlu0 %2672
    %v2675 = vadd.f32 %v2665, %v2673
    %v2676 = vtanh.pop %v2675
    %2678 = vrot.lane.b32.xlu0 %v2676, 32
    %v2679 = vpop.permute.xlu0 %2678
    %v2681 = vmul.f32 %v2663, %v2679
    %v2682 = vxor.u32 %v2657, 2147483648
    %v2683 = vmul.f32 %v2682, 1.442695
    %v2684 = vpow.pop %v2683
    %v2685 = vadd.f32 %v2684, 1.0
    %v2686 = vrcp.pop %v2685
    %v2687 = vmul.f32 1.0, %v2686
    %v2688 = vtanh.pop %v2657
    %v2689 = vmul.f32 %v2687, %v2564
    %2691 = vrot.lane.b32.xlu0 %v2688, 32
    %v2692 = vpop.permute.xlu0 %2691
    %v2694 = vmul.f32 %v2687, %v2692
    %2696 = vrot.lane.b32.xlu0 %v2694, 32
    %v2697 = vpop.permute.xlu0 %2696
    %v2699 = vadd.f32 %v2689, %v2697
    %v2700 = vtanh.pop %v2699
    %2702 = vrot.lane.b32.xlu0 %v2700, 32
    %v2703 = vpop.permute.xlu0 %2702
    %v2705 = vmul.f32 %v2687, %v2703
    %2707 = vrot.lane.b32.xlu0 %v2681, 64
    %v2708 = vpop.permute.xlu0 %2707
    %2711 = vrot.lane.b32.xlu0 %v2705, 96
    %v2712 = vpop.permute.xlu0 %2711
    %v2714 = vsel %vm431, %v2708, %v2712
    %v2716 = vsel %vm296, %v2714, 0
    %2718 = vmatprep.subr.mxu0 0.0
    %2719 = vmatpush1.msra.mxu0 0.0
    %2720 = vmatprep.subr.mxu0 0.0
    %2721 = vmatpush1.msra.mxu0 0.0
    %2722 = vmatprep.subr.mxu0 0.0
    %2723 = vmatpush1.msra.mxu0 0.0
    %2724 = vmatprep.subr.mxu0 0.0
    %2725 = vmatpush1.msra.mxu0 0.0
    %2726 = vmatprep.subr.mxu0 0.0
    %2727 = vmatpush1.msra.mxu0 0.0
    %2728 = vmatprep.subr.mxu0 0.0
    %2729 = vmatpush1.msra.mxu0 0.0
    %2730 = vmatprep.subr.mxu0 0.0
    %2731 = vmatpush1.msra.mxu0 0.0
    %2732 = vmatprep.subr.mxu0 0.0
    %2733 = vmatpush1.msra.mxu0 0.0
    %2734 = vmatprep.subr.mxu0 %v1772
    %2735 = vmatpush1.msra.mxu0 %v1771
    %2736 = vmatprep.subr.mxu0 %v1770
    %2737 = vmatpush1.msra.mxu0 %v1769
    %2738 = vmatprep.subr.mxu0 %v1768
    %2739 = vmatpush1.msra.mxu0 %v1767
    %2740 = vmatprep.subr.mxu0 %v1766
    %2741 = vmatpush1.msra.mxu0 %v1765
    %2742 = vmatprep.subr.mxu0 %v1764
    %2743 = vmatpush1.msra.mxu0 %v1763
    %2744 = vmatprep.subr.mxu0 %v1762
    %2745 = vmatpush1.msra.mxu0 %v1761
    %2746 = vmatprep.subr.mxu0 %v1760
    %2747 = vmatpush1.msra.mxu0 %v1759
    %2748 = vmatprep.subr.mxu0 %v1758
    %2749 = vmatpush1.msra.mxu0 %v1757
    %2750 = vmatprep.subr.mxu0 0.0
    %2751 = vmatpush2.msra.mxu0 0.0
    %2752 = vmatprep.subr.mxu0 0.0
    %2753 = vmatpush2.msra.mxu0 0.0
    %2754 = vmatprep.subr.mxu0 0.0
    %2755 = vmatpush2.msra.mxu0 0.0
    %2756 = vmatprep.subr.mxu0 0.0
    %2757 = vmatpush2.msra.mxu0 0.0
    %2758 = vmatprep.subr.mxu0 0.0
    %2759 = vmatpush2.msra.mxu0 0.0
    %2760 = vmatprep.subr.mxu0 0.0
    %2761 = vmatpush2.msra.mxu0 0.0
    %2762 = vmatprep.subr.mxu0 0.0
    %2763 = vmatpush2.msra.mxu0 0.0
    %2764 = vmatprep.subr.mxu0 0.0
    %2765 = vmatpush2.msra.mxu0 0.0
    %2766 = vmatprep.subr.mxu0 0.0
    %2767 = vmatpush2.msra.mxu0 0.0
    %2768 = vmatprep.subr.mxu0 0.0
    %2769 = vmatpush2.msra.mxu0 0.0
    %2770 = vmatprep.subr.mxu0 0.0
    %2771 = vmatpush2.msra.mxu0 0.0
    %2772 = vmatprep.subr.mxu0 0.0
    %2773 = vmatpush2.msra.mxu0 0.0
    %2774 = vmatprep.subr.mxu0 0.0
    %2775 = vmatpush2.msra.mxu0 0.0
    %2776 = vmatprep.subr.mxu0 0.0
    %2777 = vmatpush2.msra.mxu0 0.0
    %2778 = vmatprep.subr.mxu0 0.0
    %2779 = vmatpush2.msra.mxu0 0.0
    %2780 = vmatprep.subr.mxu0 0.0
    %2781 = vmatpush2.msra.mxu0 0.0
    %2782 = vmatprep.mubr.f32.mxu0 0.0
    %2783 = vmatmul.mubr.f32.gmra.mxu0 %v2716
    %v2784 = vpop.f32.mrf.mxu0
    %v2785 = vadd.f32 0.0, %v2784
    %v2786 = vpop.f32.mrf.mxu0
    %v2787 = vadd.f32 0.0, %v2786
    %2788 = vdwg.mxu0
    %v2789 = vld [vmem:[#allocation3 + $0x70] sm:$0xff]
    %v2790 = vadd.f32 %v2789, %v2785
    %v2791 = vld [vmem:[#allocation3 + $0x8] sm:$0xff]
    %v2792 = vadd.f32 %v2791, %v2787
    %v2793 = vxor.u32 %v2790, 2147483648
    %v2794 = vmul.f32 %v2793, 1.442695
    %v2795 = vpow.pop %v2794
    %v2796 = vadd.f32 %v2795, 1.0
    %v2797 = vrcp.pop %v2796
    %v2798 = vmul.f32 1.0, %v2797
    %v2799 = vtanh.pop %v2790
    %v2800 = vmul.f32 %v2798, %v2675
    %2802 = vrot.lane.b32.xlu0 %v2799, 32
    %v2803 = vpop.permute.xlu0 %2802
    %v2805 = vmul.f32 %v2798, %v2803
    %2807 = vrot.lane.b32.xlu0 %v2805, 32
    %v2808 = vpop.permute.xlu0 %2807
    %v2810 = vadd.f32 %v2800, %v2808
    %v2811 = vtanh.pop %v2810
    %2813 = vrot.lane.b32.xlu0 %v2811, 32
    %v2814 = vpop.permute.xlu0 %2813
    %v2816 = vmul.f32 %v2798, %v2814
    %v2817 = vxor.u32 %v2792, 2147483648
    %v2818 = vmul.f32 %v2817, 1.442695
    %v2819 = vpow.pop %v2818
    %v2820 = vadd.f32 %v2819, 1.0
    %v2821 = vrcp.pop %v2820
    %v2822 = vmul.f32 1.0, %v2821
    %v2823 = vtanh.pop %v2792
    %v2824 = vmul.f32 %v2822, %v2699
    %2826 = vrot.lane.b32.xlu0 %v2823, 32
    %v2827 = vpop.permute.xlu0 %2826
    %v2829 = vmul.f32 %v2822, %v2827
    %2831 = vrot.lane.b32.xlu0 %v2829, 32
    %v2832 = vpop.permute.xlu0 %2831
    %v2834 = vadd.f32 %v2824, %v2832
    %v2835 = vtanh.pop %v2834
    %2837 = vrot.lane.b32.xlu0 %v2835, 32
    %v2838 = vpop.permute.xlu0 %2837
    %v2840 = vmul.f32 %v2822, %v2838
    %2842 = vrot.lane.b32.xlu0 %v2840, 96
    %v2843 = vpop.permute.xlu0 %2842
    %v2845 = vsel %vm431, %v1898, %v2843
    %v2846 = vsel %vm431, %v2033, %v2712
    %v2847 = vsel %vm431, %v2168, %v2577
    %v2848 = vsel %vm431, %v2303, %v2442
    %v2849 = vsel %vm431, %v2438, %v2307
    %v2850 = vsel %vm431, %v2573, %v2172
    %v2851 = vsel %vm431, %v2708, %v2037
    %2853 = vrot.lane.b32.xlu0 %v2816, 64
    %v2854 = vpop.permute.xlu0 %2853
    %v2856 = vsel %vm431, %v2854, %v1902
    %vm2857 = vcmp.gt.f32.partialorder %v2845, 0.0
    %vm2858 = vcmp.gt.f32.partialorder %v2846, 0.0
    %vm2859 = vcmp.gt.f32.partialorder %v2847, 0.0
    %vm2860 = vcmp.gt.f32.partialorder %v2848, 0.0
    %vm2861 = vcmp.gt.f32.partialorder %v2849, 0.0
    %vm2862 = vcmp.gt.f32.partialorder %v2850, 0.0
    %vm2863 = vcmp.gt.f32.partialorder %v2851, 0.0
    %vm2864 = vcmp.gt.f32.partialorder %v2856, 0.0
    %v2865 = vmul.f32 %v2845, 0.01
    %v2866 = vmul.f32 %v2846, 0.01
    %v2867 = vmul.f32 %v2847, 0.01
    %v2868 = vmul.f32 %v2848, 0.01
    %v2869 = vmul.f32 %v2849, 0.01
    %v2870 = vmul.f32 %v2850, 0.01
    %v2871 = vmul.f32 %v2851, 0.01
    %v2872 = vmul.f32 %v2856, 0.01
    %v2873 = vsel %vm2857, %v2845, %v2865
    %v2874 = vsel %vm2858, %v2846, %v2866
    %v2875 = vsel %vm2859, %v2847, %v2867
    %v2876 = vsel %vm2860, %v2848, %v2868
    %v2877 = vsel %vm2861, %v2849, %v2869
    %v2878 = vsel %vm2862, %v2850, %v2870
    %v2879 = vsel %vm2863, %v2851, %v2871
    %v2880 = vsel %vm2864, %v2856, %v2872
    %v2881 = vmul.f32 %v2873, %v1412
    %v2882 = vmul.f32 %v2874, %v1417
    %v2883 = vmul.f32 %v2875, %v1422
    %v2884 = vmul.f32 %v2876, %v1427
    %v2885 = vmul.f32 %v2877, %v1432
    %v2886 = vmul.f32 %v2878, %v1437
    %v2887 = vmul.f32 %v2879, %v1442
    %v2888 = vmul.f32 %v2880, %v1447
    %v2889 = vsel %vm296, %v2881, 0.0
    %v2890 = vsel %vm296, %v2882, 0.0
    %v2891 = vadd.f32 %v2889, %v2890
    %v2892 = vsel %vm296, %v2883, 0.0
    %v2893 = vadd.f32 %v2891, %v2892
    %v2894 = vsel %vm296, %v2884, 0.0
    %v2895 = vadd.f32 %v2893, %v2894
    %v2896 = vsel %vm296, %v2885, 0.0
    %v2897 = vadd.f32 %v2895, %v2896
    %v2898 = vsel %vm296, %v2886, 0.0
    %v2899 = vadd.f32 %v2897, %v2898
    %v2900 = vsel %vm296, %v2887, 0.0
    %v2901 = vadd.f32 %v2899, %v2900
    %v2902 = vsel %vm296, %v2888, 0.0
    %v2903 = vadd.f32 %v2901, %v2902
    %v2904 = vrot.slane %v2903, 4
    %v2905 = vadd.f32 %v2903, %v2904
    %v2906 = vrot.slane %v2905, 2
    %v2907 = vadd.f32 %v2905, %v2906
    %v2908 = vrot.slane %v2907, 1
    %v2909 = vadd.f32 %v2907, %v2908
    %v2910 = vmul.f32 %v2873, %v2881
    %v2911 = vmul.f32 %v2874, %v2882
    %v2912 = vmul.f32 %v2875, %v2883
    %v2913 = vmul.f32 %v2876, %v2884
    %v2914 = vmul.f32 %v2877, %v2885
    %v2915 = vmul.f32 %v2878, %v2886
    %v2916 = vmul.f32 %v2879, %v2887
    %v2917 = vmul.f32 %v2880, %v2888
    %v2918 = vsel %vm296, %v2910, 0.0
    %v2919 = vsel %vm296, %v2911, 0.0
    %v2920 = vadd.f32 %v2918, %v2919
    %v2921 = vsel %vm296, %v2912, 0.0
    %v2922 = vadd.f32 %v2920, %v2921
    %v2923 = vsel %vm296, %v2913, 0.0
    %v2924 = vadd.f32 %v2922, %v2923
    %v2925 = vsel %vm296, %v2914, 0.0
    %v2926 = vadd.f32 %v2924, %v2925
    %v2927 = vsel %vm296, %v2915, 0.0
    %v2928 = vadd.f32 %v2926, %v2927
    %v2929 = vsel %vm296, %v2916, 0.0
    %v2930 = vadd.f32 %v2928, %v2929
    %v2931 = vsel %vm296, %v2917, 0.0
    %v2932 = vadd.f32 %v2930, %v2931
    %v2933 = vrot.slane %v2932, 4
    %v2934 = vadd.f32 %v2932, %v2933
    %v2935 = vrot.slane %v2934, 2
    %v2936 = vadd.f32 %v2934, %v2935
    %v2937 = vrot.slane %v2936, 1
    %v2938 = vadd.f32 %v2936, %v2937
    %v2939 = vmul.f32 %v2909, %v1507
    %v2940 = vmul.f32 %v2938, %v1507
    %v2941 = vmul.f32 %v2939, %v2939
    %v2942 = vsub.f32 %v2940, %v2941
    %v2943 = vsub.f32 %v2880, %v2939
    %v2944 = vadd.f32 %v2942, 1e-05
    %v2945 = vrsqrt.pop %v2944
    %v2946 = vmul.f32 %v2943, %v2945
    %v2947 = vld [vmem:[%s10] sm:$0x1]
    %v2949 = vlaneseq
    %v2950 = vshrl.u32 %v2949, 7
    %v2951 = vsub.s32 0, %v2950
    %v2952 = vrot.slane %v2947, %v2951
    %v2954 = vmul.f32 %v2946, %v2952
    %v2955 = vld [vmem:[%s11] sm:$0x1]
    %v2957 = vlaneseq
    %v2958 = vshrl.u32 %v2957, 7
    %v2959 = vsub.s32 0, %v2958
    %v2960 = vrot.slane %v2955, %v2959
    %v2962 = vadd.f32 %v2954, %v2960
    %v2963 = vld [vmem:[#allocation9] sm:$0xff]
    %v2964 = vld [vmem:[#allocation9 + $0x8] sm:$0xff]
    %v2965 = vld [vmem:[#allocation9 + $0x10] sm:$0xff]
    %v2966 = vld [vmem:[#allocation9 + $0x18] sm:$0xff]
    %v2967 = vld [vmem:[#allocation9 + $0x20] sm:$0xff]
    %v2968 = vld [vmem:[#allocation9 + $0x28] sm:$0xff]
    %v2969 = vld [vmem:[#allocation9 + $0x30] sm:$0xff]
    %v2970 = vld [vmem:[#allocation9 + $0x38] sm:$0xff]
    %v2971 = vld [vmem:[#allocation4] sm:$0x1]
    %v2973 = vlaneseq
    %v2974 = vshrl.u32 %v2973, 7
    %v2975 = vsub.s32 0, %v2974
    %v2976 = vrot.slane %v2971, %v2975
    %v2979 = vsel %vm296, %v2962, 0
    %2981 = vmatprep.subr.mxu0 0.0
    %2982 = vmatpush1.msra.mxu0 0.0
    %2983 = vmatprep.subr.mxu0 0.0
    %2984 = vmatpush1.msra.mxu0 0.0
    %2985 = vmatprep.subr.mxu0 0.0
    %2986 = vmatpush1.msra.mxu0 0.0
    %2987 = vmatprep.subr.mxu0 0.0
    %2988 = vmatpush1.msra.mxu0 0.0
    %2989 = vmatprep.subr.mxu0 0.0
    %2990 = vmatpush1.msra.mxu0 0.0
    %2991 = vmatprep.subr.mxu0 0.0
    %2992 = vmatpush1.msra.mxu0 0.0
    %2993 = vmatprep.subr.mxu0 0.0
    %2994 = vmatpush1.msra.mxu0 0.0
    %2995 = vmatprep.subr.mxu0 0.0
    %2996 = vmatpush1.msra.mxu0 0.0
    %2997 = vmatprep.subr.mxu0 0.0
    %2998 = vmatpush1.msra.mxu0 %v2970
    %2999 = vmatprep.subr.mxu0 0.0
    %3000 = vmatpush1.msra.mxu0 %v2969
    %3001 = vmatprep.subr.mxu0 0.0
    %3002 = vmatpush1.msra.mxu0 %v2968
    %3003 = vmatprep.subr.mxu0 0.0
    %3004 = vmatpush1.msra.mxu0 %v2967
    %3005 = vmatprep.subr.mxu0 0.0
    %3006 = vmatpush1.msra.mxu0 %v2966
    %3007 = vmatprep.subr.mxu0 0.0
    %3008 = vmatpush1.msra.mxu0 %v2965
    %3009 = vmatprep.subr.mxu0 0.0
    %3010 = vmatpush1.msra.mxu0 %v2964
    %3011 = vmatprep.subr.mxu0 0.0
    %3012 = vmatpush1.msra.mxu0 %v2963
    %3013 = vmatprep.subr.mxu0 0.0
    %3014 = vmatpush2.msra.mxu0 0.0
    %3015 = vmatprep.subr.mxu0 0.0
    %3016 = vmatpush2.msra.mxu0 0.0
    %3017 = vmatprep.subr.mxu0 0.0
    %3018 = vmatpush2.msra.mxu0 0.0
    %3019 = vmatprep.subr.mxu0 0.0
    %3020 = vmatpush2.msra.mxu0 0.0
    %3021 = vmatprep.subr.mxu0 0.0
    %3022 = vmatpush2.msra.mxu0 0.0
    %3023 = vmatprep.subr.mxu0 0.0
    %3024 = vmatpush2.msra.mxu0 0.0
    %3025 = vmatprep.subr.mxu0 0.0
    %3026 = vmatpush2.msra.mxu0 0.0
    %3027 = vmatprep.subr.mxu0 0.0
    %3028 = vmatpush2.msra.mxu0 0.0
    %3029 = vmatprep.subr.mxu0 0.0
    %3030 = vmatpush2.msra.mxu0 0.0
    %3031 = vmatprep.subr.mxu0 0.0
    %3032 = vmatpush2.msra.mxu0 0.0
    %3033 = vmatprep.subr.mxu0 0.0
    %3034 = vmatpush2.msra.mxu0 0.0
    %3035 = vmatprep.subr.mxu0 0.0
    %3036 = vmatpush2.msra.mxu0 0.0
    %3037 = vmatprep.subr.mxu0 0.0
    %3038 = vmatpush2.msra.mxu0 0.0
    %3039 = vmatprep.subr.mxu0 0.0
    %3040 = vmatpush2.msra.mxu0 0.0
    %3041 = vmatprep.subr.mxu0 0.0
    %3042 = vmatpush2.msra.mxu0 0.0
    %3043 = vmatprep.subr.mxu0 0.0
    %3044 = vmatpush2.msra.mxu0 0.0
    %3045 = vmatprep.mubr.f32.mxu0 0.0
    %3046 = vmatmul.mubr.f32.gmra.mxu0 %v2979
    %v3047 = vpop.f32.mrf.mxu0
    %v3048 = vadd.f32 %v2976, %v3047
    %v3049 = vpop.f32.mrf.mxu0
    %3050 = vdwg.mxu0
    %v3051 = vxor.u32 %v3048, 2147483648
    %v3052 = vmul.f32 %v3051, 1.442695
    %v3053 = vpow.pop %v3052
    %v3054 = vadd.f32 %v3053, 1.0
    %v3055 = vrcp.pop %v3054
    %v3056 = vmul.f32 1.0, %v3055
    %vm3057 = vcmask 7168
    %3058 = vst.msk [vmem:[%s14] sm:$0xff] %vm3057, %v3056
    // Predicated region
    $region70: #{_lambda_.1} parent=1 // pred_check
      _
    $region71: #{_lambda_.1} parent=1 // pred_check_branch
      %3060 = sbr.rel (0) target = $region73
    $region72: #{_lambda_.1} parent=1 // pred_region
      _
    $region73: #{_lambda_.1} parent=1 // pred_fallthru
      _
    // Predicated region
    $region74: #{_lambda_.1} parent=1 // pred_check
      _
    $region75: #{_lambda_.1} parent=1 // pred_check_branch
      %3062 = sbr.rel (0) target = $region77
    $region76: #{_lambda_.1} parent=1 // pred_region
      _
    $region77: #{_lambda_.1} parent=1 // pred_fallthru
      _
    %3063 = vsyncpa [#allocation6], 1
    %3064 = vsyncpa [#allocation8], 1

</llo_original>
